<compile_context>
chip_gen: v6e
topology: v6e:2x2x1
jax: 0.10.0
libtpu: 0.0.40
codegen_flags: <defaults>
</compile_context>

<pallas_src>
from functools import partial

import jax
import jax.numpy as jnp
from jax import lax
from jax.experimental import pallas as pl
from jax.experimental.pallas import tpu as pltpu


def _derive_vmem_limit_bytes():
    """3/4 of physical per-core VMEM (≈96 MiB v5e/v6e, ≈48 MiB v7x)."""
    try:
        cap = int(pltpu.get_tpu_info().vmem_capacity_bytes)
        return (cap * 3) // 4
    except Exception:
        # Fallback to the previously-validated safe value.
        return 64 * 1024 * 1024


_VMEM_LIMIT_BYTES = _derive_vmem_limit_bytes()

# Whether resident weights may be single-buffered (pl.Buffered(1)).  Flipped to
# False at runtime if the installed JAX/Mosaic rejects pipeline_mode.
_SINGLE_BUFFER_WEIGHTS = {"enabled": True, "probed": False}


def _clam_mb_kernel(n_valid_ref, h_ref, w1_ref, b1_ref, wab_ref, bab_ref,
                    wct_ref, bc_ref, scores_ref, m_ref, l_ref, acc_ref,
                    *, tn, tiles_per_core, d):
    """One N-tile of the CLAM_MB attention pipeline with online softmax.

    Grid: (core, step).  Per core-resident outputs:
      m_ref [C, 1] running max, l_ref [C, 1] running sum,
      acc_ref [C, H] unnormalized M accumulator.
    scores_ref [C, tn]: raw attention scores (lane-dense in N).
    """
    core = pl.program_id(0)
    step = pl.program_id(1)
    neg_big = jnp.float32(-1e30)
    n_valid = n_valid_ref[0]

    @pl.when(step == 0)
    def _init():
        m_ref[...] = jnp.full(m_ref.shape, neg_big, dtype=m_ref.dtype)
        l_ref[...] = jnp.zeros_like(l_ref)
        acc_ref[...] = jnp.zeros_like(acc_ref)

    # fc: Linear(L, H) + ReLU   (bf16 stream, f32 MXU accumulation)
    h1 = jnp.dot(h_ref[...], w1_ref[...],
                 preferred_element_type=jnp.float32) + b1_ref[...]      # [tn, H]
    h1 = jnp.maximum(h1, 0.0)
    h1_bf = h1.astype(jnp.bfloat16)          # single bf16 copy, reused twice

    # Gated attention: one fused [H, 2D] MXU pass, then tanh / sigmoid halves.
    # (D is asserted to be a multiple of 128 so the slices are relayout-free.)
    gate = jnp.dot(h1_bf, wab_ref[...],
                   preferred_element_type=jnp.float32) + bab_ref[...]   # [tn, 2D]
    a = jnp.tanh(gate[:, :d])
    b = 0.5 * (1.0 + jnp.tanh(0.5 * gate[:, d:]))   # sigmoid via 1 EUP op
    gated = a * b                                                        # [tn, D]

    # scores^T = Wc^T @ gated^T -> [C, tn]  (contract over D; lane-dense in N)
    s_t = lax.dot_general(wct_ref[...], gated,
                          dimension_numbers=(((1,), (1,)), ((), ())),
                          preferred_element_type=jnp.float32) + bc_ref[...]
    scores_ref[...] = s_t                     # raw A (pre-softmax)

    # Tail mask (cheap: arrays are only [C, tn]); robust to fully-padded tiles.
    col = (core * tiles_per_core + step) * tn + lax.broadcasted_iota(
        jnp.int32, s_t.shape, 1)
    valid = col < n_valid
    s_m = jnp.where(valid, s_t, neg_big)

    # Online softmax over this core's slice of N.
    m_prev = m_ref[...]                                                  # [C, 1]
    m_new = jnp.maximum(m_prev, jnp.max(s_m, axis=1, keepdims=True))
    alpha = jnp.exp(m_prev - m_new)
    p = jnp.where(valid, jnp.exp(s_m - m_new), 0.0)                      # [C, tn]
    l_ref[...] = alpha * l_ref[...] + jnp.sum(p, axis=1, keepdims=True)
    acc_ref[...] = alpha * acc_ref[...] + jnp.dot(
        p.astype(jnp.bfloat16), h1_bf, preferred_element_type=jnp.float32)
    m_ref[...] = m_new


def _resident_spec(block_shape, single_buffer):
    """Constant-index BlockSpec for weights resident across all grid steps."""
    idx = lambda c, i, n_valid_ref: (0,) * len(block_shape)
    if single_buffer:
        # Fetched once; single-buffered to free VMEM headroom for bigger tn.
        return pl.BlockSpec(block_shape, idx, pipeline_mode=pl.Buffered(1))
    return pl.BlockSpec(block_shape, idx)


@partial(jax.jit, static_argnames=("tn", "num_cores", "tiles_per_core",
                                   "single_buffer_weights"))
def _clam_mb_padded(h_pad_bf, n_valid, params, *, tn, num_cores,
                    tiles_per_core, single_buffer_weights):
    W1, b1, Wa, ba, Wb, bb, Wc, bc, Wcls, bcls = params
    L, H = W1.shape
    D = Wa.shape[1]
    C = Wc.shape[1]
    n_pad = h_pad_bf.shape[0]

    # Fuse gating projections into one lane-dense [H, 2D] matmul; pre-transpose
    # the score projection; stream the heavy operands in bf16.
    W1_bf = W1.astype(jnp.bfloat16)
    Wab_bf = jnp.concatenate([Wa, Wb], axis=1).astype(jnp.bfloat16)
    bab = jnp.concatenate([ba, bb], axis=1)
    WcT = Wc.T
    bc_col = bc.T

    kernel = partial(_clam_mb_kernel, tn=tn, tiles_per_core=tiles_per_core, d=D)

    def h_map(c, i, n_valid_ref):
        return (c * tiles_per_core + i, 0)

    def scores_map(c, i, n_valid_ref):
        return (0, c * tiles_per_core + i)

    def part_map(c, i, n_valid_ref):
        return (c, 0, 0)

    grid_spec = pltpu.PrefetchScalarGridSpec(
        num_scalar_prefetch=1,
        grid=(num_cores, tiles_per_core),
        in_specs=[
            pl.BlockSpec((tn, L), h_map),                        # h stream
            _resident_spec((L, H), single_buffer_weights),       # W1
            _resident_spec((1, H), single_buffer_weights),       # b1
            _resident_spec((H, 2 * D), single_buffer_weights),   # Wa|Wb fused
            _resident_spec((1, 2 * D), single_buffer_weights),   # ba|bb fused
            _resident_spec((C, D), single_buffer_weights),       # Wc^T
            _resident_spec((C, 1), single_buffer_weights),       # bc (column)
        ],
        out_specs=[
            pl.BlockSpec((C, tn), scores_map),     # raw scores, lane-dense in N
            pl.BlockSpec((None, C, 1), part_map),  # per-core running max
            pl.BlockSpec((None, C, 1), part_map),  # per-core running sum
            pl.BlockSpec((None, C, H), part_map),  # per-core unnormalized M
        ],
    )

    scores_pad, m_part, l_part, macc_part = pl.pallas_call(
        kernel,
        grid_spec=grid_spec,
        out_shape=[
            jax.ShapeDtypeStruct((C, n_pad), jnp.float32),
            jax.ShapeDtypeStruct((num_cores, C, 1), jnp.float32),
            jax.ShapeDtypeStruct((num_cores, C, 1), jnp.float32),
            jax.ShapeDtypeStruct((num_cores, C, H), jnp.float32),
        ],
        compiler_params=pltpu.CompilerParams(
            dimension_semantics=("parallel", "arbitrary"),
            vmem_limit_bytes=_VMEM_LIMIT_BYTES,
        ),
    )(n_valid, h_pad_bf, W1_bf, b1, Wab_bf, bab, WcT, bc_col)

    # Log-sum-exp merge of the per-core partial softmax states (tiny: nc x C x H).
    m_glob = jnp.max(m_part, axis=0)                      # [C, 1]
    scale = jnp.exp(m_part - m_glob)                      # [nc, C, 1]
    l_glob = jnp.sum(scale * l_part, axis=0)              # [C, 1]
    M = jnp.sum(scale * macc_part, axis=0) / l_glob       # [C, H]

    # Tiny per-class bag head (C dot products) in plain XLA.
    logits = (jnp.sum(M * Wcls, axis=1) + bcls[:, 0])[None, :]           # [1, C]
    Y_prob = jax.nn.softmax(logits, axis=1)
    Y_hat = jnp.argmax(logits, axis=1, keepdims=True).astype(jnp.int32)  # [1, 1]
    return logits, Y_prob, Y_hat, scores_pad, M


def clam_mb_forward(h, params, *, tn=None):
    """CLAM_MB.forward (gate=True, dropout=False, instance_eval=False).

    Returns (logits, Y_prob, Y_hat, A_raw, results_dict) like the PyTorch module
    (results_dict carries 'features' = M as with return_features=True).
    """
    W1, b1, Wa, ba, Wb, bb, Wc, bc, Wcls, bcls = params
    N, L = h.shape
    H = W1.shape[1]
    D = Wa.shape[1]
    C = Wc.shape[1]

    if tn is None:
        # Bigger tiles on 128 MiB-VMEM parts (v5e/v6e); smaller on v7x (64 MiB).
        tn = 1024 if _VMEM_LIMIT_BYTES >= 80 * 1024 * 1024 else 512
    assert tn % 128 == 0, "tn must be a multiple of the 128-wide lane"
    # Lane alignment: keeps gate[:, :D] / [:, D:] slices relayout-free.
    assert L % 128 == 0 and H % 128 == 0 and D % 128 == 0, \
        "L, H, D must be multiples of 128"

    # Bucket the padded bag length to a power of two (>= one tile) so distinct
    # bag sizes reuse the same compiled kernel; the true N travels to the kernel
    # as a scalar-prefetch SMEM value used for the tail mask.
    n_pad = max(tn, 1 << (max(N, 1) - 1).bit_length())
    n_pad = -(-n_pad // tn) * tn
    num_tiles = n_pad // tn
    num_cores = 2 if (num_tiles >= 2 and num_tiles % 2 == 0) else 1
    tiles_per_core = num_tiles // num_cores

    h_bf = h.astype(jnp.bfloat16)
    if n_pad != N:
        h_bf = jnp.pad(h_bf, ((0, n_pad - N), (0, 0)))
    n_valid = jnp.asarray([N], dtype=jnp.int32)

    call = partial(_clam_mb_padded, h_bf, n_valid, tuple(params),
                   tn=tn, num_cores=num_cores, tiles_per_core=tiles_per_core)

    outs = None
    if _SINGLE_BUFFER_WEIGHTS["enabled"]:
        try:
            outs = call(single_buffer_weights=True)
            if not _SINGLE_BUFFER_WEIGHTS["probed"]:
                outs = jax.block_until_ready(outs)   # surface compile errors once
                _SINGLE_BUFFER_WEIGHTS["probed"] = True
        except Exception:
            _SINGLE_BUFFER_WEIGHTS["enabled"] = False
            outs = None
    if outs is None:
        outs = call(single_buffer_weights=False)

    logits, Y_prob, Y_hat, scores_pad, M = outs
    A_raw = scores_pad[:, :N]
    results_dict = {"features": M}
    # TODO(synk): instance_eval (top-k instance CE loss) and dropout branches of
    #             CLAM_MB.forward are not implemented (they are off by default).
    return logits, Y_prob, Y_hat, A_raw, results_dict


def _reference(h, params):
    """Pure-JAX reference mirroring the kernel's bf16 matmul precision."""
    W1, b1, Wa, ba, Wb, bb, Wc, bc, Wcls, bcls = params
    D = Wa.shape[1]
    h1 = jnp.maximum(
        jnp.dot(h.astype(jnp.bfloat16), W1.astype(jnp.bfloat16),
                preferred_element_type=jnp.float32) + b1, 0.0)
    Wab = jnp.concatenate([Wa, Wb], axis=1).astype(jnp.bfloat16)
    bab = jnp.concatenate([ba, bb], axis=1)
    gab = jnp.dot(h1.astype(jnp.bfloat16), Wab,
                  preferred_element_type=jnp.float32) + bab
    a = jnp.tanh(gab[:, :D])
    b = jax.nn.sigmoid(gab[:, D:])
    A_raw = ((a * b) @ Wc + bc).T                      # [C, N]
    A = jax.nn.softmax(A_raw, axis=1)
    M = A @ h1                                         # [C, H]
    logits = (jnp.sum(M * Wcls, axis=1) + bcls[:, 0])[None, :]
    Y_prob = jax.nn.softmax(logits, axis=1)
    return logits, Y_prob, A_raw, M


def init_params(key, L, H, D, C):
    ks = jax.random.split(key, 5)

    def xavier(k, shape):
        fan_in, fan_out = shape
        std = (2.0 / (fan_in + fan_out)) ** 0.5
        return (std * jax.random.normal(k, shape)).astype(jnp.float32)

    W1 = xavier(ks[0], (L, H)); b1 = jnp.zeros((1, H), jnp.float32)
    Wa = xavier(ks[1], (H, D)); ba = jnp.zeros((1, D), jnp.float32)
    Wb = xavier(ks[2], (H, D)); bb = jnp.zeros((1, D), jnp.float32)
    Wc = xavier(ks[3], (D, C)); bc = jnp.zeros((1, C), jnp.float32)
    Wcls = xavier(ks[4], (C, H)); bcls = jnp.zeros((C, 1), jnp.float32)
    return (W1, b1, Wa, ba, Wb, bb, Wc, bc, Wcls, bcls)


if __name__ == "__main__":
    # Small shapes consistent with the module (scaled-down size_dict 'small').
    # N chosen so that tn=256 exercises multiple tiles, the dual-core split,
    # a partially-valid tile and a fully-padded tile.
    N, L, H, D, C = 700, 256, 256, 128, 2
    key = jax.random.PRNGKey(0)
    k_h, k_p = jax.random.split(key)
    h = jax.random.normal(k_h, (N, L), dtype=jnp.float32)
    params = init_params(k_p, L, H, D, C)

    logits, Y_prob, Y_hat, A_raw, results = clam_mb_forward(h, params, tn=256)
    jax.block_until_ready((logits, Y_prob, Y_hat, A_raw, results["features"]))

    r_logits, r_prob, r_Araw, r_M = _reference(h, params)
    assert A_raw.shape == (C, N) and logits.shape == (1, C)
    assert Y_prob.shape == (1, C) and Y_hat.shape == (1, 1)
    assert jnp.allclose(A_raw, r_Araw, atol=3e-3, rtol=3e-3)
    assert jnp.allclose(results["features"], r_M, atol=5e-2, rtol=5e-2)
    assert jnp.allclose(logits, r_logits, atol=5e-2, rtol=5e-2)
    assert jnp.allclose(Y_prob, r_prob, atol=5e-2, rtol=5e-2)

    # Second bag with a different N in the same bucket: hits the cached compile
    # and exercises the scalar-prefetch tail mask with a different valid length.
    N2 = 530
    h2 = h[:N2]
    logits2, _, _, A_raw2, res2 = clam_mb_forward(h2, params, tn=256)
    jax.block_until_ready((logits2, A_raw2, res2["features"]))
    r_logits2, _, r_Araw2, r_M2 = _reference(h2, params)
    assert A_raw2.shape == (C, N2)
    assert jnp.allclose(A_raw2, r_Araw2, atol=3e-3, rtol=3e-3)
    assert jnp.allclose(res2["features"], r_M2, atol=5e-2, rtol=5e-2)
    assert jnp.allclose(logits2, r_logits2, atol=5e-2, rtol=5e-2)

    print("KERNEL_OK")
</pallas_src>

<mosaic_0001>
module attributes {stable_mosaic.version = 11 : i64} {
  func.func @_clam_mb_kernel(%arg0: i32, %arg1: i32, %arg2: memref<1xi32, #tpu.memory_space<smem>>, %arg3: memref<256x256xbf16, #tpu.memory_space<vmem>>, %arg4: memref<256x256xbf16, #tpu.memory_space<vmem>>, %arg5: memref<1x256xf32, #tpu.memory_space<vmem>>, %arg6: memref<256x256xbf16, #tpu.memory_space<vmem>>, %arg7: memref<1x256xf32, #tpu.memory_space<vmem>>, %arg8: memref<2x128xf32, #tpu.memory_space<vmem>>, %arg9: memref<2x1xf32, #tpu.memory_space<vmem>>, %arg10: memref<2x256xf32, #tpu.memory_space<vmem>>, %arg11: memref<1x2x1xf32, #tpu.memory_space<vmem>>, %arg12: memref<1x2x1xf32, #tpu.memory_space<vmem>>, %arg13: memref<1x2x256xf32, #tpu.memory_space<vmem>>) attributes {dimension_semantics = [#tpu.dimension_semantics<parallel>, #tpu.dimension_semantics<arbitrary>], iteration_bounds = array<i64: 2, 2>, scalar_prefetch = 1 : i64, scratch_operands = 0 : i64, tpu.core_type = #tpu.core_type<tc>, window_params = [{transform_indices = @transform_0, window_bounds = array<i64: 256, 256>}, {pipeline_mode = #tpu.pipeline_mode<synchronous>, transform_indices = @transform_1, window_bounds = array<i64: 256, 256>}, {pipeline_mode = #tpu.pipeline_mode<synchronous>, transform_indices = @transform_2, window_bounds = array<i64: 1, 256>}, {pipeline_mode = #tpu.pipeline_mode<synchronous>, transform_indices = @transform_3, window_bounds = array<i64: 256, 256>}, {pipeline_mode = #tpu.pipeline_mode<synchronous>, transform_indices = @transform_4, window_bounds = array<i64: 1, 256>}, {pipeline_mode = #tpu.pipeline_mode<synchronous>, transform_indices = @transform_5, window_bounds = array<i64: 2, 128>}, {pipeline_mode = #tpu.pipeline_mode<synchronous>, transform_indices = @transform_6, window_bounds = array<i64: 2, 1>}, {transform_indices = @transform_7, window_bounds = array<i64: 2, 256>}, {transform_indices = @transform_8, window_bounds = array<i64: 1, 2, 1>}, {transform_indices = @transform_9, window_bounds = array<i64: 1, 2, 1>}, {transform_indices = @transform_10, window_bounds = array<i64: 1, 2, 256>}]} {
    %c0 = arith.constant 0 : index
    %0 = memref.load %arg2[%c0] : memref<1xi32, #tpu.memory_space<smem>>
    %c0_i32 = arith.constant 0 : i32
    %1 = arith.cmpi eq, %arg1, %c0_i32 : i32
    %2 = arith.extui %1 : i1 to i32
    %cst = arith.constant -1.000000e+30 : f32
    %c0_i32_0 = arith.constant 0 : i32
    %3 = arith.cmpi ne, %2, %c0_i32_0 : i32
    scf.if %3 {
      %79 = vector.broadcast %cst : f32 to vector<2x1xf32>
      %c0_47 = arith.constant 0 : index
      %c0_48 = arith.constant 0 : index
      %c0_49 = arith.constant 0 : index
      %80 = vector.load %arg11[%c0_47, %c0_48, %c0_49] : memref<1x2x1xf32, #tpu.memory_space<vmem>>, vector<1x2x1xf32>
      %81 = vector.shape_cast %80 : vector<1x2x1xf32> to vector<2x1xf32>
      %82 = vector.shape_cast %79 : vector<2x1xf32> to vector<1x2x1xf32>
      tpu.vector_store %arg11[%c0_47, %c0_48, %c0_49], %82 {strides = array<i32>} : memref<1x2x1xf32, #tpu.memory_space<vmem>>, vector<1x2x1xf32>,
      %cst_50 = arith.constant 0.000000e+00 : f32
      %83 = vector.broadcast %cst_50 : f32 to vector<2x1xf32>
      %c0_51 = arith.constant 0 : index
      %c0_52 = arith.constant 0 : index
      %c0_53 = arith.constant 0 : index
      %84 = vector.load %arg12[%c0_51, %c0_52, %c0_53] : memref<1x2x1xf32, #tpu.memory_space<vmem>>, vector<1x2x1xf32>
      %85 = vector.shape_cast %84 : vector<1x2x1xf32> to vector<2x1xf32>
      %86 = vector.shape_cast %83 : vector<2x1xf32> to vector<1x2x1xf32>
      tpu.vector_store %arg12[%c0_51, %c0_52, %c0_53], %86 {strides = array<i32>} : memref<1x2x1xf32, #tpu.memory_space<vmem>>, vector<1x2x1xf32>,
      %cst_54 = arith.constant 0.000000e+00 : f32
      %87 = vector.broadcast %cst_54 : f32 to vector<2x256xf32>
      %c0_55 = arith.constant 0 : index
      %c0_56 = arith.constant 0 : index
      %c0_57 = arith.constant 0 : index
      %88 = vector.load %arg13[%c0_55, %c0_56, %c0_57] : memref<1x2x256xf32, #tpu.memory_space<vmem>>, vector<1x2x256xf32>
      %89 = vector.shape_cast %88 : vector<1x2x256xf32> to vector<2x256xf32>
      %90 = vector.shape_cast %87 : vector<2x256xf32> to vector<1x2x256xf32>
      tpu.vector_store %arg13[%c0_55, %c0_56, %c0_57], %90 {strides = array<i32>} : memref<1x2x256xf32, #tpu.memory_space<vmem>>, vector<1x2x256xf32>,
    } else {
    }
    %c0_1 = arith.constant 0 : index
    %c0_2 = arith.constant 0 : index
    %4 = vector.load %arg3[%c0_1, %c0_2] : memref<256x256xbf16, #tpu.memory_space<vmem>>, vector<256x256xbf16>
    %c0_3 = arith.constant 0 : index
    %c0_4 = arith.constant 0 : index
    %5 = vector.load %arg4[%c0_3, %c0_4] : memref<256x256xbf16, #tpu.memory_space<vmem>>, vector<256x256xbf16>
    %cst_5 = arith.constant dense<0.000000e+00> : vector<256x256xf32>
    %6 = tpu.matmul %4, %5, %cst_5 {dimension_numbers = #tpu.dot_dimension_numbers<[1], [0], [0], [1], [0, 0, 1, 1], [], []>} : vector<256x256xbf16>, vector<256x256xbf16>, vector<256x256xf32> -> vector<256x256xf32>
    %c0_6 = arith.constant 0 : index
    %c0_7 = arith.constant 0 : index
    %7 = vector.load %arg5[%c0_6, %c0_7] : memref<1x256xf32, #tpu.memory_space<vmem>>, vector<1x256xf32>
    %8 = vector.broadcast %7 : vector<1x256xf32> to vector<256x256xf32>
    %9 = arith.addf %6, %8 : vector<256x256xf32>
    %cst_8 = arith.constant 0.000000e+00 : f32
    %10 = vector.broadcast %cst_8 : f32 to vector<256x256xf32>
    %11 = arith.maximumf %9, %10 : vector<256x256xf32>
    %12 = arith.truncf %11 : vector<256x256xf32> to vector<256x256xbf16>
    %c0_9 = arith.constant 0 : index
    %c0_10 = arith.constant 0 : index
    %13 = vector.load %arg6[%c0_9, %c0_10] : memref<256x256xbf16, #tpu.memory_space<vmem>>, vector<256x256xbf16>
    %cst_11 = arith.constant dense<0.000000e+00> : vector<256x256xf32>
    %14 = tpu.matmul %12, %13, %cst_11 {dimension_numbers = #tpu.dot_dimension_numbers<[1], [0], [0], [1], [0, 0, 1, 1], [], []>} : vector<256x256xbf16>, vector<256x256xbf16>, vector<256x256xf32> -> vector<256x256xf32>
    %c0_12 = arith.constant 0 : index
    %c0_13 = arith.constant 0 : index
    %15 = vector.load %arg7[%c0_12, %c0_13] : memref<1x256xf32, #tpu.memory_space<vmem>>, vector<1x256xf32>
    %16 = vector.broadcast %15 : vector<1x256xf32> to vector<256x256xf32>
    %17 = arith.addf %14, %16 : vector<256x256xf32>
    %18 = vector.extract_strided_slice %17 {offsets = [0, 0], sizes = [256, 128], strides = [1, 1]} : vector<256x256xf32> to vector<256x128xf32>
    %19 = math.tanh %18 : vector<256x128xf32>
    %20 = vector.extract_strided_slice %17 {offsets = [0, 128], sizes = [256, 128], strides = [1, 1]} : vector<256x256xf32> to vector<256x128xf32>
    %cst_14 = arith.constant 5.000000e-01 : f32
    %21 = vector.broadcast %cst_14 : f32 to vector<256x128xf32>
    %22 = arith.mulf %21, %20 : vector<256x128xf32>
    %23 = math.tanh %22 : vector<256x128xf32>
    %cst_15 = arith.constant 1.000000e+00 : f32
    %24 = vector.broadcast %cst_15 : f32 to vector<256x128xf32>
    %25 = arith.addf %24, %23 : vector<256x128xf32>
    %cst_16 = arith.constant 5.000000e-01 : f32
    %26 = vector.broadcast %cst_16 : f32 to vector<256x128xf32>
    %27 = arith.mulf %26, %25 : vector<256x128xf32>
    %28 = arith.mulf %19, %27 : vector<256x128xf32>
    %c0_17 = arith.constant 0 : index
    %c0_18 = arith.constant 0 : index
    %29 = vector.load %arg8[%c0_17, %c0_18] : memref<2x128xf32, #tpu.memory_space<vmem>>, vector<2x128xf32>
    %cst_19 = arith.constant dense<0.000000e+00> : vector<2x256xf32>
    %30 = tpu.matmul %29, %28, %cst_19 {dimension_numbers = #tpu.dot_dimension_numbers<[1], [1], [0], [0], [0, 0, 1, 0], [], []>} : vector<2x128xf32>, vector<256x128xf32>, vector<2x256xf32> -> vector<2x256xf32>
    %c0_20 = arith.constant 0 : index
    %c0_21 = arith.constant 0 : index
    %31 = vector.load %arg9[%c0_20, %c0_21] : memref<2x1xf32, #tpu.memory_space<vmem>>, vector<2x1xf32>
    %32 = vector.broadcast %31 : vector<2x1xf32> to vector<2x256xf32>
    %33 = arith.addf %30, %32 : vector<2x256xf32>
    %c0_22 = arith.constant 0 : index
    %c0_23 = arith.constant 0 : index
    %34 = vector.load %arg10[%c0_22, %c0_23] : memref<2x256xf32, #tpu.memory_space<vmem>>, vector<2x256xf32>
    tpu.vector_store %arg10[%c0_22, %c0_23], %33 {strides = array<i32>} : memref<2x256xf32, #tpu.memory_space<vmem>>, vector<2x256xf32>,
    %c2_i32 = arith.constant 2 : i32
    %35 = arith.muli %arg0, %c2_i32 : i32
    %36 = arith.addi %35, %arg1 : i32
    %c256_i32 = arith.constant 256 : i32
    %37 = arith.muli %36, %c256_i32 : i32
    %38 = tpu.iota {dimensions = array<i32: 1>} : vector<2x256xi32>
    %39 = vector.broadcast %37 : i32 to vector<2x256xi32>
    %40 = arith.addi %39, %38 : vector<2x256xi32>
    %41 = vector.broadcast %0 : i32 to vector<2x256xi32>
    %42 = arith.cmpi slt, %40, %41 : vector<2x256xi32>
    %cst_24 = arith.constant -1.000000e+30 : f32
    %43 = vector.broadcast %cst_24 : f32 to vector<2x256xf32>
    %44 = arith.select %42, %33, %43 : vector<2x256xi1>, vector<2x256xf32>
    %c0_25 = arith.constant 0 : index
    %c0_26 = arith.constant 0 : index
    %c0_27 = arith.constant 0 : index
    %45 = vector.load %arg11[%c0_25, %c0_26, %c0_27] : memref<1x2x1xf32, #tpu.memory_space<vmem>>, vector<1x2x1xf32>
    %46 = vector.shape_cast %45 : vector<1x2x1xf32> to vector<2x1xf32>
    %cst_28 = arith.constant dense<0xFF800000> : vector<2xf32>
    %47 = vector.multi_reduction <maximumf>, %44, %cst_28 [1] : vector<2x256xf32> to vector<2xf32>
    %48 = vector.shape_cast %47 : vector<2xf32> to vector<2x1xf32>
    %49 = arith.maximumf %46, %48 : vector<2x1xf32>
    %50 = arith.subf %46, %49 : vector<2x1xf32>
    %51 = math.exp %50 : vector<2x1xf32>
    %52 = vector.broadcast %49 : vector<2x1xf32> to vector<2x256xf32>
    %53 = arith.subf %44, %52 : vector<2x256xf32>
    %54 = math.exp %53 : vector<2x256xf32>
    %cst_29 = arith.constant 0.000000e+00 : f32
    %55 = vector.broadcast %cst_29 : f32 to vector<2x256xf32>
    %56 = arith.select %42, %54, %55 : vector<2x256xi1>, vector<2x256xf32>
    %c0_30 = arith.constant 0 : index
    %c0_31 = arith.constant 0 : index
    %c0_32 = arith.constant 0 : index
    %57 = vector.load %arg12[%c0_30, %c0_31, %c0_32] : memref<1x2x1xf32, #tpu.memory_space<vmem>>, vector<1x2x1xf32>
    %58 = vector.shape_cast %57 : vector<1x2x1xf32> to vector<2x1xf32>
    %59 = arith.mulf %51, %58 : vector<2x1xf32>
    %cst_33 = arith.constant dense<0.000000e+00> : vector<2xf32>
    %60 = vector.multi_reduction <add>, %56, %cst_33 [1] : vector<2x256xf32> to vector<2xf32>
    %61 = vector.shape_cast %60 : vector<2xf32> to vector<2x1xf32>
    %62 = arith.addf %59, %61 : vector<2x1xf32>
    %c0_34 = arith.constant 0 : index
    %c0_35 = arith.constant 0 : index
    %c0_36 = arith.constant 0 : index
    %63 = vector.load %arg12[%c0_34, %c0_35, %c0_36] : memref<1x2x1xf32, #tpu.memory_space<vmem>>, vector<1x2x1xf32>
    %64 = vector.shape_cast %63 : vector<1x2x1xf32> to vector<2x1xf32>
    %65 = vector.shape_cast %62 : vector<2x1xf32> to vector<1x2x1xf32>
    tpu.vector_store %arg12[%c0_34, %c0_35, %c0_36], %65 {strides = array<i32>} : memref<1x2x1xf32, #tpu.memory_space<vmem>>, vector<1x2x1xf32>,
    %c0_37 = arith.constant 0 : index
    %c0_38 = arith.constant 0 : index
    %c0_39 = arith.constant 0 : index
    %66 = vector.load %arg13[%c0_37, %c0_38, %c0_39] : memref<1x2x256xf32, #tpu.memory_space<vmem>>, vector<1x2x256xf32>
    %67 = vector.shape_cast %66 : vector<1x2x256xf32> to vector<2x256xf32>
    %68 = vector.broadcast %51 : vector<2x1xf32> to vector<2x256xf32>
    %69 = arith.mulf %68, %67 : vector<2x256xf32>
    %70 = arith.truncf %56 : vector<2x256xf32> to vector<2x256xbf16>
    %cst_40 = arith.constant dense<0.000000e+00> : vector<2x256xf32>
    %71 = tpu.matmul %70, %12, %cst_40 {dimension_numbers = #tpu.dot_dimension_numbers<[1], [0], [0], [1], [0, 0, 1, 1], [], []>} : vector<2x256xbf16>, vector<256x256xbf16>, vector<2x256xf32> -> vector<2x256xf32>
    %72 = arith.addf %69, %71 : vector<2x256xf32>
    %c0_41 = arith.constant 0 : index
    %c0_42 = arith.constant 0 : index
    %c0_43 = arith.constant 0 : index
    %73 = vector.load %arg13[%c0_41, %c0_42, %c0_43] : memref<1x2x256xf32, #tpu.memory_space<vmem>>, vector<1x2x256xf32>
    %74 = vector.shape_cast %73 : vector<1x2x256xf32> to vector<2x256xf32>
    %75 = vector.shape_cast %72 : vector<2x256xf32> to vector<1x2x256xf32>
    tpu.vector_store %arg13[%c0_41, %c0_42, %c0_43], %75 {strides = array<i32>} : memref<1x2x256xf32, #tpu.memory_space<vmem>>, vector<1x2x256xf32>,
    %c0_44 = arith.constant 0 : index
    %c0_45 = arith.constant 0 : index
    %c0_46 = arith.constant 0 : index
    %76 = vector.load %arg11[%c0_44, %c0_45, %c0_46] : memref<1x2x1xf32, #tpu.memory_space<vmem>>, vector<1x2x1xf32>
    %77 = vector.shape_cast %76 : vector<1x2x1xf32> to vector<2x1xf32>
    %78 = vector.shape_cast %49 : vector<2x1xf32> to vector<1x2x1xf32>
    tpu.vector_store %arg11[%c0_44, %c0_45, %c0_46], %78 {strides = array<i32>} : memref<1x2x1xf32, #tpu.memory_space<vmem>>, vector<1x2x1xf32>,
    return
  }
  func.func @transform_0(%arg0: i32, %arg1: i32, %arg2: memref<1xi32, #tpu.memory_space<smem>>) -> (i32, i32) {
    %c2_i32 = arith.constant 2 : i32
    %0 = arith.muli %arg0, %c2_i32 : i32
    %1 = arith.addi %0, %arg1 : i32
    %c0_i32 = arith.constant 0 : i32
    %c0_i32_0 = arith.constant 0 : i32
    return %1, %c0_i32 : i32, i32
  }
  func.func @transform_1(%arg0: i32, %arg1: i32, %arg2: memref<1xi32, #tpu.memory_space<smem>>) -> (i32, i32) {
    %c0_i32 = arith.constant 0 : i32
    %c0_i32_0 = arith.constant 0 : i32
    %c0_i32_1 = arith.constant 0 : i32
    return %c0_i32, %c0_i32_0 : i32, i32
  }
  func.func @transform_2(%arg0: i32, %arg1: i32, %arg2: memref<1xi32, #tpu.memory_space<smem>>) -> (i32, i32) {
    %c0_i32 = arith.constant 0 : i32
    %c0_i32_0 = arith.constant 0 : i32
    %c0_i32_1 = arith.constant 0 : i32
    return %c0_i32, %c0_i32_0 : i32, i32
  }
  func.func @transform_3(%arg0: i32, %arg1: i32, %arg2: memref<1xi32, #tpu.memory_space<smem>>) -> (i32, i32) {
    %c0_i32 = arith.constant 0 : i32
    %c0_i32_0 = arith.constant 0 : i32
    %c0_i32_1 = arith.constant 0 : i32
    return %c0_i32, %c0_i32_0 : i32, i32
  }
  func.func @transform_4(%arg0: i32, %arg1: i32, %arg2: memref<1xi32, #tpu.memory_space<smem>>) -> (i32, i32) {
    %c0_i32 = arith.constant 0 : i32
    %c0_i32_0 = arith.constant 0 : i32
    %c0_i32_1 = arith.constant 0 : i32
    return %c0_i32, %c0_i32_0 : i32, i32
  }
  func.func @transform_5(%arg0: i32, %arg1: i32, %arg2: memref<1xi32, #tpu.memory_space<smem>>) -> (i32, i32) {
    %c0_i32 = arith.constant 0 : i32
    %c0_i32_0 = arith.constant 0 : i32
    %c0_i32_1 = arith.constant 0 : i32
    return %c0_i32, %c0_i32_0 : i32, i32
  }
  func.func @transform_6(%arg0: i32, %arg1: i32, %arg2: memref<1xi32, #tpu.memory_space<smem>>) -> (i32, i32) {
    %c0_i32 = arith.constant 0 : i32
    %c0_i32_0 = arith.constant 0 : i32
    %c0_i32_1 = arith.constant 0 : i32
    return %c0_i32, %c0_i32_0 : i32, i32
  }
  func.func @transform_7(%arg0: i32, %arg1: i32, %arg2: memref<1xi32, #tpu.memory_space<smem>>) -> (i32, i32) {
    %c2_i32 = arith.constant 2 : i32
    %0 = arith.muli %arg0, %c2_i32 : i32
    %1 = arith.addi %0, %arg1 : i32
    %c0_i32 = arith.constant 0 : i32
    %c0_i32_0 = arith.constant 0 : i32
    return %c0_i32, %1 : i32, i32
  }
  func.func @transform_8(%arg0: i32, %arg1: i32, %arg2: memref<1xi32, #tpu.memory_space<smem>>) -> (i32, i32, i32) {
    %c0_i32 = arith.constant 0 : i32
    %c0_i32_0 = arith.constant 0 : i32
    %c0_i32_1 = arith.constant 0 : i32
    return %arg0, %c0_i32, %c0_i32_0 : i32, i32, i32
  }
  func.func @transform_9(%arg0: i32, %arg1: i32, %arg2: memref<1xi32, #tpu.memory_space<smem>>) -> (i32, i32, i32) {
    %c0_i32 = arith.constant 0 : i32
    %c0_i32_0 = arith.constant 0 : i32
    %c0_i32_1 = arith.constant 0 : i32
    return %arg0, %c0_i32, %c0_i32_0 : i32, i32, i32
  }
  func.func @transform_10(%arg0: i32, %arg1: i32, %arg2: memref<1xi32, #tpu.memory_space<smem>>) -> (i32, i32, i32) {
    %c0_i32 = arith.constant 0 : i32
    %c0_i32_0 = arith.constant 0 : i32
    %c0_i32_1 = arith.constant 0 : i32
    return %arg0, %c0_i32, %c0_i32_0 : i32, i32, i32
  }
}

module attributes {stable_mosaic.version = 11 : i64} {
  func.func @_clam_mb_kernel(%arg0: i32, %arg1: i32, %arg2: memref<1xi32, #tpu.memory_space<smem>>, %arg3: memref<256x256xbf16, #tpu.memory_space<vmem>>, %arg4: memref<256x256xbf16, #tpu.memory_space<vmem>>, %arg5: memref<1x256xf32, #tpu.memory_space<vmem>>, %arg6: memref<256x256xbf16, #tpu.memory_space<vmem>>, %arg7: memref<1x256xf32, #tpu.memory_space<vmem>>, %arg8: memref<2x128xf32, #tpu.memory_space<vmem>>, %arg9: memref<2x1xf32, #tpu.memory_space<vmem>>, %arg10: memref<2x256xf32, #tpu.memory_space<vmem>>, %arg11: memref<1x2x1xf32, #tpu.memory_space<vmem>>, %arg12: memref<1x2x1xf32, #tpu.memory_space<vmem>>, %arg13: memref<1x2x256xf32, #tpu.memory_space<vmem>>) attributes {dimension_semantics = [#tpu.dimension_semantics<parallel>, #tpu.dimension_semantics<arbitrary>], iteration_bounds = array<i64: 2, 2>, scalar_prefetch = 1 : i64, scratch_operands = 0 : i64, tpu.core_type = #tpu.core_type<tc>, window_params = [{transform_indices = @transform_0, window_bounds = array<i64: 256, 256>}, {pipeline_mode = #tpu.pipeline_mode<synchronous>, transform_indices = @transform_1, window_bounds = array<i64: 256, 256>}, {pipeline_mode = #tpu.pipeline_mode<synchronous>, transform_indices = @transform_2, window_bounds = array<i64: 1, 256>}, {pipeline_mode = #tpu.pipeline_mode<synchronous>, transform_indices = @transform_3, window_bounds = array<i64: 256, 256>}, {pipeline_mode = #tpu.pipeline_mode<synchronous>, transform_indices = @transform_4, window_bounds = array<i64: 1, 256>}, {pipeline_mode = #tpu.pipeline_mode<synchronous>, transform_indices = @transform_5, window_bounds = array<i64: 2, 128>}, {pipeline_mode = #tpu.pipeline_mode<synchronous>, transform_indices = @transform_6, window_bounds = array<i64: 2, 1>}, {transform_indices = @transform_7, window_bounds = array<i64: 2, 256>}, {transform_indices = @transform_8, window_bounds = array<i64: 1, 2, 1>}, {transform_indices = @transform_9, window_bounds = array<i64: 1, 2, 1>}, {transform_indices = @transform_10, window_bounds = array<i64: 1, 2, 256>}]} {
    %c0 = arith.constant 0 : index
    %0 = memref.load %arg2[%c0] : memref<1xi32, #tpu.memory_space<smem>>
    %c0_i32 = arith.constant 0 : i32
    %1 = arith.cmpi eq, %arg1, %c0_i32 : i32
    %2 = arith.extui %1 : i1 to i32
    %cst = arith.constant -1.000000e+30 : f32
    %c0_i32_0 = arith.constant 0 : i32
    %3 = arith.cmpi ne, %2, %c0_i32_0 : i32
    scf.if %3 {
      %79 = vector.broadcast %cst : f32 to vector<2x1xf32>
      %c0_47 = arith.constant 0 : index
      %c0_48 = arith.constant 0 : index
      %c0_49 = arith.constant 0 : index
      %80 = vector.load %arg11[%c0_47, %c0_48, %c0_49] : memref<1x2x1xf32, #tpu.memory_space<vmem>>, vector<1x2x1xf32>
      %81 = vector.shape_cast %80 : vector<1x2x1xf32> to vector<2x1xf32>
      %82 = vector.shape_cast %79 : vector<2x1xf32> to vector<1x2x1xf32>
      tpu.vector_store %arg11[%c0_47, %c0_48, %c0_49], %82 {strides = array<i32>} : memref<1x2x1xf32, #tpu.memory_space<vmem>>, vector<1x2x1xf32>,
      %cst_50 = arith.constant 0.000000e+00 : f32
      %83 = vector.broadcast %cst_50 : f32 to vector<2x1xf32>
      %c0_51 = arith.constant 0 : index
      %c0_52 = arith.constant 0 : index
      %c0_53 = arith.constant 0 : index
      %84 = vector.load %arg12[%c0_51, %c0_52, %c0_53] : memref<1x2x1xf32, #tpu.memory_space<vmem>>, vector<1x2x1xf32>
      %85 = vector.shape_cast %84 : vector<1x2x1xf32> to vector<2x1xf32>
      %86 = vector.shape_cast %83 : vector<2x1xf32> to vector<1x2x1xf32>
      tpu.vector_store %arg12[%c0_51, %c0_52, %c0_53], %86 {strides = array<i32>} : memref<1x2x1xf32, #tpu.memory_space<vmem>>, vector<1x2x1xf32>,
      %cst_54 = arith.constant 0.000000e+00 : f32
      %87 = vector.broadcast %cst_54 : f32 to vector<2x256xf32>
      %c0_55 = arith.constant 0 : index
      %c0_56 = arith.constant 0 : index
      %c0_57 = arith.constant 0 : index
      %88 = vector.load %arg13[%c0_55, %c0_56, %c0_57] : memref<1x2x256xf32, #tpu.memory_space<vmem>>, vector<1x2x256xf32>
      %89 = vector.shape_cast %88 : vector<1x2x256xf32> to vector<2x256xf32>
      %90 = vector.shape_cast %87 : vector<2x256xf32> to vector<1x2x256xf32>
      tpu.vector_store %arg13[%c0_55, %c0_56, %c0_57], %90 {strides = array<i32>} : memref<1x2x256xf32, #tpu.memory_space<vmem>>, vector<1x2x256xf32>,
    } else {
    }
    %c0_1 = arith.constant 0 : index
    %c0_2 = arith.constant 0 : index
    %4 = vector.load %arg3[%c0_1, %c0_2] : memref<256x256xbf16, #tpu.memory_space<vmem>>, vector<256x256xbf16>
    %c0_3 = arith.constant 0 : index
    %c0_4 = arith.constant 0 : index
    %5 = vector.load %arg4[%c0_3, %c0_4] : memref<256x256xbf16, #tpu.memory_space<vmem>>, vector<256x256xbf16>
    %cst_5 = arith.constant dense<0.000000e+00> : vector<256x256xf32>
    %6 = tpu.matmul %4, %5, %cst_5 {dimension_numbers = #tpu.dot_dimension_numbers<[1], [0], [0], [1], [0, 0, 1, 1], [], []>} : vector<256x256xbf16>, vector<256x256xbf16>, vector<256x256xf32> -> vector<256x256xf32>
    %c0_6 = arith.constant 0 : index
    %c0_7 = arith.constant 0 : index
    %7 = vector.load %arg5[%c0_6, %c0_7] : memref<1x256xf32, #tpu.memory_space<vmem>>, vector<1x256xf32>
    %8 = vector.broadcast %7 : vector<1x256xf32> to vector<256x256xf32>
    %9 = arith.addf %6, %8 : vector<256x256xf32>
    %cst_8 = arith.constant 0.000000e+00 : f32
    %10 = vector.broadcast %cst_8 : f32 to vector<256x256xf32>
    %11 = arith.maximumf %9, %10 : vector<256x256xf32>
    %12 = arith.truncf %11 : vector<256x256xf32> to vector<256x256xbf16>
    %c0_9 = arith.constant 0 : index
    %c0_10 = arith.constant 0 : index
    %13 = vector.load %arg6[%c0_9, %c0_10] : memref<256x256xbf16, #tpu.memory_space<vmem>>, vector<256x256xbf16>
    %cst_11 = arith.constant dense<0.000000e+00> : vector<256x256xf32>
    %14 = tpu.matmul %12, %13, %cst_11 {dimension_numbers = #tpu.dot_dimension_numbers<[1], [0], [0], [1], [0, 0, 1, 1], [], []>} : vector<256x256xbf16>, vector<256x256xbf16>, vector<256x256xf32> -> vector<256x256xf32>
    %c0_12 = arith.constant 0 : index
    %c0_13 = arith.constant 0 : index
    %15 = vector.load %arg7[%c0_12, %c0_13] : memref<1x256xf32, #tpu.memory_space<vmem>>, vector<1x256xf32>
    %16 = vector.broadcast %15 : vector<1x256xf32> to vector<256x256xf32>
    %17 = arith.addf %14, %16 : vector<256x256xf32>
    %18 = vector.extract_strided_slice %17 {offsets = [0, 0], sizes = [256, 128], strides = [1, 1]} : vector<256x256xf32> to vector<256x128xf32>
    %19 = math.tanh %18 : vector<256x128xf32>
    %20 = vector.extract_strided_slice %17 {offsets = [0, 128], sizes = [256, 128], strides = [1, 1]} : vector<256x256xf32> to vector<256x128xf32>
    %cst_14 = arith.constant 5.000000e-01 : f32
    %21 = vector.broadcast %cst_14 : f32 to vector<256x128xf32>
    %22 = arith.mulf %21, %20 : vector<256x128xf32>
    %23 = math.tanh %22 : vector<256x128xf32>
    %cst_15 = arith.constant 1.000000e+00 : f32
    %24 = vector.broadcast %cst_15 : f32 to vector<256x128xf32>
    %25 = arith.addf %24, %23 : vector<256x128xf32>
    %cst_16 = arith.constant 5.000000e-01 : f32
    %26 = vector.broadcast %cst_16 : f32 to vector<256x128xf32>
    %27 = arith.mulf %26, %25 : vector<256x128xf32>
    %28 = arith.mulf %19, %27 : vector<256x128xf32>
    %c0_17 = arith.constant 0 : index
    %c0_18 = arith.constant 0 : index
    %29 = vector.load %arg8[%c0_17, %c0_18] : memref<2x128xf32, #tpu.memory_space<vmem>>, vector<2x128xf32>
    %cst_19 = arith.constant dense<0.000000e+00> : vector<2x256xf32>
    %30 = tpu.matmul %29, %28, %cst_19 {dimension_numbers = #tpu.dot_dimension_numbers<[1], [1], [0], [0], [0, 0, 1, 0], [], []>} : vector<2x128xf32>, vector<256x128xf32>, vector<2x256xf32> -> vector<2x256xf32>
    %c0_20 = arith.constant 0 : index
    %c0_21 = arith.constant 0 : index
    %31 = vector.load %arg9[%c0_20, %c0_21] : memref<2x1xf32, #tpu.memory_space<vmem>>, vector<2x1xf32>
    %32 = vector.broadcast %31 : vector<2x1xf32> to vector<2x256xf32>
    %33 = arith.addf %30, %32 : vector<2x256xf32>
    %c0_22 = arith.constant 0 : index
    %c0_23 = arith.constant 0 : index
    %34 = vector.load %arg10[%c0_22, %c0_23] : memref<2x256xf32, #tpu.memory_space<vmem>>, vector<2x256xf32>
    tpu.vector_store %arg10[%c0_22, %c0_23], %33 {strides = array<i32>} : memref<2x256xf32, #tpu.memory_space<vmem>>, vector<2x256xf32>,
    %c2_i32 = arith.constant 2 : i32
    %35 = arith.muli %arg0, %c2_i32 : i32
    %36 = arith.addi %35, %arg1 : i32
    %c256_i32 = arith.constant 256 : i32
    %37 = arith.muli %36, %c256_i32 : i32
    %38 = tpu.iota {dimensions = array<i32: 1>} : vector<2x256xi32>
    %39 = vector.broadcast %37 : i32 to vector<2x256xi32>
    %40 = arith.addi %39, %38 : vector<2x256xi32>
    %41 = vector.broadcast %0 : i32 to vector<2x256xi32>
    %42 = arith.cmpi slt, %40, %41 : vector<2x256xi32>
    %cst_24 = arith.constant -1.000000e+30 : f32
    %43 = vector.broadcast %cst_24 : f32 to vector<2x256xf32>
    %44 = arith.select %42, %33, %43 : vector<2x256xi1>, vector<2x256xf32>
    %c0_25 = arith.constant 0 : index
    %c0_26 = arith.constant 0 : index
    %c0_27 = arith.constant 0 : index
    %45 = vector.load %arg11[%c0_25, %c0_26, %c0_27] : memref<1x2x1xf32, #tpu.memory_space<vmem>>, vector<1x2x1xf32>
    %46 = vector.shape_cast %45 : vector<1x2x1xf32> to vector<2x1xf32>
    %cst_28 = arith.constant dense<0xFF800000> : vector<2xf32>
    %47 = vector.multi_reduction <maximumf>, %44, %cst_28 [1] : vector<2x256xf32> to vector<2xf32>
    %48 = vector.shape_cast %47 : vector<2xf32> to vector<2x1xf32>
    %49 = arith.maximumf %46, %48 : vector<2x1xf32>
    %50 = arith.subf %46, %49 : vector<2x1xf32>
    %51 = math.exp %50 : vector<2x1xf32>
    %52 = vector.broadcast %49 : vector<2x1xf32> to vector<2x256xf32>
    %53 = arith.subf %44, %52 : vector<2x256xf32>
    %54 = math.exp %53 : vector<2x256xf32>
    %cst_29 = arith.constant 0.000000e+00 : f32
    %55 = vector.broadcast %cst_29 : f32 to vector<2x256xf32>
    %56 = arith.select %42, %54, %55 : vector<2x256xi1>, vector<2x256xf32>
    %c0_30 = arith.constant 0 : index
    %c0_31 = arith.constant 0 : index
    %c0_32 = arith.constant 0 : index
    %57 = vector.load %arg12[%c0_30, %c0_31, %c0_32] : memref<1x2x1xf32, #tpu.memory_space<vmem>>, vector<1x2x1xf32>
    %58 = vector.shape_cast %57 : vector<1x2x1xf32> to vector<2x1xf32>
    %59 = arith.mulf %51, %58 : vector<2x1xf32>
    %cst_33 = arith.constant dense<0.000000e+00> : vector<2xf32>
    %60 = vector.multi_reduction <add>, %56, %cst_33 [1] : vector<2x256xf32> to vector<2xf32>
    %61 = vector.shape_cast %60 : vector<2xf32> to vector<2x1xf32>
    %62 = arith.addf %59, %61 : vector<2x1xf32>
    %c0_34 = arith.constant 0 : index
    %c0_35 = arith.constant 0 : index
    %c0_36 = arith.constant 0 : index
    %63 = vector.load %arg12[%c0_34, %c0_35, %c0_36] : memref<1x2x1xf32, #tpu.memory_space<vmem>>, vector<1x2x1xf32>
    %64 = vector.shape_cast %63 : vector<1x2x1xf32> to vector<2x1xf32>
    %65 = vector.shape_cast %62 : vector<2x1xf32> to vector<1x2x1xf32>
    tpu.vector_store %arg12[%c0_34, %c0_35, %c0_36], %65 {strides = array<i32>} : memref<1x2x1xf32, #tpu.memory_space<vmem>>, vector<1x2x1xf32>,
    %c0_37 = arith.constant 0 : index
    %c0_38 = arith.constant 0 : index
    %c0_39 = arith.constant 0 : index
    %66 = vector.load %arg13[%c0_37, %c0_38, %c0_39] : memref<1x2x256xf32, #tpu.memory_space<vmem>>, vector<1x2x256xf32>
    %67 = vector.shape_cast %66 : vector<1x2x256xf32> to vector<2x256xf32>
    %68 = vector.broadcast %51 : vector<2x1xf32> to vector<2x256xf32>
    %69 = arith.mulf %68, %67 : vector<2x256xf32>
    %70 = arith.truncf %56 : vector<2x256xf32> to vector<2x256xbf16>
    %cst_40 = arith.constant dense<0.000000e+00> : vector<2x256xf32>
    %71 = tpu.matmul %70, %12, %cst_40 {dimension_numbers = #tpu.dot_dimension_numbers<[1], [0], [0], [1], [0, 0, 1, 1], [], []>} : vector<2x256xbf16>, vector<256x256xbf16>, vector<2x256xf32> -> vector<2x256xf32>
    %72 = arith.addf %69, %71 : vector<2x256xf32>
    %c0_41 = arith.constant 0 : index
    %c0_42 = arith.constant 0 : index
    %c0_43 = arith.constant 0 : index
    %73 = vector.load %arg13[%c0_41, %c0_42, %c0_43] : memref<1x2x256xf32, #tpu.memory_space<vmem>>, vector<1x2x256xf32>
    %74 = vector.shape_cast %73 : vector<1x2x256xf32> to vector<2x256xf32>
    %75 = vector.shape_cast %72 : vector<2x256xf32> to vector<1x2x256xf32>
    tpu.vector_store %arg13[%c0_41, %c0_42, %c0_43], %75 {strides = array<i32>} : memref<1x2x256xf32, #tpu.memory_space<vmem>>, vector<1x2x256xf32>,
    %c0_44 = arith.constant 0 : index
    %c0_45 = arith.constant 0 : index
    %c0_46 = arith.constant 0 : index
    %76 = vector.load %arg11[%c0_44, %c0_45, %c0_46] : memref<1x2x1xf32, #tpu.memory_space<vmem>>, vector<1x2x1xf32>
    %77 = vector.shape_cast %76 : vector<1x2x1xf32> to vector<2x1xf32>
    %78 = vector.shape_cast %49 : vector<2x1xf32> to vector<1x2x1xf32>
    tpu.vector_store %arg11[%c0_44, %c0_45, %c0_46], %78 {strides = array<i32>} : memref<1x2x1xf32, #tpu.memory_space<vmem>>, vector<1x2x1xf32>,
    return
  }
  func.func @transform_0(%arg0: i32, %arg1: i32, %arg2: memref<1xi32, #tpu.memory_space<smem>>) -> (i32, i32) {
    %c2_i32 = arith.constant 2 : i32
    %0 = arith.muli %arg0, %c2_i32 : i32
    %1 = arith.addi %0, %arg1 : i32
    %c0_i32 = arith.constant 0 : i32
    %c0_i32_0 = arith.constant 0 : i32
    return %1, %c0_i32 : i32, i32
  }
  func.func @transform_1(%arg0: i32, %arg1: i32, %arg2: memref<1xi32, #tpu.memory_space<smem>>) -> (i32, i32) {
    %c0_i32 = arith.constant 0 : i32
    %c0_i32_0 = arith.constant 0 : i32
    %c0_i32_1 = arith.constant 0 : i32
    return %c0_i32, %c0_i32_0 : i32, i32
  }
  func.func @transform_2(%arg0: i32, %arg1: i32, %arg2: memref<1xi32, #tpu.memory_space<smem>>) -> (i32, i32) {
    %c0_i32 = arith.constant 0 : i32
    %c0_i32_0 = arith.constant 0 : i32
    %c0_i32_1 = arith.constant 0 : i32
    return %c0_i32, %c0_i32_0 : i32, i32
  }
  func.func @transform_3(%arg0: i32, %arg1: i32, %arg2: memref<1xi32, #tpu.memory_space<smem>>) -> (i32, i32) {
    %c0_i32 = arith.constant 0 : i32
    %c0_i32_0 = arith.constant 0 : i32
    %c0_i32_1 = arith.constant 0 : i32
    return %c0_i32, %c0_i32_0 : i32, i32
  }
  func.func @transform_4(%arg0: i32, %arg1: i32, %arg2: memref<1xi32, #tpu.memory_space<smem>>) -> (i32, i32) {
    %c0_i32 = arith.constant 0 : i32
    %c0_i32_0 = arith.constant 0 : i32
    %c0_i32_1 = arith.constant 0 : i32
    return %c0_i32, %c0_i32_0 : i32, i32
  }
  func.func @transform_5(%arg0: i32, %arg1: i32, %arg2: memref<1xi32, #tpu.memory_space<smem>>) -> (i32, i32) {
    %c0_i32 = arith.constant 0 : i32
    %c0_i32_0 = arith.constant 0 : i32
    %c0_i32_1 = arith.constant 0 : i32
    return %c0_i32, %c0_i32_0 : i32, i32
  }
  func.func @transform_6(%arg0: i32, %arg1: i32, %arg2: memref<1xi32, #tpu.memory_space<smem>>) -> (i32, i32) {
    %c0_i32 = arith.constant 0 : i32
    %c0_i32_0 = arith.constant 0 : i32
    %c0_i32_1 = arith.constant 0 : i32
    return %c0_i32, %c0_i32_0 : i32, i32
  }
  func.func @transform_7(%arg0: i32, %arg1: i32, %arg2: memref<1xi32, #tpu.memory_space<smem>>) -> (i32, i32) {
    %c2_i32 = arith.constant 2 : i32
    %0 = arith.muli %arg0, %c2_i32 : i32
    %1 = arith.addi %0, %arg1 : i32
    %c0_i32 = arith.constant 0 : i32
    %c0_i32_0 = arith.constant 0 : i32
    return %c0_i32, %1 : i32, i32
  }
  func.func @transform_8(%arg0: i32, %arg1: i32, %arg2: memref<1xi32, #tpu.memory_space<smem>>) -> (i32, i32, i32) {
    %c0_i32 = arith.constant 0 : i32
    %c0_i32_0 = arith.constant 0 : i32
    %c0_i32_1 = arith.constant 0 : i32
    return %arg0, %c0_i32, %c0_i32_0 : i32, i32, i32
  }
  func.func @transform_9(%arg0: i32, %arg1: i32, %arg2: memref<1xi32, #tpu.memory_space<smem>>) -> (i32, i32, i32) {
    %c0_i32 = arith.constant 0 : i32
    %c0_i32_0 = arith.constant 0 : i32
    %c0_i32_1 = arith.constant 0 : i32
    return %arg0, %c0_i32, %c0_i32_0 : i32, i32, i32
  }
  func.func @transform_10(%arg0: i32, %arg1: i32, %arg2: memref<1xi32, #tpu.memory_space<smem>>) -> (i32, i32, i32) {
    %c0_i32 = arith.constant 0 : i32
    %c0_i32_0 = arith.constant 0 : i32
    %c0_i32_1 = arith.constant 0 : i32
    return %arg0, %c0_i32, %c0_i32_0 : i32, i32, i32
  }
}

</mosaic_0001>

<llo_original>
// kernel: _clam_mb_padded.1
$region0: #{_clam_mb_padded.1}
  #allocation0 [shape = 'u32[]', space=smem, size = 0x4, offset = 0x4, fixed_abs, tag = 'smem constant byte address 0x4 - core index']
  #allocation1 [shape = 'u32[144,128]{1,0:T(1,128)}', space=vmem, size = 0x12000, scoped, tag = 'internal scratch']
  #allocation2 [shape = 's32[1]{0}', space=sflag, size = 0x4, scoped, tag = 'scoped memory for _clam_mb_padded.1']
  #allocation3 [shape = 's32[1]{0:T(128)S(6)}', space=smem, size = 0x200, scoped, tag = 'prefetched SMEM operand 0']
  %s0 = inlined_call_operand.<no memory space> [shape: s32[1], index: 0, kind: input, shape index: {}]
  %s1 = inlined_call_operand.vmem [shape: bf16[1024,256], index: 1, kind: input, shape index: {}]
  %s2 = inlined_call_operand.vmem [shape: bf16[256,256], index: 2, kind: input, shape index: {}]
  %s3 = inlined_call_operand.vmem [shape: f32[1,256], index: 3, kind: input, shape index: {}]
  %s4 = inlined_call_operand.vmem [shape: bf16[256,256], index: 4, kind: input, shape index: {}]
  %s5 = inlined_call_operand.vmem [shape: f32[1,256], index: 5, kind: input, shape index: {}]
  %s6 = inlined_call_operand.vmem [shape: f32[2,128], index: 6, kind: input, shape index: {}]
  %s7 = inlined_call_operand.vmem [shape: f32[2,1], index: 7, kind: input, shape index: {}]
  %s8 = inlined_call_operand.hbm [shape: f32[2,1024], index: 8, kind: output, shape index: {0}]
  %s9 = inlined_call_operand.vmem [shape: f32[2,2,1], index: 9, kind: output, shape index: {1}]
  %s10 = inlined_call_operand.vmem [shape: f32[2,2,1], index: 10, kind: output, shape index: {2}]
  %s11 = inlined_call_operand.vmem [shape: f32[2,2,256], index: 11, kind: output, shape index: {3}]
  %12 = xla_tuple %s8, %s9, %s10, %s11
  %s13 = sld [smem:[#allocation0]]
  $region89: #{_clam_mb_padded.1} parent=0
    _
  %s15 = ssub.s32 1, %s13
  %s16 = scalar_select 0, %s15, %s13
  %17 = sst [smem:[#allocation3]] %s0
  $region1: #{_clam_mb_padded.1} parent=0
    #allocation4 [shape = 'u8[4096]{0}', space=vmem, size = 0x1000, scoped, tag = 'output window, operand 0']
    #allocation5 [shape = 's32[2]{0}', space=sflag, size = 0x8, scoped, tag = 'scoped memory for _clam_mb_padded.1']
    %18 = vsyncpa [#allocation5], 0
    %s19 = scalar_lea.sflag [#allocation5], 1
    %20 = vsyncpa %s19, 0
    loop: start=0, step=1, limit=6
    $region2: #{_clam_mb_padded.1} parent=1 // loop_pre_header
      _
    $region3: #{_clam_mb_padded.1} parent=1 // loop_header
      %s22 = sphi 0, %s26
      %p23 = scmp.ge.s32.totalorder %s22, 6
      %s29 = sphi 0, %s41
      %s30 = sphi 0, %s37
      %s31 = sphi 0, %s29
      %s32 = sphi 0, %s30
      %s33 = sphi 0, %s31
      %s34 = sphi 0, %s32
      %s48 = sphi 0, %s50
      %s51 = sphi 0, %s48
      %s52 = sphi 0, %s51
      %s68 = sphi 0, %s52
      %s72 = sphi 0, %s72
      %s74 = sphi 0, %s72
      %s75 = sphi 0, %s74
      %s89 = sphi 0, %s75
      %s93 = sphi 0, %s93
      %s95 = sphi 0, %s93
      %s96 = sphi 0, %s95
      %s110 = sphi 0, %s96
      %s114 = sphi 0, %s114
      %s116 = sphi 0, %s114
      %s117 = sphi 0, %s116
      %s131 = sphi 0, %s117
      %s135 = sphi 0, %s135
      %s137 = sphi 0, %s135
      %s138 = sphi 0, %s137
      %s152 = sphi 0, %s138
      %s156 = sphi 0, %s156
      %s158 = sphi 0, %s156
      %s159 = sphi 0, %s158
      %s173 = sphi 0, %s159
      %s177 = sphi 0, %s177
      %s179 = sphi 0, %s177
      %s180 = sphi 0, %s179
      %s194 = sphi 0, %s180
      %s204 = sphi 0, %s206
      %s207 = sphi 0, %s204
      %s208 = sphi 0, %s207
      %s224 = sphi 0, %s208
      %s230 = sphi 0, %s232
      %s233 = sphi 0, %s230
      %s234 = sphi 0, %s233
      %s250 = sphi 0, %s234
      %s256 = sphi 0, %s258
      %s259 = sphi 0, %s256
      %s260 = sphi 0, %s259
      %s276 = sphi 0, %s260
      %s282 = sphi 0, %s284
      %s285 = sphi 0, %s282
      %s286 = sphi 0, %s285
      %s302 = sphi 0, %s286
    $region4: #{_clam_mb_padded.1} parent=1 // loop_header_branch
      %25 = sbr.rel (%p23) target = $region8
    $region5: #{_clam_mb_padded.1} parent=1 // loop_body
      %s27 = ssub.s32 %s22, 1
      %s28 = ssub.s32 %s22, 2
      %s35 = sadd.s32 1, %s30
      %p36 = scmp.ge.s32.totalorder %s35, 2
      %s37 = scalar_select %p36, 0, %s35
      %s38 = sadd.s32 1, %s29
      %s39 = scalar_select %p36, %s38, %s29
      %p40 = scmp.ge.s32.totalorder %s39, 2
      %s41 = scalar_select %p40, 0, %s39
      %s42 = smul.u32 %s29, 2
      %s43 = sadd.s32 %s42, %s30
      %s44 = smul.u32 %s41, 2
      %s45 = sadd.s32 %s44, %s37
      %s46 = ssub.s32 %s43, %s45
      %p47 = scmp.eq.s32.totalorder %s46, 0
      %s49 = sadd.s32 %s48, 1
      %s50 = scalar_select %p47, %s48, %s49
      %p53 = pneg %p47
      %p54 = scmp.eq.s32.totalorder %s22, 3
      %p55 = por %p53, %p54
      %p56 = scmp.ne.s32.totalorder %s48, %s51
      %p57 = scmp.eq.s32.totalorder %s22, 0
      %p58 = por %p56, %p57
      %p59 = scmp.ne.s32.totalorder %s48, %s51
      %p60 = scmp.eq.s32.totalorder %s27, 3
      %p61 = por %p59, %p60
      %p62 = scmp.ne.s32.totalorder %s51, %s52
      %p63 = scmp.eq.s32.totalorder %s27, 0
      %p64 = por %p62, %p63
      %p65 = scmp.ne.s32.totalorder %s51, %s52
      %p66 = scmp.eq.s32.totalorder %s28, 3
      %p67 = por %p65, %p66
      %p69 = scmp.ne.s32.totalorder %s52, %s68
      %p70 = scmp.eq.s32.totalorder %s28, 0
      %p71 = por %p69, %p70
      %s73 = sadd.s32 %s72, 1
      %p76 = scmp.eq.s32.totalorder %s22, 3
      %p77 = scmp.ne.s32.totalorder %s72, %s74
      %p78 = scmp.eq.s32.totalorder %s22, 0
      %p79 = por %p77, %p78
      %p80 = scmp.ne.s32.totalorder %s72, %s74
      %p81 = scmp.eq.s32.totalorder %s27, 3
      %p82 = por %p80, %p81
      %p83 = scmp.ne.s32.totalorder %s74, %s75
      %p84 = scmp.eq.s32.totalorder %s27, 0
      %p85 = por %p83, %p84
      %p86 = scmp.ne.s32.totalorder %s74, %s75
      %p87 = scmp.eq.s32.totalorder %s28, 3
      %p88 = por %p86, %p87
      %p90 = scmp.ne.s32.totalorder %s75, %s89
      %p91 = scmp.eq.s32.totalorder %s28, 0
      %p92 = por %p90, %p91
      %s94 = sadd.s32 %s93, 1
      %p97 = scmp.eq.s32.totalorder %s22, 3
      %p98 = scmp.ne.s32.totalorder %s93, %s95
      %p99 = scmp.eq.s32.totalorder %s22, 0
      %p100 = por %p98, %p99
      %p101 = scmp.ne.s32.totalorder %s93, %s95
      %p102 = scmp.eq.s32.totalorder %s27, 3
      %p103 = por %p101, %p102
      %p104 = scmp.ne.s32.totalorder %s95, %s96
      %p105 = scmp.eq.s32.totalorder %s27, 0
      %p106 = por %p104, %p105
      %p107 = scmp.ne.s32.totalorder %s95, %s96
      %p108 = scmp.eq.s32.totalorder %s28, 3
      %p109 = por %p107, %p108
      %p111 = scmp.ne.s32.totalorder %s96, %s110
      %p112 = scmp.eq.s32.totalorder %s28, 0
      %p113 = por %p111, %p112
      %s115 = sadd.s32 %s114, 1
      %p118 = scmp.eq.s32.totalorder %s22, 3
      %p119 = scmp.ne.s32.totalorder %s114, %s116
      %p120 = scmp.eq.s32.totalorder %s22, 0
      %p121 = por %p119, %p120
      %p122 = scmp.ne.s32.totalorder %s114, %s116
      %p123 = scmp.eq.s32.totalorder %s27, 3
      %p124 = por %p122, %p123
      %p125 = scmp.ne.s32.totalorder %s116, %s117
      %p126 = scmp.eq.s32.totalorder %s27, 0
      %p127 = por %p125, %p126
      %p128 = scmp.ne.s32.totalorder %s116, %s117
      %p129 = scmp.eq.s32.totalorder %s28, 3
      %p130 = por %p128, %p129
      %p132 = scmp.ne.s32.totalorder %s117, %s131
      %p133 = scmp.eq.s32.totalorder %s28, 0
      %p134 = por %p132, %p133
      %s136 = sadd.s32 %s135, 1
      %p139 = scmp.eq.s32.totalorder %s22, 3
      %p140 = scmp.ne.s32.totalorder %s135, %s137
      %p141 = scmp.eq.s32.totalorder %s22, 0
      %p142 = por %p140, %p141
      %p143 = scmp.ne.s32.totalorder %s135, %s137
      %p144 = scmp.eq.s32.totalorder %s27, 3
      %p145 = por %p143, %p144
      %p146 = scmp.ne.s32.totalorder %s137, %s138
      %p147 = scmp.eq.s32.totalorder %s27, 0
      %p148 = por %p146, %p147
      %p149 = scmp.ne.s32.totalorder %s137, %s138
      %p150 = scmp.eq.s32.totalorder %s28, 3
      %p151 = por %p149, %p150
      %p153 = scmp.ne.s32.totalorder %s138, %s152
      %p154 = scmp.eq.s32.totalorder %s28, 0
      %p155 = por %p153, %p154
      %s157 = sadd.s32 %s156, 1
      %p160 = scmp.eq.s32.totalorder %s22, 3
      %p161 = scmp.ne.s32.totalorder %s156, %s158
      %p162 = scmp.eq.s32.totalorder %s22, 0
      %p163 = por %p161, %p162
      %p164 = scmp.ne.s32.totalorder %s156, %s158
      %p165 = scmp.eq.s32.totalorder %s27, 3
      %p166 = por %p164, %p165
      %p167 = scmp.ne.s32.totalorder %s158, %s159
      %p168 = scmp.eq.s32.totalorder %s27, 0
      %p169 = por %p167, %p168
      %p170 = scmp.ne.s32.totalorder %s158, %s159
      %p171 = scmp.eq.s32.totalorder %s28, 3
      %p172 = por %p170, %p171
      %p174 = scmp.ne.s32.totalorder %s159, %s173
      %p175 = scmp.eq.s32.totalorder %s28, 0
      %p176 = por %p174, %p175
      %s178 = sadd.s32 %s177, 1
      %p181 = scmp.eq.s32.totalorder %s22, 3
      %p182 = scmp.ne.s32.totalorder %s177, %s179
      %p183 = scmp.eq.s32.totalorder %s22, 0
      %p184 = por %p182, %p183
      %p185 = scmp.ne.s32.totalorder %s177, %s179
      %p186 = scmp.eq.s32.totalorder %s27, 3
      %p187 = por %p185, %p186
      %p188 = scmp.ne.s32.totalorder %s179, %s180
      %p189 = scmp.eq.s32.totalorder %s27, 0
      %p190 = por %p188, %p189
      %p191 = scmp.ne.s32.totalorder %s179, %s180
      %p192 = scmp.eq.s32.totalorder %s28, 3
      %p193 = por %p191, %p192
      %p195 = scmp.ne.s32.totalorder %s180, %s194
      %p196 = scmp.eq.s32.totalorder %s28, 0
      %p197 = por %p195, %p196
      %s198 = smul.u32 %s29, 2
      %s199 = sadd.s32 %s198, %s30
      %s200 = smul.u32 %s41, 2
      %s201 = sadd.s32 %s200, %s37
      %s202 = ssub.s32 %s199, %s201
      %p203 = scmp.eq.s32.totalorder %s202, 0
      %s205 = sadd.s32 %s204, 1
      %s206 = scalar_select %p203, %s204, %s205
      %p209 = pneg %p203
      %p210 = scmp.eq.s32.totalorder %s22, 3
      %p211 = por %p209, %p210
      %p212 = scmp.ne.s32.totalorder %s204, %s207
      %p213 = scmp.eq.s32.totalorder %s22, 0
      %p214 = por %p212, %p213
      %p215 = scmp.ne.s32.totalorder %s204, %s207
      %p216 = scmp.eq.s32.totalorder %s27, 3
      %p217 = por %p215, %p216
      %p218 = scmp.ne.s32.totalorder %s207, %s208
      %p219 = scmp.eq.s32.totalorder %s27, 0
      %p220 = por %p218, %p219
      %p221 = scmp.ne.s32.totalorder %s207, %s208
      %p222 = scmp.eq.s32.totalorder %s28, 3
      %p223 = por %p221, %p222
      %p225 = scmp.ne.s32.totalorder %s208, %s224
      %p226 = scmp.eq.s32.totalorder %s28, 0
      %p227 = por %p225, %p226
      %s228 = ssub.s32 %s29, %s41
      %p229 = scmp.eq.s32.totalorder %s228, 0
      %s231 = sadd.s32 %s230, 1
      %s232 = scalar_select %p229, %s230, %s231
      %p235 = pneg %p229
      %p236 = scmp.eq.s32.totalorder %s22, 3
      %p237 = por %p235, %p236
      %p238 = scmp.ne.s32.totalorder %s230, %s233
      %p239 = scmp.eq.s32.totalorder %s22, 0
      %p240 = por %p238, %p239
      %p241 = scmp.ne.s32.totalorder %s230, %s233
      %p242 = scmp.eq.s32.totalorder %s27, 3
      %p243 = por %p241, %p242
      %p244 = scmp.ne.s32.totalorder %s233, %s234
      %p245 = scmp.eq.s32.totalorder %s27, 0
      %p246 = por %p244, %p245
      %p247 = scmp.ne.s32.totalorder %s233, %s234
      %p248 = scmp.eq.s32.totalorder %s28, 3
      %p249 = por %p247, %p248
      %p251 = scmp.ne.s32.totalorder %s234, %s250
      %p252 = scmp.eq.s32.totalorder %s28, 0
      %p253 = por %p251, %p252
      %s254 = ssub.s32 %s29, %s41
      %p255 = scmp.eq.s32.totalorder %s254, 0
      %s257 = sadd.s32 %s256, 1
      %s258 = scalar_select %p255, %s256, %s257
      %p261 = pneg %p255
      %p262 = scmp.eq.s32.totalorder %s22, 3
      %p263 = por %p261, %p262
      %p264 = scmp.ne.s32.totalorder %s256, %s259
      %p265 = scmp.eq.s32.totalorder %s22, 0
      %p266 = por %p264, %p265
      %p267 = scmp.ne.s32.totalorder %s256, %s259
      %p268 = scmp.eq.s32.totalorder %s27, 3
      %p269 = por %p267, %p268
      %p270 = scmp.ne.s32.totalorder %s259, %s260
      %p271 = scmp.eq.s32.totalorder %s27, 0
      %p272 = por %p270, %p271
      %p273 = scmp.ne.s32.totalorder %s259, %s260
      %p274 = scmp.eq.s32.totalorder %s28, 3
      %p275 = por %p273, %p274
      %p277 = scmp.ne.s32.totalorder %s260, %s276
      %p278 = scmp.eq.s32.totalorder %s28, 0
      %p279 = por %p277, %p278
      %s280 = ssub.s32 %s29, %s41
      %p281 = scmp.eq.s32.totalorder %s280, 0
      %s283 = sadd.s32 %s282, 1
      %s284 = scalar_select %p281, %s282, %s283
      %p287 = pneg %p281
      %p288 = scmp.eq.s32.totalorder %s22, 3
      %p289 = por %p287, %p288
      %p290 = scmp.ne.s32.totalorder %s282, %s285
      %p291 = scmp.eq.s32.totalorder %s22, 0
      %p292 = por %p290, %p291
      %p293 = scmp.ne.s32.totalorder %s282, %s285
      %p294 = scmp.eq.s32.totalorder %s27, 3
      %p295 = por %p293, %p294
      %p296 = scmp.ne.s32.totalorder %s285, %s286
      %p297 = scmp.eq.s32.totalorder %s27, 0
      %p298 = por %p296, %p297
      %p299 = scmp.ne.s32.totalorder %s285, %s286
      %p300 = scmp.eq.s32.totalorder %s28, 3
      %p301 = por %p299, %p300
      %p303 = scmp.ne.s32.totalorder %s286, %s302
      %p304 = scmp.eq.s32.totalorder %s28, 0
      %p305 = por %p303, %p304
      %p306 = scmp.le.s32.totalorder 1, %s22
      %p307 = scmp.lt.s32.totalorder %s22, 5
      %p308 = pnand %p306, %p307
      %p309 = pneg %p308
      // Predicated region
      $region9: #{_clam_mb_padded.1} parent=5 // pred_check
        _
      $region10: #{_clam_mb_padded.1} parent=5 // pred_check_branch
        %311 = sbr.rel (%p308) target = $region12
      $region11: #{_clam_mb_padded.1} parent=5 // pred_region
        %s312 = ssub.s32 %s22, 1
        // Predicated region
        $region13: #{_clam_mb_padded.1} parent=11 // pred_check
          %p313 = pneg %p85
        $region14: #{_clam_mb_padded.1} parent=11 // pred_check_branch
          %315 = sbr.rel (%p313) target = $region16
        $region15: #{_clam_mb_padded.1} parent=11 // pred_region
          _
        $region16: #{_clam_mb_padded.1} parent=11 // pred_fallthru
          _
        // Predicated region
        $region17: #{_clam_mb_padded.1} parent=11 // pred_check
          %p316 = pneg %p106
        $region18: #{_clam_mb_padded.1} parent=11 // pred_check_branch
          %318 = sbr.rel (%p316) target = $region20
        $region19: #{_clam_mb_padded.1} parent=11 // pred_region
          _
        $region20: #{_clam_mb_padded.1} parent=11 // pred_fallthru
          _
        // Predicated region
        $region21: #{_clam_mb_padded.1} parent=11 // pred_check
          %p319 = pneg %p127
        $region22: #{_clam_mb_padded.1} parent=11 // pred_check_branch
          %321 = sbr.rel (%p319) target = $region24
        $region23: #{_clam_mb_padded.1} parent=11 // pred_region
          _
        $region24: #{_clam_mb_padded.1} parent=11 // pred_fallthru
          _
        // Predicated region
        $region25: #{_clam_mb_padded.1} parent=11 // pred_check
          %p322 = pneg %p148
        $region26: #{_clam_mb_padded.1} parent=11 // pred_check_branch
          %324 = sbr.rel (%p322) target = $region28
        $region27: #{_clam_mb_padded.1} parent=11 // pred_region
          _
        $region28: #{_clam_mb_padded.1} parent=11 // pred_fallthru
          _
        // Predicated region
        $region29: #{_clam_mb_padded.1} parent=11 // pred_check
          %p325 = pneg %p169
        $region30: #{_clam_mb_padded.1} parent=11 // pred_check_branch
          %327 = sbr.rel (%p325) target = $region32
        $region31: #{_clam_mb_padded.1} parent=11 // pred_region
          _
        $region32: #{_clam_mb_padded.1} parent=11 // pred_fallthru
          _
        // Predicated region
        $region33: #{_clam_mb_padded.1} parent=11 // pred_check
          %p328 = pneg %p190
        $region34: #{_clam_mb_padded.1} parent=11 // pred_check_branch
          %330 = sbr.rel (%p328) target = $region36
        $region35: #{_clam_mb_padded.1} parent=11 // pred_region
          _
        $region36: #{_clam_mb_padded.1} parent=11 // pred_fallthru
          _
      $region12: #{_clam_mb_padded.1} parent=5 // pred_fallthru
        _
      %p331 = scmp.lt.s32.totalorder %s22, 4
      // Predicated region
      $region37: #{_clam_mb_padded.1} parent=5 // pred_check
        %p332 = pneg %p331
      $region38: #{_clam_mb_padded.1} parent=5 // pred_check_branch
        %334 = sbr.rel (%p332) target = $region40
      $region39: #{_clam_mb_padded.1} parent=5 // pred_region
        // Predicated region
        $region41: #{_clam_mb_padded.1} parent=39 // pred_check
          %p335 = pneg %p58
        $region42: #{_clam_mb_padded.1} parent=39 // pred_check_branch
          %337 = sbr.rel (%p335) target = $region44
        $region43: #{_clam_mb_padded.1} parent=39 // pred_region
          %s338 = smul.u32 %s29, 2
          %s339 = sadd.s32 %s338, %s30
          %s340 = smul.u32 32, %s339
          %p341 = scmp.lt.s32.totalorder %s340, 127
          %s342 = scalar_select %p341, %s340, 127
          %s343 = smul.addr %s342, 2
          %s344 = smul.addr %s343, 4
          %s345 = scalar_lea.vmem %s1, %s344
          %s346 = smul.u32 %s29, 2
          %s347 = sadd.s32 %s346, %s30
          %s348 = smul.u32 32, %s347
        $region44: #{_clam_mb_padded.1} parent=39 // pred_fallthru
          _
      $region40: #{_clam_mb_padded.1} parent=5 // pred_fallthru
        _
      %p349 = scmp.le.s32.totalorder 1, %s22
      %p350 = scmp.lt.s32.totalorder %s22, 5
      %p351 = pnand %p349, %p350
      %p352 = pneg %p351
      // Predicated region
      $region45: #{_clam_mb_padded.1} parent=5 // pred_check
        _
      $region46: #{_clam_mb_padded.1} parent=5 // pred_check_branch
        %354 = sbr.rel (%p351) target = $region48
      $region47: #{_clam_mb_padded.1} parent=5 // pred_region
        %s355 = ssub.s32 %s22, 1
        %s356 = smul.u32 %s31, 2
        %s357 = sadd.s32 %s356, %s32
        %s358 = smul.u32 32, %s357
        %p359 = scmp.lt.s32.totalorder %s358, 127
        %s360 = scalar_select %p359, %s358, 127
        %s361 = smul.addr %s360, 2
        %s362 = smul.addr %s361, 4
        %s363 = scalar_lea.vmem %s1, %s362
        %p364 = pneg %p64
        %p365 = pneg %p61
        %p366 = pneg %p85
        %p367 = pneg %p82
        %p368 = pneg %p106
        %p369 = pneg %p103
        %p370 = pneg %p127
        %p371 = pneg %p124
        %p372 = pneg %p148
        %p373 = pneg %p145
        %p374 = pneg %p169
        %p375 = pneg %p166
        %p376 = pneg %p190
        %p377 = pneg %p187
        %p378 = pneg %p220
        %p379 = pneg %p217
        %s380 = sand.u32 %s207, 1
        %s381 = scalar_lea.sflag [#allocation5], %s380
        %s382 = sand.u32 %s207, 1
        %s383 = smul.addr %s382, 4
        %s384 = scalar_lea.vmem [#allocation4], %s383
        %p385 = pneg %p246
        %p386 = pneg %p243
        %p387 = scmp.lt.s32.totalorder %s31, 1
        %s388 = scalar_select %p387, %s31, 1
        %s389 = smul.addr %s388, 2
        %s390 = scalar_lea.vmem %s9, %s389
        %p391 = pneg %p272
        %p392 = pneg %p269
        %p393 = scmp.lt.s32.totalorder %s31, 1
        %s394 = scalar_select %p393, %s31, 1
        %s395 = smul.addr %s394, 2
        %s396 = scalar_lea.vmem %s10, %s395
        %p397 = pneg %p298
        %p398 = pneg %p295
        %p399 = scmp.lt.s32.totalorder %s31, 1
        %s400 = scalar_select %p399, %s31, 1
        %s401 = smul.addr %s400, 2
        %s402 = smul.addr %s401, 2
        %s403 = scalar_lea.vmem %s11, %s402
        %s404 = smul.u32 %s31, 2
        %s405 = sadd.s32 %s404, %s32
        %s406 = smul.u32 32, %s405
        %p407 = scmp.lt.s32.totalorder %s406, 127
        %s408 = scalar_select %p407, %s406, 127
        %s409 = smul.addr %s408, 2
        %s410 = smul.addr %s409, 4
        %s411 = scalar_lea.vmem %s1, %s410
        %s412 = smul.u32 %s31, 2
        %s413 = sadd.s32 %s412, %s32
        %s414 = smul.u32 32, %s413
        %s415 = smul.u32 %s31, 2
        %s416 = sadd.s32 %s415, %s32
        %s417 = smul.u32 2, %s416
        %p418 = scmp.lt.s32.totalorder %s31, 1
        %s419 = scalar_select %p418, %s31, 1
        %s420 = smul.addr %s419, 2
        %s421 = scalar_lea.vmem %s9, %s420
        %p422 = scmp.lt.s32.totalorder %s31, 1
        %s423 = scalar_select %p422, %s31, 1
        %s424 = smul.addr %s423, 2
        %s425 = scalar_lea.vmem %s10, %s424
        %p426 = scmp.lt.s32.totalorder %s31, 1
        %s427 = scalar_select %p426, %s31, 1
        %s428 = smul.addr %s427, 2
        %s429 = smul.addr %s428, 2
        %s430 = scalar_lea.vmem %s11, %s429
        %s431 = sld [smem:[#allocation3]]
        %p432 = scmp.eq.s32.totalorder %s32, 0
        // Predicated region
        $region49: #{_clam_mb_padded.1} parent=47 // pred_check
          %p433 = pneg %p432
        $region50: #{_clam_mb_padded.1} parent=47 // pred_check_branch
          %435 = sbr.rel (%p433) target = $region52
        $region51: #{_clam_mb_padded.1} parent=47 // pred_region
          %vm436 = vcmask 1024
          %437 = vst.msk [vmem:[%s421] sm:$0x3] %vm436, -1e+30
          %438 = vst.msk [vmem:[%s425] sm:$0x3] %vm436, 0.0
          %439 = vst [vmem:[%s430] sm:$0xf] 0.0
        $region52: #{_clam_mb_padded.1} parent=47 // pred_fallthru
          _
        %v440 = vld [vmem:[%s411] sm:$0xff]
        %v441 = vld [vmem:[%s411 + $0x8] sm:$0xff]
        %v442 = vld [vmem:[%s411 + $0x10] sm:$0xff]
        %v443 = vld [vmem:[%s411 + $0x18] sm:$0xff]
        %v444 = vld [vmem:[%s411 + $0x20] sm:$0xff]
        %v445 = vld [vmem:[%s411 + $0x28] sm:$0xff]
        %v446 = vld [vmem:[%s411 + $0x30] sm:$0xff]
        %v447 = vld [vmem:[%s411 + $0x38] sm:$0xff]
        %v448 = vld [vmem:[%s411 + $0x40] sm:$0xff]
        %v449 = vld [vmem:[%s411 + $0x48] sm:$0xff]
        %v450 = vld [vmem:[%s411 + $0x50] sm:$0xff]
        %v451 = vld [vmem:[%s411 + $0x58] sm:$0xff]
        %v452 = vld [vmem:[%s411 + $0x60] sm:$0xff]
        %v453 = vld [vmem:[%s411 + $0x68] sm:$0xff]
        %v454 = vld [vmem:[%s411 + $0x70] sm:$0xff]
        %v455 = vld [vmem:[%s411 + $0x78] sm:$0xff]
        %v456 = vld [vmem:[%s411 + $0x80] sm:$0xff]
        %v457 = vld [vmem:[%s411 + $0x88] sm:$0xff]
        %v458 = vld [vmem:[%s411 + $0x90] sm:$0xff]
        %v459 = vld [vmem:[%s411 + $0x98] sm:$0xff]
        %v460 = vld [vmem:[%s411 + $0xa0] sm:$0xff]
        %v461 = vld [vmem:[%s411 + $0xa8] sm:$0xff]
        %v462 = vld [vmem:[%s411 + $0xb0] sm:$0xff]
        %v463 = vld [vmem:[%s411 + $0xb8] sm:$0xff]
        %v464 = vld [vmem:[%s411 + $0xc0] sm:$0xff]
        %v465 = vld [vmem:[%s411 + $0xc8] sm:$0xff]
        %v466 = vld [vmem:[%s411 + $0xd0] sm:$0xff]
        %v467 = vld [vmem:[%s411 + $0xd8] sm:$0xff]
        %v468 = vld [vmem:[%s411 + $0xe0] sm:$0xff]
        %v469 = vld [vmem:[%s411 + $0xe8] sm:$0xff]
        %v470 = vld [vmem:[%s411 + $0xf0] sm:$0xff]
        %v471 = vld [vmem:[%s411 + $0xf8] sm:$0xff]
        %v472 = vld [vmem:[%s2] sm:$0xff]
        %v473 = vld [vmem:[%s2 + $0x8] sm:$0xff]
        %v474 = vld [vmem:[%s2 + $0x10] sm:$0xff]
        %v475 = vld [vmem:[%s2 + $0x18] sm:$0xff]
        %v476 = vld [vmem:[%s2 + $0x20] sm:$0xff]
        %v477 = vld [vmem:[%s2 + $0x28] sm:$0xff]
        %v478 = vld [vmem:[%s2 + $0x30] sm:$0xff]
        %v479 = vld [vmem:[%s2 + $0x38] sm:$0xff]
        %v480 = vld [vmem:[%s2 + $0x40] sm:$0xff]
        %v481 = vld [vmem:[%s2 + $0x48] sm:$0xff]
        %v482 = vld [vmem:[%s2 + $0x50] sm:$0xff]
        %v483 = vld [vmem:[%s2 + $0x58] sm:$0xff]
        %v484 = vld [vmem:[%s2 + $0x60] sm:$0xff]
        %v485 = vld [vmem:[%s2 + $0x68] sm:$0xff]
        %v486 = vld [vmem:[%s2 + $0x70] sm:$0xff]
        %v487 = vld [vmem:[%s2 + $0x78] sm:$0xff]
        %v488 = vld [vmem:[%s2 + $0x80] sm:$0xff]
        %v489 = vld [vmem:[%s2 + $0x88] sm:$0xff]
        %v490 = vld [vmem:[%s2 + $0x90] sm:$0xff]
        %v491 = vld [vmem:[%s2 + $0x98] sm:$0xff]
        %v492 = vld [vmem:[%s2 + $0xa0] sm:$0xff]
        %v493 = vld [vmem:[%s2 + $0xa8] sm:$0xff]
        %v494 = vld [vmem:[%s2 + $0xb0] sm:$0xff]
        %v495 = vld [vmem:[%s2 + $0xb8] sm:$0xff]
        %v496 = vld [vmem:[%s2 + $0xc0] sm:$0xff]
        %v497 = vld [vmem:[%s2 + $0xc8] sm:$0xff]
        %v498 = vld [vmem:[%s2 + $0xd0] sm:$0xff]
        %v499 = vld [vmem:[%s2 + $0xd8] sm:$0xff]
        %v500 = vld [vmem:[%s2 + $0xe0] sm:$0xff]
        %v501 = vld [vmem:[%s2 + $0xe8] sm:$0xff]
        %v502 = vld [vmem:[%s2 + $0xf0] sm:$0xff]
        %v503 = vld [vmem:[%s2 + $0xf8] sm:$0xff]
        %v504 = vld [vmem:[%s3] sm:$0x3]
        %v506 = vlaneseq
        %v507 = vshrl.u32 %v506, 7
        %v508 = vsub.s32 0, %v507
        %v509 = vrot.slane %v504, %v508
        %v510 = vlaneseq
        %v511 = vshrl.u32 %v510, 7
        %v512 = vsub.s32 1, %v511
        %v513 = vrot.slane %v504, %v512
        %v548 = vunpack.c.l.b16 %v440
        %v549 = vunpack.c.h.b16 %v440
        %v550 = vunpack.c.l.b16 %v441
        %v551 = vunpack.c.h.b16 %v441
        %v552 = vunpack.c.l.b16 %v442
        %v553 = vunpack.c.h.b16 %v442
        %v554 = vunpack.c.l.b16 %v443
        %v555 = vunpack.c.h.b16 %v443
        %v556 = vunpack.c.l.b16 %v444
        %v557 = vunpack.c.h.b16 %v444
        %v558 = vunpack.c.l.b16 %v445
        %v559 = vunpack.c.h.b16 %v445
        %v560 = vunpack.c.l.b16 %v446
        %v561 = vunpack.c.h.b16 %v446
        %v562 = vunpack.c.l.b16 %v447
        %v563 = vunpack.c.h.b16 %v447
        %v564 = vunpack.c.l.b16 %v448
        %v565 = vunpack.c.h.b16 %v448
        %v566 = vunpack.c.l.b16 %v449
        %v567 = vunpack.c.h.b16 %v449
        %v568 = vunpack.c.l.b16 %v450
        %v569 = vunpack.c.h.b16 %v450
        %v570 = vunpack.c.l.b16 %v451
        %v571 = vunpack.c.h.b16 %v451
        %v572 = vunpack.c.l.b16 %v452
        %v573 = vunpack.c.h.b16 %v452
        %v574 = vunpack.c.l.b16 %v453
        %v575 = vunpack.c.h.b16 %v453
        %v576 = vunpack.c.l.b16 %v454
        %v577 = vunpack.c.h.b16 %v454
        %v578 = vunpack.c.l.b16 %v455
        %v579 = vunpack.c.h.b16 %v455
        %v580 = vunpack.c.l.b16 %v456
        %v581 = vunpack.c.h.b16 %v456
        %v582 = vunpack.c.l.b16 %v457
        %v583 = vunpack.c.h.b16 %v457
        %v584 = vunpack.c.l.b16 %v458
        %v585 = vunpack.c.h.b16 %v458
        %v586 = vunpack.c.l.b16 %v459
        %v587 = vunpack.c.h.b16 %v459
        %v588 = vunpack.c.l.b16 %v460
        %v589 = vunpack.c.h.b16 %v460
        %v590 = vunpack.c.l.b16 %v461
        %v591 = vunpack.c.h.b16 %v461
        %v592 = vunpack.c.l.b16 %v462
        %v593 = vunpack.c.h.b16 %v462
        %v594 = vunpack.c.l.b16 %v463
        %v595 = vunpack.c.h.b16 %v463
        %v596 = vunpack.c.l.b16 %v464
        %v597 = vunpack.c.h.b16 %v464
        %v598 = vunpack.c.l.b16 %v465
        %v599 = vunpack.c.h.b16 %v465
        %v600 = vunpack.c.l.b16 %v466
        %v601 = vunpack.c.h.b16 %v466
        %v602 = vunpack.c.l.b16 %v467
        %v603 = vunpack.c.h.b16 %v467
        %v604 = vunpack.c.l.b16 %v468
        %v605 = vunpack.c.h.b16 %v468
        %v606 = vunpack.c.l.b16 %v469
        %v607 = vunpack.c.h.b16 %v469
        %v608 = vunpack.c.l.b16 %v470
        %v609 = vunpack.c.h.b16 %v470
        %v610 = vunpack.c.l.b16 %v471
        %v611 = vunpack.c.h.b16 %v471
        %v612 = vpack.c.b16 %v550, %v548
        %v613 = vpack.c.b16 %v551, %v549
        %v614 = vpack.c.b16 %v554, %v552
        %v615 = vpack.c.b16 %v555, %v553
        %v616 = vpack.c.b16 %v558, %v556
        %v617 = vpack.c.b16 %v559, %v557
        %v618 = vpack.c.b16 %v562, %v560
        %v619 = vpack.c.b16 %v563, %v561
        %v620 = vpack.c.b16 %v566, %v564
        %v621 = vpack.c.b16 %v567, %v565
        %v622 = vpack.c.b16 %v570, %v568
        %v623 = vpack.c.b16 %v571, %v569
        %v624 = vpack.c.b16 %v574, %v572
        %v625 = vpack.c.b16 %v575, %v573
        %v626 = vpack.c.b16 %v578, %v576
        %v627 = vpack.c.b16 %v579, %v577
        %v628 = vpack.c.b16 %v582, %v580
        %v629 = vpack.c.b16 %v583, %v581
        %v630 = vpack.c.b16 %v586, %v584
        %v631 = vpack.c.b16 %v587, %v585
        %v632 = vpack.c.b16 %v590, %v588
        %v633 = vpack.c.b16 %v591, %v589
        %v634 = vpack.c.b16 %v594, %v592
        %v635 = vpack.c.b16 %v595, %v593
        %v636 = vpack.c.b16 %v598, %v596
        %v637 = vpack.c.b16 %v599, %v597
        %v638 = vpack.c.b16 %v602, %v600
        %v639 = vpack.c.b16 %v603, %v601
        %v640 = vpack.c.b16 %v606, %v604
        %v641 = vpack.c.b16 %v607, %v605
        %v642 = vpack.c.b16 %v610, %v608
        %v643 = vpack.c.b16 %v611, %v609
        %v708 = vunpack.c.l.b16 %v472
        %v709 = vunpack.c.h.b16 %v472
        %v710 = vunpack.c.l.b16 %v473
        %v711 = vunpack.c.h.b16 %v473
        %v712 = vunpack.c.l.b16 %v474
        %v713 = vunpack.c.h.b16 %v474
        %v714 = vunpack.c.l.b16 %v475
        %v715 = vunpack.c.h.b16 %v475
        %v716 = vunpack.c.l.b16 %v476
        %v717 = vunpack.c.h.b16 %v476
        %v718 = vunpack.c.l.b16 %v477
        %v719 = vunpack.c.h.b16 %v477
        %v720 = vunpack.c.l.b16 %v478
        %v721 = vunpack.c.h.b16 %v478
        %v722 = vunpack.c.l.b16 %v479
        %v723 = vunpack.c.h.b16 %v479
        %v724 = vunpack.c.l.b16 %v480
        %v725 = vunpack.c.h.b16 %v480
        %v726 = vunpack.c.l.b16 %v481
        %v727 = vunpack.c.h.b16 %v481
        %v728 = vunpack.c.l.b16 %v482
        %v729 = vunpack.c.h.b16 %v482
        %v730 = vunpack.c.l.b16 %v483
        %v731 = vunpack.c.h.b16 %v483
        %v732 = vunpack.c.l.b16 %v484
        %v733 = vunpack.c.h.b16 %v484
        %v734 = vunpack.c.l.b16 %v485
        %v735 = vunpack.c.h.b16 %v485
        %v736 = vunpack.c.l.b16 %v486
        %v737 = vunpack.c.h.b16 %v486
        %v738 = vunpack.c.l.b16 %v487
        %v739 = vunpack.c.h.b16 %v487
        %v740 = vunpack.c.l.b16 %v488
        %v741 = vunpack.c.h.b16 %v488
        %v742 = vunpack.c.l.b16 %v489
        %v743 = vunpack.c.h.b16 %v489
        %v744 = vunpack.c.l.b16 %v490
        %v745 = vunpack.c.h.b16 %v490
        %v746 = vunpack.c.l.b16 %v491
        %v747 = vunpack.c.h.b16 %v491
        %v748 = vunpack.c.l.b16 %v492
        %v749 = vunpack.c.h.b16 %v492
        %v750 = vunpack.c.l.b16 %v493
        %v751 = vunpack.c.h.b16 %v493
        %v752 = vunpack.c.l.b16 %v494
        %v753 = vunpack.c.h.b16 %v494
        %v754 = vunpack.c.l.b16 %v495
        %v755 = vunpack.c.h.b16 %v495
        %v756 = vunpack.c.l.b16 %v496
        %v757 = vunpack.c.h.b16 %v496
        %v758 = vunpack.c.l.b16 %v497
        %v759 = vunpack.c.h.b16 %v497
        %v760 = vunpack.c.l.b16 %v498
        %v761 = vunpack.c.h.b16 %v498
        %v762 = vunpack.c.l.b16 %v499
        %v763 = vunpack.c.h.b16 %v499
        %v764 = vunpack.c.l.b16 %v500
        %v765 = vunpack.c.h.b16 %v500
        %v766 = vunpack.c.l.b16 %v501
        %v767 = vunpack.c.h.b16 %v501
        %v768 = vunpack.c.l.b16 %v502
        %v769 = vunpack.c.h.b16 %v502
        %v770 = vunpack.c.l.b16 %v503
        %v771 = vunpack.c.h.b16 %v503
        %v772 = vpack.c.b16 %v710, %v708
        %v773 = vpack.c.b16 %v711, %v709
        %v774 = vpack.c.b16 %v714, %v712
        %v775 = vpack.c.b16 %v715, %v713
        %v776 = vpack.c.b16 %v718, %v716
        %v777 = vpack.c.b16 %v719, %v717
        %v778 = vpack.c.b16 %v722, %v720
        %v779 = vpack.c.b16 %v723, %v721
        %v780 = vpack.c.b16 %v726, %v724
        %v781 = vpack.c.b16 %v727, %v725
        %v782 = vpack.c.b16 %v730, %v728
        %v783 = vpack.c.b16 %v731, %v729
        %v784 = vpack.c.b16 %v734, %v732
        %v785 = vpack.c.b16 %v735, %v733
        %v786 = vpack.c.b16 %v738, %v736
        %v787 = vpack.c.b16 %v739, %v737
        %v788 = vpack.c.b16 %v742, %v740
        %v789 = vpack.c.b16 %v743, %v741
        %v790 = vpack.c.b16 %v746, %v744
        %v791 = vpack.c.b16 %v747, %v745
        %v792 = vpack.c.b16 %v750, %v748
        %v793 = vpack.c.b16 %v751, %v749
        %v794 = vpack.c.b16 %v754, %v752
        %v795 = vpack.c.b16 %v755, %v753
        %v796 = vpack.c.b16 %v758, %v756
        %v797 = vpack.c.b16 %v759, %v757
        %v798 = vpack.c.b16 %v762, %v760
        %v799 = vpack.c.b16 %v763, %v761
        %v800 = vpack.c.b16 %v766, %v764
        %v801 = vpack.c.b16 %v767, %v765
        %v802 = vpack.c.b16 %v770, %v768
        %v803 = vpack.c.b16 %v771, %v769
        %836 = vmatprep.subr.bf16.mxu0 %v787
        %837 = vmatpush1.bf16.msra.mxu0 %v786
        %838 = vmatprep.subr.bf16.mxu0 %v785
        %839 = vmatpush1.bf16.msra.mxu0 %v784
        %840 = vmatprep.subr.bf16.mxu0 %v783
        %841 = vmatpush1.bf16.msra.mxu0 %v782
        %842 = vmatprep.subr.bf16.mxu0 %v781
        %843 = vmatpush1.bf16.msra.mxu0 %v780
        %844 = vmatprep.subr.bf16.mxu0 %v779
        %845 = vmatpush1.bf16.msra.mxu0 %v778
        %846 = vmatprep.subr.bf16.mxu0 %v777
        %847 = vmatpush1.bf16.msra.mxu0 %v776
        %848 = vmatprep.subr.bf16.mxu0 %v775
        %849 = vmatpush1.bf16.msra.mxu0 %v774
        %850 = vmatprep.subr.bf16.mxu0 %v773
        %851 = vmatpush1.bf16.msra.mxu0 %v772
        %852 = vmatprep.subr.bf16.mxu0 %v803
        %853 = vmatpush2.bf16.msra.mxu0 %v802
        %854 = vmatprep.subr.bf16.mxu0 %v801
        %855 = vmatpush2.bf16.msra.mxu0 %v800
        %856 = vmatprep.subr.bf16.mxu0 %v799
        %857 = vmatpush2.bf16.msra.mxu0 %v798
        %858 = vmatprep.subr.bf16.mxu0 %v797
        %859 = vmatpush2.bf16.msra.mxu0 %v796
        %860 = vmatprep.subr.bf16.mxu0 %v795
        %861 = vmatpush2.bf16.msra.mxu0 %v794
        %862 = vmatprep.subr.bf16.mxu0 %v793
        %863 = vmatpush2.bf16.msra.mxu0 %v792
        %864 = vmatprep.subr.bf16.mxu0 %v791
        %865 = vmatpush2.bf16.msra.mxu0 %v790
        %866 = vmatprep.subr.bf16.mxu0 %v789
        %867 = vmatpush2.bf16.msra.mxu0 %v788
        %868 = vmatprep.mubr.bf16.mxu0 %v613
        %869 = vmatmul.mubr.bf16.gmra.mxu0 %v612
        %v870 = vpop.f32.mrf.mxu0
        %v871 = vadd.f32 %v509, %v870
        %v872 = vpop.f32.mrf.mxu0
        %v873 = vadd.f32 %v513, %v872
        %v874 = vpop.f32.mrf.mxu0
        %v875 = vadd.f32 %v509, %v874
        %v876 = vpop.f32.mrf.mxu0
        %v877 = vadd.f32 %v513, %v876
        %878 = vmatprep.mubr.bf16.mxu0 %v615
        %879 = vmatmul.mubr.bf16.gmra.mxu0 %v614
        %v880 = vpop.f32.mrf.mxu0
        %v881 = vadd.f32 %v509, %v880
        %v882 = vpop.f32.mrf.mxu0
        %v883 = vadd.f32 %v513, %v882
        %v884 = vpop.f32.mrf.mxu0
        %v885 = vadd.f32 %v509, %v884
        %v886 = vpop.f32.mrf.mxu0
        %v887 = vadd.f32 %v513, %v886
        %888 = vmatprep.mubr.bf16.mxu0 %v617
        %889 = vmatmul.mubr.bf16.gmra.mxu0 %v616
        %v890 = vpop.f32.mrf.mxu0
        %v891 = vadd.f32 %v509, %v890
        %v892 = vpop.f32.mrf.mxu0
        %v893 = vadd.f32 %v513, %v892
        %v894 = vpop.f32.mrf.mxu0
        %v895 = vadd.f32 %v509, %v894
        %v896 = vpop.f32.mrf.mxu0
        %v897 = vadd.f32 %v513, %v896
        %898 = vmatprep.mubr.bf16.mxu0 %v619
        %899 = vmatmul.mubr.bf16.gmra.mxu0 %v618
        %v900 = vpop.f32.mrf.mxu0
        %v901 = vadd.f32 %v509, %v900
        %v902 = vpop.f32.mrf.mxu0
        %v903 = vadd.f32 %v513, %v902
        %v904 = vpop.f32.mrf.mxu0
        %v905 = vadd.f32 %v509, %v904
        %v906 = vpop.f32.mrf.mxu0
        %v907 = vadd.f32 %v513, %v906
        %908 = vmatprep.mubr.bf16.mxu0 %v621
        %909 = vmatmul.mubr.bf16.gmra.mxu0 %v620
        %v910 = vpop.f32.mrf.mxu0
        %v911 = vadd.f32 %v509, %v910
        %v912 = vpop.f32.mrf.mxu0
        %v913 = vadd.f32 %v513, %v912
        %v914 = vpop.f32.mrf.mxu0
        %v915 = vadd.f32 %v509, %v914
        %v916 = vpop.f32.mrf.mxu0
        %v917 = vadd.f32 %v513, %v916
        %918 = vmatprep.mubr.bf16.mxu0 %v623
        %919 = vmatmul.mubr.bf16.gmra.mxu0 %v622
        %v920 = vpop.f32.mrf.mxu0
        %v921 = vadd.f32 %v509, %v920
        %v922 = vpop.f32.mrf.mxu0
        %v923 = vadd.f32 %v513, %v922
        %v924 = vpop.f32.mrf.mxu0
        %v925 = vadd.f32 %v509, %v924
        %v926 = vpop.f32.mrf.mxu0
        %v927 = vadd.f32 %v513, %v926
        %928 = vmatprep.mubr.bf16.mxu0 %v625
        %929 = vmatmul.mubr.bf16.gmra.mxu0 %v624
        %v930 = vpop.f32.mrf.mxu0
        %v931 = vadd.f32 %v509, %v930
        %v932 = vpop.f32.mrf.mxu0
        %v933 = vadd.f32 %v513, %v932
        %v934 = vpop.f32.mrf.mxu0
        %v935 = vadd.f32 %v509, %v934
        %v936 = vpop.f32.mrf.mxu0
        %v937 = vadd.f32 %v513, %v936
        %938 = vmatprep.mubr.bf16.mxu0 %v627
        %939 = vmatmul.mubr.bf16.gmra.mxu0 %v626
        %v940 = vpop.f32.mrf.mxu0
        %v941 = vadd.f32 %v509, %v940
        %v942 = vpop.f32.mrf.mxu0
        %v943 = vadd.f32 %v513, %v942
        %v944 = vpop.f32.mrf.mxu0
        %v945 = vadd.f32 %v509, %v944
        %v946 = vpop.f32.mrf.mxu0
        %v947 = vadd.f32 %v513, %v946
        %948 = vmatprep.mubr.bf16.mxu0 %v629
        %949 = vmatmul.mubr.bf16.gmra.mxu0 %v628
        %v950 = vpop.f32.mrf.mxu0
        %v951 = vadd.f32 %v509, %v950
        %v952 = vpop.f32.mrf.mxu0
        %v953 = vadd.f32 %v513, %v952
        %v954 = vpop.f32.mrf.mxu0
        %v955 = vadd.f32 %v509, %v954
        %v956 = vpop.f32.mrf.mxu0
        %v957 = vadd.f32 %v513, %v956
        %958 = vmatprep.mubr.bf16.mxu0 %v631
        %959 = vmatmul.mubr.bf16.gmra.mxu0 %v630
        %v960 = vpop.f32.mrf.mxu0
        %v961 = vadd.f32 %v509, %v960
        %v962 = vpop.f32.mrf.mxu0
        %v963 = vadd.f32 %v513, %v962
        %v964 = vpop.f32.mrf.mxu0
        %v965 = vadd.f32 %v509, %v964
        %v966 = vpop.f32.mrf.mxu0
        %v967 = vadd.f32 %v513, %v966
        %968 = vmatprep.mubr.bf16.mxu0 %v633
        %969 = vmatmul.mubr.bf16.gmra.mxu0 %v632
        %v970 = vpop.f32.mrf.mxu0
        %v971 = vadd.f32 %v509, %v970
        %v972 = vpop.f32.mrf.mxu0
        %v973 = vadd.f32 %v513, %v972
        %v974 = vpop.f32.mrf.mxu0
        %v975 = vadd.f32 %v509, %v974
        %v976 = vpop.f32.mrf.mxu0
        %v977 = vadd.f32 %v513, %v976
        %978 = vmatprep.mubr.bf16.mxu0 %v635
        %979 = vmatmul.mubr.bf16.gmra.mxu0 %v634
        %v980 = vpop.f32.mrf.mxu0
        %v981 = vadd.f32 %v509, %v980
        %v982 = vpop.f32.mrf.mxu0
        %v983 = vadd.f32 %v513, %v982
        %v984 = vpop.f32.mrf.mxu0
        %v985 = vadd.f32 %v509, %v984
        %v986 = vpop.f32.mrf.mxu0
        %v987 = vadd.f32 %v513, %v986
        %988 = vmatprep.mubr.bf16.mxu0 %v637
        %989 = vmatmul.mubr.bf16.gmra.mxu0 %v636
        %v990 = vpop.f32.mrf.mxu0
        %v991 = vadd.f32 %v509, %v990
        %v992 = vpop.f32.mrf.mxu0
        %v993 = vadd.f32 %v513, %v992
        %v994 = vpop.f32.mrf.mxu0
        %v995 = vadd.f32 %v509, %v994
        %v996 = vpop.f32.mrf.mxu0
        %v997 = vadd.f32 %v513, %v996
        %998 = vmatprep.mubr.bf16.mxu0 %v639
        %999 = vmatmul.mubr.bf16.gmra.mxu0 %v638
        %v1000 = vpop.f32.mrf.mxu0
        %v1001 = vadd.f32 %v509, %v1000
        %v1002 = vpop.f32.mrf.mxu0
        %v1003 = vadd.f32 %v513, %v1002
        %v1004 = vpop.f32.mrf.mxu0
        %v1005 = vadd.f32 %v509, %v1004
        %v1006 = vpop.f32.mrf.mxu0
        %v1007 = vadd.f32 %v513, %v1006
        %1008 = vmatprep.mubr.bf16.mxu0 %v641
        %1009 = vmatmul.mubr.bf16.gmra.mxu0 %v640
        %v1010 = vpop.f32.mrf.mxu0
        %v1011 = vadd.f32 %v509, %v1010
        %v1012 = vpop.f32.mrf.mxu0
        %v1013 = vadd.f32 %v513, %v1012
        %v1014 = vpop.f32.mrf.mxu0
        %v1015 = vadd.f32 %v509, %v1014
        %v1016 = vpop.f32.mrf.mxu0
        %v1017 = vadd.f32 %v513, %v1016
        %1018 = vmatprep.mubr.bf16.mxu0 %v643
        %1019 = vmatmul.mubr.bf16.gmra.mxu0 %v642
        %v1020 = vpop.f32.mrf.mxu0
        %v1021 = vadd.f32 %v509, %v1020
        %v1022 = vpop.f32.mrf.mxu0
        %v1023 = vadd.f32 %v513, %v1022
        %v1024 = vpop.f32.mrf.mxu0
        %v1025 = vadd.f32 %v509, %v1024
        %v1026 = vpop.f32.mrf.mxu0
        %v1027 = vadd.f32 %v513, %v1026
        %1028 = vdwg.mxu0
        %v1029 = vmax.f32 %v871, 0.0
        %v1030 = vmax.f32 %v873, 0.0
        %v1031 = vmax.f32 %v875, 0.0
        %v1032 = vmax.f32 %v877, 0.0
        %v1033 = vmax.f32 %v881, 0.0
        %v1034 = vmax.f32 %v883, 0.0
        %v1035 = vmax.f32 %v885, 0.0
        %v1036 = vmax.f32 %v887, 0.0
        %v1037 = vmax.f32 %v891, 0.0
        %v1038 = vmax.f32 %v893, 0.0
        %v1039 = vmax.f32 %v895, 0.0
        %v1040 = vmax.f32 %v897, 0.0
        %v1041 = vmax.f32 %v901, 0.0
        %v1042 = vmax.f32 %v903, 0.0
        %v1043 = vmax.f32 %v905, 0.0
        %v1044 = vmax.f32 %v907, 0.0
        %v1045 = vmax.f32 %v911, 0.0
        %v1046 = vmax.f32 %v913, 0.0
        %v1047 = vmax.f32 %v915, 0.0
        %v1048 = vmax.f32 %v917, 0.0
        %v1049 = vmax.f32 %v921, 0.0
        %v1050 = vmax.f32 %v923, 0.0
        %v1051 = vmax.f32 %v925, 0.0
        %v1052 = vmax.f32 %v927, 0.0
        %v1053 = vmax.f32 %v931, 0.0
        %v1054 = vmax.f32 %v933, 0.0
        %v1055 = vmax.f32 %v935, 0.0
        %v1056 = vmax.f32 %v937, 0.0
        %v1057 = vmax.f32 %v941, 0.0
        %v1058 = vmax.f32 %v943, 0.0
        %v1059 = vmax.f32 %v945, 0.0
        %v1060 = vmax.f32 %v947, 0.0
        %v1061 = vmax.f32 %v951, 0.0
        %v1062 = vmax.f32 %v953, 0.0
        %v1063 = vmax.f32 %v955, 0.0
        %v1064 = vmax.f32 %v957, 0.0
        %v1065 = vmax.f32 %v961, 0.0
        %v1066 = vmax.f32 %v963, 0.0
        %v1067 = vmax.f32 %v965, 0.0
        %v1068 = vmax.f32 %v967, 0.0
        %v1069 = vmax.f32 %v971, 0.0
        %v1070 = vmax.f32 %v973, 0.0
        %v1071 = vmax.f32 %v975, 0.0
        %v1072 = vmax.f32 %v977, 0.0
        %v1073 = vmax.f32 %v981, 0.0
        %v1074 = vmax.f32 %v983, 0.0
        %v1075 = vmax.f32 %v985, 0.0
        %v1076 = vmax.f32 %v987, 0.0
        %v1077 = vmax.f32 %v991, 0.0
        %v1078 = vmax.f32 %v993, 0.0
        %v1079 = vmax.f32 %v995, 0.0
        %v1080 = vmax.f32 %v997, 0.0
        %v1081 = vmax.f32 %v1001, 0.0
        %v1082 = vmax.f32 %v1003, 0.0
        %v1083 = vmax.f32 %v1005, 0.0
        %v1084 = vmax.f32 %v1007, 0.0
        %v1085 = vmax.f32 %v1011, 0.0
        %v1086 = vmax.f32 %v1013, 0.0
        %v1087 = vmax.f32 %v1015, 0.0
        %v1088 = vmax.f32 %v1017, 0.0
        %v1089 = vmax.f32 %v1021, 0.0
        %v1090 = vmax.f32 %v1023, 0.0
        %v1091 = vmax.f32 %v1025, 0.0
        %v1092 = vmax.f32 %v1027, 0.0
        %v1093 = vpack.c.bf16 %v1031, %v1029
        %v1094 = vpack.c.bf16 %v1032, %v1030
        %v1095 = vpack.c.bf16 %v1035, %v1033
        %v1096 = vpack.c.bf16 %v1036, %v1034
        %v1097 = vpack.c.bf16 %v1039, %v1037
        %v1098 = vpack.c.bf16 %v1040, %v1038
        %v1099 = vpack.c.bf16 %v1043, %v1041
        %v1100 = vpack.c.bf16 %v1044, %v1042
        %v1101 = vpack.c.bf16 %v1047, %v1045
        %v1102 = vpack.c.bf16 %v1048, %v1046
        %v1103 = vpack.c.bf16 %v1051, %v1049
        %v1104 = vpack.c.bf16 %v1052, %v1050
        %v1105 = vpack.c.bf16 %v1055, %v1053
        %v1106 = vpack.c.bf16 %v1056, %v1054
        %v1107 = vpack.c.bf16 %v1059, %v1057
        %v1108 = vpack.c.bf16 %v1060, %v1058
        %v1109 = vpack.c.bf16 %v1063, %v1061
        %v1110 = vpack.c.bf16 %v1064, %v1062
        %v1111 = vpack.c.bf16 %v1067, %v1065
        %v1112 = vpack.c.bf16 %v1068, %v1066
        %v1113 = vpack.c.bf16 %v1071, %v1069
        %v1114 = vpack.c.bf16 %v1072, %v1070
        %v1115 = vpack.c.bf16 %v1075, %v1073
        %v1116 = vpack.c.bf16 %v1076, %v1074
        %v1117 = vpack.c.bf16 %v1079, %v1077
        %v1118 = vpack.c.bf16 %v1080, %v1078
        %v1119 = vpack.c.bf16 %v1083, %v1081
        %v1120 = vpack.c.bf16 %v1084, %v1082
        %v1121 = vpack.c.bf16 %v1087, %v1085
        %v1122 = vpack.c.bf16 %v1088, %v1086
        %v1123 = vpack.c.bf16 %v1091, %v1089
        %v1124 = vpack.c.bf16 %v1092, %v1090
        %v1125 = vld [vmem:[%s4] sm:$0xff]
        %v1126 = vld [vmem:[%s4 + $0x8] sm:$0xff]
        %v1127 = vld [vmem:[%s4 + $0x10] sm:$0xff]
        %v1128 = vld [vmem:[%s4 + $0x18] sm:$0xff]
        %v1129 = vld [vmem:[%s4 + $0x20] sm:$0xff]
        %v1130 = vld [vmem:[%s4 + $0x28] sm:$0xff]
        %v1131 = vld [vmem:[%s4 + $0x30] sm:$0xff]
        %v1132 = vld [vmem:[%s4 + $0x38] sm:$0xff]
        %v1133 = vld [vmem:[%s4 + $0x40] sm:$0xff]
        %v1134 = vld [vmem:[%s4 + $0x48] sm:$0xff]
        %v1135 = vld [vmem:[%s4 + $0x50] sm:$0xff]
        %v1136 = vld [vmem:[%s4 + $0x58] sm:$0xff]
        %v1137 = vld [vmem:[%s4 + $0x60] sm:$0xff]
        %v1138 = vld [vmem:[%s4 + $0x68] sm:$0xff]
        %v1139 = vld [vmem:[%s4 + $0x70] sm:$0xff]
        %v1140 = vld [vmem:[%s4 + $0x78] sm:$0xff]
        %v1141 = vld [vmem:[%s4 + $0x80] sm:$0xff]
        %v1142 = vld [vmem:[%s4 + $0x88] sm:$0xff]
        %v1143 = vld [vmem:[%s4 + $0x90] sm:$0xff]
        %v1144 = vld [vmem:[%s4 + $0x98] sm:$0xff]
        %v1145 = vld [vmem:[%s4 + $0xa0] sm:$0xff]
        %v1146 = vld [vmem:[%s4 + $0xa8] sm:$0xff]
        %v1147 = vld [vmem:[%s4 + $0xb0] sm:$0xff]
        %v1148 = vld [vmem:[%s4 + $0xb8] sm:$0xff]
        %v1149 = vld [vmem:[%s4 + $0xc0] sm:$0xff]
        %v1150 = vld [vmem:[%s4 + $0xc8] sm:$0xff]
        %v1151 = vld [vmem:[%s4 + $0xd0] sm:$0xff]
        %v1152 = vld [vmem:[%s4 + $0xd8] sm:$0xff]
        %v1153 = vld [vmem:[%s4 + $0xe0] sm:$0xff]
        %v1154 = vld [vmem:[%s4 + $0xe8] sm:$0xff]
        %v1155 = vld [vmem:[%s4 + $0xf0] sm:$0xff]
        %v1156 = vld [vmem:[%s4 + $0xf8] sm:$0xff]
        %v1157 = vld [vmem:[%s5] sm:$0x3]
        %v1159 = vlaneseq
        %v1160 = vshrl.u32 %v1159, 7
        %v1161 = vsub.s32 0, %v1160
        %v1162 = vrot.slane %v1157, %v1161
        %v1163 = vlaneseq
        %v1164 = vshrl.u32 %v1163, 7
        %v1165 = vsub.s32 1, %v1164
        %v1166 = vrot.slane %v1157, %v1165
        %v1201 = vunpack.c.l.b16 %v1125
        %v1202 = vunpack.c.h.b16 %v1125
        %v1203 = vunpack.c.l.b16 %v1126
        %v1204 = vunpack.c.h.b16 %v1126
        %v1205 = vunpack.c.l.b16 %v1127
        %v1206 = vunpack.c.h.b16 %v1127
        %v1207 = vunpack.c.l.b16 %v1128
        %v1208 = vunpack.c.h.b16 %v1128
        %v1209 = vunpack.c.l.b16 %v1129
        %v1210 = vunpack.c.h.b16 %v1129
        %v1211 = vunpack.c.l.b16 %v1130
        %v1212 = vunpack.c.h.b16 %v1130
        %v1213 = vunpack.c.l.b16 %v1131
        %v1214 = vunpack.c.h.b16 %v1131
        %v1215 = vunpack.c.l.b16 %v1132
        %v1216 = vunpack.c.h.b16 %v1132
        %v1217 = vunpack.c.l.b16 %v1133
        %v1218 = vunpack.c.h.b16 %v1133
        %v1219 = vunpack.c.l.b16 %v1134
        %v1220 = vunpack.c.h.b16 %v1134
        %v1221 = vunpack.c.l.b16 %v1135
        %v1222 = vunpack.c.h.b16 %v1135
        %v1223 = vunpack.c.l.b16 %v1136
        %v1224 = vunpack.c.h.b16 %v1136
        %v1225 = vunpack.c.l.b16 %v1137
        %v1226 = vunpack.c.h.b16 %v1137
        %v1227 = vunpack.c.l.b16 %v1138
        %v1228 = vunpack.c.h.b16 %v1138
        %v1229 = vunpack.c.l.b16 %v1139
        %v1230 = vunpack.c.h.b16 %v1139
        %v1231 = vunpack.c.l.b16 %v1140
        %v1232 = vunpack.c.h.b16 %v1140
        %v1233 = vunpack.c.l.b16 %v1141
        %v1234 = vunpack.c.h.b16 %v1141
        %v1235 = vunpack.c.l.b16 %v1142
        %v1236 = vunpack.c.h.b16 %v1142
        %v1237 = vunpack.c.l.b16 %v1143
        %v1238 = vunpack.c.h.b16 %v1143
        %v1239 = vunpack.c.l.b16 %v1144
        %v1240 = vunpack.c.h.b16 %v1144
        %v1241 = vunpack.c.l.b16 %v1145
        %v1242 = vunpack.c.h.b16 %v1145
        %v1243 = vunpack.c.l.b16 %v1146
        %v1244 = vunpack.c.h.b16 %v1146
        %v1245 = vunpack.c.l.b16 %v1147
        %v1246 = vunpack.c.h.b16 %v1147
        %v1247 = vunpack.c.l.b16 %v1148
        %v1248 = vunpack.c.h.b16 %v1148
        %v1249 = vunpack.c.l.b16 %v1149
        %v1250 = vunpack.c.h.b16 %v1149
        %v1251 = vunpack.c.l.b16 %v1150
        %v1252 = vunpack.c.h.b16 %v1150
        %v1253 = vunpack.c.l.b16 %v1151
        %v1254 = vunpack.c.h.b16 %v1151
        %v1255 = vunpack.c.l.b16 %v1152
        %v1256 = vunpack.c.h.b16 %v1152
        %v1257 = vunpack.c.l.b16 %v1153
        %v1258 = vunpack.c.h.b16 %v1153
        %v1259 = vunpack.c.l.b16 %v1154
        %v1260 = vunpack.c.h.b16 %v1154
        %v1261 = vunpack.c.l.b16 %v1155
        %v1262 = vunpack.c.h.b16 %v1155
        %v1263 = vunpack.c.l.b16 %v1156
        %v1264 = vunpack.c.h.b16 %v1156
        %v1265 = vpack.c.b16 %v1203, %v1201
        %v1266 = vpack.c.b16 %v1204, %v1202
        %v1267 = vpack.c.b16 %v1207, %v1205
        %v1268 = vpack.c.b16 %v1208, %v1206
        %v1269 = vpack.c.b16 %v1211, %v1209
        %v1270 = vpack.c.b16 %v1212, %v1210
        %v1271 = vpack.c.b16 %v1215, %v1213
        %v1272 = vpack.c.b16 %v1216, %v1214
        %v1273 = vpack.c.b16 %v1219, %v1217
        %v1274 = vpack.c.b16 %v1220, %v1218
        %v1275 = vpack.c.b16 %v1223, %v1221
        %v1276 = vpack.c.b16 %v1224, %v1222
        %v1277 = vpack.c.b16 %v1227, %v1225
        %v1278 = vpack.c.b16 %v1228, %v1226
        %v1279 = vpack.c.b16 %v1231, %v1229
        %v1280 = vpack.c.b16 %v1232, %v1230
        %v1281 = vpack.c.b16 %v1235, %v1233
        %v1282 = vpack.c.b16 %v1236, %v1234
        %v1283 = vpack.c.b16 %v1239, %v1237
        %v1284 = vpack.c.b16 %v1240, %v1238
        %v1285 = vpack.c.b16 %v1243, %v1241
        %v1286 = vpack.c.b16 %v1244, %v1242
        %v1287 = vpack.c.b16 %v1247, %v1245
        %v1288 = vpack.c.b16 %v1248, %v1246
        %v1289 = vpack.c.b16 %v1251, %v1249
        %v1290 = vpack.c.b16 %v1252, %v1250
        %v1291 = vpack.c.b16 %v1255, %v1253
        %v1292 = vpack.c.b16 %v1256, %v1254
        %v1293 = vpack.c.b16 %v1259, %v1257
        %v1294 = vpack.c.b16 %v1260, %v1258
        %v1295 = vpack.c.b16 %v1263, %v1261
        %v1296 = vpack.c.b16 %v1264, %v1262
        %1329 = vmatprep.subr.bf16.mxu0 %v1280
        %1330 = vmatpush1.bf16.msra.mxu0 %v1279
        %1331 = vmatprep.subr.bf16.mxu0 %v1278
        %1332 = vmatpush1.bf16.msra.mxu0 %v1277
        %1333 = vmatprep.subr.bf16.mxu0 %v1276
        %1334 = vmatpush1.bf16.msra.mxu0 %v1275
        %1335 = vmatprep.subr.bf16.mxu0 %v1274
        %1336 = vmatpush1.bf16.msra.mxu0 %v1273
        %1337 = vmatprep.subr.bf16.mxu0 %v1272
        %1338 = vmatpush1.bf16.msra.mxu0 %v1271
        %1339 = vmatprep.subr.bf16.mxu0 %v1270
        %1340 = vmatpush1.bf16.msra.mxu0 %v1269
        %1341 = vmatprep.subr.bf16.mxu0 %v1268
        %1342 = vmatpush1.bf16.msra.mxu0 %v1267
        %1343 = vmatprep.subr.bf16.mxu0 %v1266
        %1344 = vmatpush1.bf16.msra.mxu0 %v1265
        %1345 = vmatprep.subr.bf16.mxu0 %v1296
        %1346 = vmatpush2.bf16.msra.mxu0 %v1295
        %1347 = vmatprep.subr.bf16.mxu0 %v1294
        %1348 = vmatpush2.bf16.msra.mxu0 %v1293
        %1349 = vmatprep.subr.bf16.mxu0 %v1292
        %1350 = vmatpush2.bf16.msra.mxu0 %v1291
        %1351 = vmatprep.subr.bf16.mxu0 %v1290
        %1352 = vmatpush2.bf16.msra.mxu0 %v1289
        %1353 = vmatprep.subr.bf16.mxu0 %v1288
        %1354 = vmatpush2.bf16.msra.mxu0 %v1287
        %1355 = vmatprep.subr.bf16.mxu0 %v1286
        %1356 = vmatpush2.bf16.msra.mxu0 %v1285
        %1357 = vmatprep.subr.bf16.mxu0 %v1284
        %1358 = vmatpush2.bf16.msra.mxu0 %v1283
        %1359 = vmatprep.subr.bf16.mxu0 %v1282
        %1360 = vmatpush2.bf16.msra.mxu0 %v1281
        %1361 = vmatprep.mubr.bf16.mxu0 %v1094
        %1362 = vmatmul.mubr.bf16.gmra.mxu0 %v1093
        %v1363 = vpop.f32.mrf.mxu0
        %v1364 = vadd.f32 %v1162, %v1363
        %v1365 = vpop.f32.mrf.mxu0
        %v1366 = vadd.f32 %v1166, %v1365
        %v1367 = vpop.f32.mrf.mxu0
        %v1368 = vadd.f32 %v1162, %v1367
        %v1369 = vpop.f32.mrf.mxu0
        %v1370 = vadd.f32 %v1166, %v1369
        %1371 = vmatprep.mubr.bf16.mxu0 %v1096
        %1372 = vmatmul.mubr.bf16.gmra.mxu0 %v1095
        %v1373 = vpop.f32.mrf.mxu0
        %v1374 = vadd.f32 %v1162, %v1373
        %v1375 = vpop.f32.mrf.mxu0
        %v1376 = vadd.f32 %v1166, %v1375
        %v1377 = vpop.f32.mrf.mxu0
        %v1378 = vadd.f32 %v1162, %v1377
        %v1379 = vpop.f32.mrf.mxu0
        %v1380 = vadd.f32 %v1166, %v1379
        %1381 = vmatprep.mubr.bf16.mxu0 %v1098
        %1382 = vmatmul.mubr.bf16.gmra.mxu0 %v1097
        %v1383 = vpop.f32.mrf.mxu0
        %v1384 = vadd.f32 %v1162, %v1383
        %v1385 = vpop.f32.mrf.mxu0
        %v1386 = vadd.f32 %v1166, %v1385
        %v1387 = vpop.f32.mrf.mxu0
        %v1388 = vadd.f32 %v1162, %v1387
        %v1389 = vpop.f32.mrf.mxu0
        %v1390 = vadd.f32 %v1166, %v1389
        %1391 = vmatprep.mubr.bf16.mxu0 %v1100
        %1392 = vmatmul.mubr.bf16.gmra.mxu0 %v1099
        %v1393 = vpop.f32.mrf.mxu0
        %v1394 = vadd.f32 %v1162, %v1393
        %v1395 = vpop.f32.mrf.mxu0
        %v1396 = vadd.f32 %v1166, %v1395
        %v1397 = vpop.f32.mrf.mxu0
        %v1398 = vadd.f32 %v1162, %v1397
        %v1399 = vpop.f32.mrf.mxu0
        %v1400 = vadd.f32 %v1166, %v1399
        %1401 = vmatprep.mubr.bf16.mxu0 %v1102
        %1402 = vmatmul.mubr.bf16.gmra.mxu0 %v1101
        %v1403 = vpop.f32.mrf.mxu0
        %v1404 = vadd.f32 %v1162, %v1403
        %v1405 = vpop.f32.mrf.mxu0
        %v1406 = vadd.f32 %v1166, %v1405
        %v1407 = vpop.f32.mrf.mxu0
        %v1408 = vadd.f32 %v1162, %v1407
        %v1409 = vpop.f32.mrf.mxu0
        %v1410 = vadd.f32 %v1166, %v1409
        %1411 = vmatprep.mubr.bf16.mxu0 %v1104
        %1412 = vmatmul.mubr.bf16.gmra.mxu0 %v1103
        %v1413 = vpop.f32.mrf.mxu0
        %v1414 = vadd.f32 %v1162, %v1413
        %v1415 = vpop.f32.mrf.mxu0
        %v1416 = vadd.f32 %v1166, %v1415
        %v1417 = vpop.f32.mrf.mxu0
        %v1418 = vadd.f32 %v1162, %v1417
        %v1419 = vpop.f32.mrf.mxu0
        %v1420 = vadd.f32 %v1166, %v1419
        %1421 = vmatprep.mubr.bf16.mxu0 %v1106
        %1422 = vmatmul.mubr.bf16.gmra.mxu0 %v1105
        %v1423 = vpop.f32.mrf.mxu0
        %v1424 = vadd.f32 %v1162, %v1423
        %v1425 = vpop.f32.mrf.mxu0
        %v1426 = vadd.f32 %v1166, %v1425
        %v1427 = vpop.f32.mrf.mxu0
        %v1428 = vadd.f32 %v1162, %v1427
        %v1429 = vpop.f32.mrf.mxu0
        %v1430 = vadd.f32 %v1166, %v1429
        %1431 = vmatprep.mubr.bf16.mxu0 %v1108
        %1432 = vmatmul.mubr.bf16.gmra.mxu0 %v1107
        %v1433 = vpop.f32.mrf.mxu0
        %v1434 = vadd.f32 %v1162, %v1433
        %v1435 = vpop.f32.mrf.mxu0
        %v1436 = vadd.f32 %v1166, %v1435
        %v1437 = vpop.f32.mrf.mxu0
        %v1438 = vadd.f32 %v1162, %v1437
        %v1439 = vpop.f32.mrf.mxu0
        %v1440 = vadd.f32 %v1166, %v1439
        %1441 = vmatprep.mubr.bf16.mxu0 %v1110
        %1442 = vmatmul.mubr.bf16.gmra.mxu0 %v1109
        %v1443 = vpop.f32.mrf.mxu0
        %v1444 = vadd.f32 %v1162, %v1443
        %v1445 = vpop.f32.mrf.mxu0
        %v1446 = vadd.f32 %v1166, %v1445
        %v1447 = vpop.f32.mrf.mxu0
        %v1448 = vadd.f32 %v1162, %v1447
        %v1449 = vpop.f32.mrf.mxu0
        %v1450 = vadd.f32 %v1166, %v1449
        %1451 = vmatprep.mubr.bf16.mxu0 %v1112
        %1452 = vmatmul.mubr.bf16.gmra.mxu0 %v1111
        %v1453 = vpop.f32.mrf.mxu0
        %v1454 = vadd.f32 %v1162, %v1453
        %v1455 = vpop.f32.mrf.mxu0
        %v1456 = vadd.f32 %v1166, %v1455
        %v1457 = vpop.f32.mrf.mxu0
        %v1458 = vadd.f32 %v1162, %v1457
        %v1459 = vpop.f32.mrf.mxu0
        %v1460 = vadd.f32 %v1166, %v1459
        %1461 = vmatprep.mubr.bf16.mxu0 %v1114
        %1462 = vmatmul.mubr.bf16.gmra.mxu0 %v1113
        %v1463 = vpop.f32.mrf.mxu0
        %v1464 = vadd.f32 %v1162, %v1463
        %v1465 = vpop.f32.mrf.mxu0
        %v1466 = vadd.f32 %v1166, %v1465
        %v1467 = vpop.f32.mrf.mxu0
        %v1468 = vadd.f32 %v1162, %v1467
        %v1469 = vpop.f32.mrf.mxu0
        %v1470 = vadd.f32 %v1166, %v1469
        %1471 = vmatprep.mubr.bf16.mxu0 %v1116
        %1472 = vmatmul.mubr.bf16.gmra.mxu0 %v1115
        %v1473 = vpop.f32.mrf.mxu0
        %v1474 = vadd.f32 %v1162, %v1473
        %v1475 = vpop.f32.mrf.mxu0
        %v1476 = vadd.f32 %v1166, %v1475
        %v1477 = vpop.f32.mrf.mxu0
        %v1478 = vadd.f32 %v1162, %v1477
        %v1479 = vpop.f32.mrf.mxu0
        %v1480 = vadd.f32 %v1166, %v1479
        %1481 = vmatprep.mubr.bf16.mxu0 %v1118
        %1482 = vmatmul.mubr.bf16.gmra.mxu0 %v1117
        %v1483 = vpop.f32.mrf.mxu0
        %v1484 = vadd.f32 %v1162, %v1483
        %v1485 = vpop.f32.mrf.mxu0
        %v1486 = vadd.f32 %v1166, %v1485
        %v1487 = vpop.f32.mrf.mxu0
        %v1488 = vadd.f32 %v1162, %v1487
        %v1489 = vpop.f32.mrf.mxu0
        %v1490 = vadd.f32 %v1166, %v1489
        %1491 = vmatprep.mubr.bf16.mxu0 %v1120
        %1492 = vmatmul.mubr.bf16.gmra.mxu0 %v1119
        %v1493 = vpop.f32.mrf.mxu0
        %v1494 = vadd.f32 %v1162, %v1493
        %v1495 = vpop.f32.mrf.mxu0
        %v1496 = vadd.f32 %v1166, %v1495
        %v1497 = vpop.f32.mrf.mxu0
        %v1498 = vadd.f32 %v1162, %v1497
        %v1499 = vpop.f32.mrf.mxu0
        %v1500 = vadd.f32 %v1166, %v1499
        %1501 = vmatprep.mubr.bf16.mxu0 %v1122
        %1502 = vmatmul.mubr.bf16.gmra.mxu0 %v1121
        %v1503 = vpop.f32.mrf.mxu0
        %v1504 = vadd.f32 %v1162, %v1503
        %v1505 = vpop.f32.mrf.mxu0
        %v1506 = vadd.f32 %v1166, %v1505
        %v1507 = vpop.f32.mrf.mxu0
        %v1508 = vadd.f32 %v1162, %v1507
        %v1509 = vpop.f32.mrf.mxu0
        %v1510 = vadd.f32 %v1166, %v1509
        %1511 = vmatprep.mubr.bf16.mxu0 %v1124
        %1512 = vmatmul.mubr.bf16.gmra.mxu0 %v1123
        %v1513 = vpop.f32.mrf.mxu0
        %v1514 = vadd.f32 %v1162, %v1513
        %v1515 = vpop.f32.mrf.mxu0
        %v1516 = vadd.f32 %v1166, %v1515
        %v1517 = vpop.f32.mrf.mxu0
        %v1518 = vadd.f32 %v1162, %v1517
        %v1519 = vpop.f32.mrf.mxu0
        %v1520 = vadd.f32 %v1166, %v1519
        %1521 = vdwg.mxu0
        %v1522 = vtanh.pop %v1364
        %v1523 = vtanh.pop %v1368
        %v1524 = vtanh.pop %v1374
        %v1525 = vtanh.pop %v1378
        %v1526 = vtanh.pop %v1384
        %v1527 = vtanh.pop %v1388
        %v1528 = vtanh.pop %v1394
        %v1529 = vtanh.pop %v1398
        %v1530 = vtanh.pop %v1404
        %v1531 = vtanh.pop %v1408
        %v1532 = vtanh.pop %v1414
        %v1533 = vtanh.pop %v1418
        %v1534 = vtanh.pop %v1424
        %v1535 = vtanh.pop %v1428
        %v1536 = vtanh.pop %v1434
        %v1537 = vtanh.pop %v1438
        %v1538 = vtanh.pop %v1444
        %v1539 = vtanh.pop %v1448
        %v1540 = vtanh.pop %v1454
        %v1541 = vtanh.pop %v1458
        %v1542 = vtanh.pop %v1464
        %v1543 = vtanh.pop %v1468
        %v1544 = vtanh.pop %v1474
        %v1545 = vtanh.pop %v1478
        %v1546 = vtanh.pop %v1484
        %v1547 = vtanh.pop %v1488
        %v1548 = vtanh.pop %v1494
        %v1549 = vtanh.pop %v1498
        %v1550 = vtanh.pop %v1504
        %v1551 = vtanh.pop %v1508
        %v1552 = vtanh.pop %v1514
        %v1553 = vtanh.pop %v1518
        %v1554 = vmul.f32 %v1366, 0.5
        %v1555 = vmul.f32 %v1370, 0.5
        %v1556 = vmul.f32 %v1376, 0.5
        %v1557 = vmul.f32 %v1380, 0.5
        %v1558 = vmul.f32 %v1386, 0.5
        %v1559 = vmul.f32 %v1390, 0.5
        %v1560 = vmul.f32 %v1396, 0.5
        %v1561 = vmul.f32 %v1400, 0.5
        %v1562 = vmul.f32 %v1406, 0.5
        %v1563 = vmul.f32 %v1410, 0.5
        %v1564 = vmul.f32 %v1416, 0.5
        %v1565 = vmul.f32 %v1420, 0.5
        %v1566 = vmul.f32 %v1426, 0.5
        %v1567 = vmul.f32 %v1430, 0.5
        %v1568 = vmul.f32 %v1436, 0.5
        %v1569 = vmul.f32 %v1440, 0.5
        %v1570 = vmul.f32 %v1446, 0.5
        %v1571 = vmul.f32 %v1450, 0.5
        %v1572 = vmul.f32 %v1456, 0.5
        %v1573 = vmul.f32 %v1460, 0.5
        %v1574 = vmul.f32 %v1466, 0.5
        %v1575 = vmul.f32 %v1470, 0.5
        %v1576 = vmul.f32 %v1476, 0.5
        %v1577 = vmul.f32 %v1480, 0.5
        %v1578 = vmul.f32 %v1486, 0.5
        %v1579 = vmul.f32 %v1490, 0.5
        %v1580 = vmul.f32 %v1496, 0.5
        %v1581 = vmul.f32 %v1500, 0.5
        %v1582 = vmul.f32 %v1506, 0.5
        %v1583 = vmul.f32 %v1510, 0.5
        %v1584 = vmul.f32 %v1516, 0.5
        %v1585 = vmul.f32 %v1520, 0.5
        %v1586 = vtanh.pop %v1554
        %v1587 = vtanh.pop %v1555
        %v1588 = vtanh.pop %v1556
        %v1589 = vtanh.pop %v1557
        %v1590 = vtanh.pop %v1558
        %v1591 = vtanh.pop %v1559
        %v1592 = vtanh.pop %v1560
        %v1593 = vtanh.pop %v1561
        %v1594 = vtanh.pop %v1562
        %v1595 = vtanh.pop %v1563
        %v1596 = vtanh.pop %v1564
        %v1597 = vtanh.pop %v1565
        %v1598 = vtanh.pop %v1566
        %v1599 = vtanh.pop %v1567
        %v1600 = vtanh.pop %v1568
        %v1601 = vtanh.pop %v1569
        %v1602 = vtanh.pop %v1570
        %v1603 = vtanh.pop %v1571
        %v1604 = vtanh.pop %v1572
        %v1605 = vtanh.pop %v1573
        %v1606 = vtanh.pop %v1574
        %v1607 = vtanh.pop %v1575
        %v1608 = vtanh.pop %v1576
        %v1609 = vtanh.pop %v1577
        %v1610 = vtanh.pop %v1578
        %v1611 = vtanh.pop %v1579
        %v1612 = vtanh.pop %v1580
        %v1613 = vtanh.pop %v1581
        %v1614 = vtanh.pop %v1582
        %v1615 = vtanh.pop %v1583
        %v1616 = vtanh.pop %v1584
        %v1617 = vtanh.pop %v1585
        %v1618 = vadd.f32 %v1586, 1.0
        %v1619 = vadd.f32 %v1587, 1.0
        %v1620 = vadd.f32 %v1588, 1.0
        %v1621 = vadd.f32 %v1589, 1.0
        %v1622 = vadd.f32 %v1590, 1.0
        %v1623 = vadd.f32 %v1591, 1.0
        %v1624 = vadd.f32 %v1592, 1.0
        %v1625 = vadd.f32 %v1593, 1.0
        %v1626 = vadd.f32 %v1594, 1.0
        %v1627 = vadd.f32 %v1595, 1.0
        %v1628 = vadd.f32 %v1596, 1.0
        %v1629 = vadd.f32 %v1597, 1.0
        %v1630 = vadd.f32 %v1598, 1.0
        %v1631 = vadd.f32 %v1599, 1.0
        %v1632 = vadd.f32 %v1600, 1.0
        %v1633 = vadd.f32 %v1601, 1.0
        %v1634 = vadd.f32 %v1602, 1.0
        %v1635 = vadd.f32 %v1603, 1.0
        %v1636 = vadd.f32 %v1604, 1.0
        %v1637 = vadd.f32 %v1605, 1.0
        %v1638 = vadd.f32 %v1606, 1.0
        %v1639 = vadd.f32 %v1607, 1.0
        %v1640 = vadd.f32 %v1608, 1.0
        %v1641 = vadd.f32 %v1609, 1.0
        %v1642 = vadd.f32 %v1610, 1.0
        %v1643 = vadd.f32 %v1611, 1.0
        %v1644 = vadd.f32 %v1612, 1.0
        %v1645 = vadd.f32 %v1613, 1.0
        %v1646 = vadd.f32 %v1614, 1.0
        %v1647 = vadd.f32 %v1615, 1.0
        %v1648 = vadd.f32 %v1616, 1.0
        %v1649 = vadd.f32 %v1617, 1.0
        %v1650 = vmul.f32 %v1618, 0.5
        %v1651 = vmul.f32 %v1619, 0.5
        %v1652 = vmul.f32 %v1620, 0.5
        %v1653 = vmul.f32 %v1621, 0.5
        %v1654 = vmul.f32 %v1622, 0.5
        %v1655 = vmul.f32 %v1623, 0.5
        %v1656 = vmul.f32 %v1624, 0.5
        %v1657 = vmul.f32 %v1625, 0.5
        %v1658 = vmul.f32 %v1626, 0.5
        %v1659 = vmul.f32 %v1627, 0.5
        %v1660 = vmul.f32 %v1628, 0.5
        %v1661 = vmul.f32 %v1629, 0.5
        %v1662 = vmul.f32 %v1630, 0.5
        %v1663 = vmul.f32 %v1631, 0.5
        %v1664 = vmul.f32 %v1632, 0.5
        %v1665 = vmul.f32 %v1633, 0.5
        %v1666 = vmul.f32 %v1634, 0.5
        %v1667 = vmul.f32 %v1635, 0.5
        %v1668 = vmul.f32 %v1636, 0.5
        %v1669 = vmul.f32 %v1637, 0.5
        %v1670 = vmul.f32 %v1638, 0.5
        %v1671 = vmul.f32 %v1639, 0.5
        %v1672 = vmul.f32 %v1640, 0.5
        %v1673 = vmul.f32 %v1641, 0.5
        %v1674 = vmul.f32 %v1642, 0.5
        %v1675 = vmul.f32 %v1643, 0.5
        %v1676 = vmul.f32 %v1644, 0.5
        %v1677 = vmul.f32 %v1645, 0.5
        %v1678 = vmul.f32 %v1646, 0.5
        %v1679 = vmul.f32 %v1647, 0.5
        %v1680 = vmul.f32 %v1648, 0.5
        %v1681 = vmul.f32 %v1649, 0.5
        %v1682 = vmul.f32 %v1522, %v1650
        %v1683 = vmul.f32 %v1523, %v1651
        %v1684 = vmul.f32 %v1524, %v1652
        %v1685 = vmul.f32 %v1525, %v1653
        %v1686 = vmul.f32 %v1526, %v1654
        %v1687 = vmul.f32 %v1527, %v1655
        %v1688 = vmul.f32 %v1528, %v1656
        %v1689 = vmul.f32 %v1529, %v1657
        %v1690 = vmul.f32 %v1530, %v1658
        %v1691 = vmul.f32 %v1531, %v1659
        %v1692 = vmul.f32 %v1532, %v1660
        %v1693 = vmul.f32 %v1533, %v1661
        %v1694 = vmul.f32 %v1534, %v1662
        %v1695 = vmul.f32 %v1535, %v1663
        %v1696 = vmul.f32 %v1536, %v1664
        %v1697 = vmul.f32 %v1537, %v1665
        %v1698 = vmul.f32 %v1538, %v1666
        %v1699 = vmul.f32 %v1539, %v1667
        %v1700 = vmul.f32 %v1540, %v1668
        %v1701 = vmul.f32 %v1541, %v1669
        %v1702 = vmul.f32 %v1542, %v1670
        %v1703 = vmul.f32 %v1543, %v1671
        %v1704 = vmul.f32 %v1544, %v1672
        %v1705 = vmul.f32 %v1545, %v1673
        %v1706 = vmul.f32 %v1546, %v1674
        %v1707 = vmul.f32 %v1547, %v1675
        %v1708 = vmul.f32 %v1548, %v1676
        %v1709 = vmul.f32 %v1549, %v1677
        %v1710 = vmul.f32 %v1550, %v1678
        %v1711 = vmul.f32 %v1551, %v1679
        %v1712 = vmul.f32 %v1552, %v1680
        %v1713 = vmul.f32 %v1553, %v1681
        %v1714 = vld [vmem:[%s6] sm:$0x3]
        %v1715 = vld [vmem:[%s7] sm:$0x3]
        %1717 = vset.pattern.permute.xlu0 0
        %1718 = vperm.xlu0 %1717, %v1715
        %v1719 = vpop.permute.xlu0 %1718
        %1721 = vmatprep.subr.mxu0 0.0
        %1722 = vmatpush1.xpose.msra.mxu0 %v1697
        %1723 = vmatprep.subr.mxu0 0.0
        %1724 = vmatpush1.xpose.msra.mxu0 %v1696
        %1725 = vmatprep.subr.mxu0 0.0
        %1726 = vmatpush1.xpose.msra.mxu0 %v1695
        %1727 = vmatprep.subr.mxu0 0.0
        %1728 = vmatpush1.xpose.msra.mxu0 %v1694
        %1729 = vmatprep.subr.mxu0 0.0
        %1730 = vmatpush1.xpose.msra.mxu0 %v1693
        %1731 = vmatprep.subr.mxu0 0.0
        %1732 = vmatpush1.xpose.msra.mxu0 %v1692
        %1733 = vmatprep.subr.mxu0 0.0
        %1734 = vmatpush1.xpose.msra.mxu0 %v1691
        %1735 = vmatprep.subr.mxu0 0.0
        %1736 = vmatpush1.xpose.msra.mxu0 %v1690
        %1737 = vmatprep.subr.mxu0 0.0
        %1738 = vmatpush1.xpose.msra.mxu0 %v1689
        %1739 = vmatprep.subr.mxu0 0.0
        %1740 = vmatpush1.xpose.msra.mxu0 %v1688
        %1741 = vmatprep.subr.mxu0 0.0
        %1742 = vmatpush1.xpose.msra.mxu0 %v1687
        %1743 = vmatprep.subr.mxu0 0.0
        %1744 = vmatpush1.xpose.msra.mxu0 %v1686
        %1745 = vmatprep.subr.mxu0 0.0
        %1746 = vmatpush1.xpose.msra.mxu0 %v1685
        %1747 = vmatprep.subr.mxu0 0.0
        %1748 = vmatpush1.xpose.msra.mxu0 %v1684
        %1749 = vmatprep.subr.mxu0 0.0
        %1750 = vmatpush1.xpose.msra.mxu0 %v1683
        %1751 = vmatprep.subr.mxu0 0.0
        %1752 = vmatpush1.xpose.msra.mxu0 %v1682
        %1753 = vmatprep.subr.mxu0 0.0
        %1754 = vmatpush2.xpose.msra.mxu0 %v1713
        %1755 = vmatprep.subr.mxu0 0.0
        %1756 = vmatpush2.xpose.msra.mxu0 %v1712
        %1757 = vmatprep.subr.mxu0 0.0
        %1758 = vmatpush2.xpose.msra.mxu0 %v1711
        %1759 = vmatprep.subr.mxu0 0.0
        %1760 = vmatpush2.xpose.msra.mxu0 %v1710
        %1761 = vmatprep.subr.mxu0 0.0
        %1762 = vmatpush2.xpose.msra.mxu0 %v1709
        %1763 = vmatprep.subr.mxu0 0.0
        %1764 = vmatpush2.xpose.msra.mxu0 %v1708
        %1765 = vmatprep.subr.mxu0 0.0
        %1766 = vmatpush2.xpose.msra.mxu0 %v1707
        %1767 = vmatprep.subr.mxu0 0.0
        %1768 = vmatpush2.xpose.msra.mxu0 %v1706
        %1769 = vmatprep.subr.mxu0 0.0
        %1770 = vmatpush2.xpose.msra.mxu0 %v1705
        %1771 = vmatprep.subr.mxu0 0.0
        %1772 = vmatpush2.xpose.msra.mxu0 %v1704
        %1773 = vmatprep.subr.mxu0 0.0
        %1774 = vmatpush2.xpose.msra.mxu0 %v1703
        %1775 = vmatprep.subr.mxu0 0.0
        %1776 = vmatpush2.xpose.msra.mxu0 %v1702
        %1777 = vmatprep.subr.mxu0 0.0
        %1778 = vmatpush2.xpose.msra.mxu0 %v1701
        %1779 = vmatprep.subr.mxu0 0.0
        %1780 = vmatpush2.xpose.msra.mxu0 %v1700
        %1781 = vmatprep.subr.mxu0 0.0
        %1782 = vmatpush2.xpose.msra.mxu0 %v1699
        %1783 = vmatprep.subr.mxu0 0.0
        %1784 = vmatpush2.xpose.msra.mxu0 %v1698
        %1785 = vmatprep.mubr.f32.mxu0 0.0
        %1786 = vmatmul.mubr.f32.gmra.mxu0 %v1714
        %v1787 = vpop.f32.mrf.mxu0
        %v1788 = vadd.f32 %v1719, %v1787
        %v1789 = vpop.f32.mrf.mxu0
        %v1790 = vadd.f32 %v1719, %v1789
        %1791 = vdwg.mxu0
        %v1794 = vcombine.low %v1788, %v1790
        %v1796 = vunpack.c.l.s4 1983009808
        %v1797 = vunpack.c.0.s8 %v1796
        %v1798 = vlaneseq
        %v1799 = vshrl.u32 %v1798, 7
        %v1800 = vsub.s32 %v1797, %v1799
        %v1801 = vrot.slane %v1794, %v1800
        %1803 = vst [vmem:[%s384] sm:$0xf] %v1801
        %s1804 = smul.u32 %s31, 2
        %s1805 = sadd.s32 %s1804, %s32
        %s1806 = smul.u32 %s1805, 256
        %v1807 = vlaneseq
        %v1808 = vand.u32 %v1807, 127
        %v1809 = vadd.s32 %v1808, 128
        %v1810 = vstv %s1806
        %v1811 = vadd.s32 %v1810, %v1808
        %v1812 = vadd.s32 %v1810, %v1809
        %v1813 = vstv %s431
        %vm1814 = vcmp.lt.s32.totalorder %v1811, %v1813
        %vm1815 = vcmp.lt.s32.totalorder %v1812, %v1813
        %v1816 = vsel %vm1814, %v1788, -1e+30
        %v1817 = vsel %vm1815, %v1790, -1e+30
        %v1818 = vld [vmem:[%s421] sm:$0x3]
        %vm1819 = vcmask 1041408
        %v1820 = vsel %vm1819, %v1816, -inf
        %v1821 = vsel %vm1819, %v1817, -inf
        %v1822 = vmax.f32 %v1820, %v1821
        %1823 = vmax.xlane.f32.xlu0 %v1822
        %v1824 = vpop.xlane.xlu0 %1823
        %v1825 = vmax.f32 %v1818, %v1824
        %v1826 = vsub.f32 %v1818, %v1825
        %v1827 = vmul.f32 %v1826, 1.442695
        %v1828 = vpow.pop %v1827
        %1830 = vset.pattern.permute.xlu0 0
        %1831 = vperm.xlu0 %1830, %v1825
        %v1832 = vpop.permute.xlu0 %1831
        %v1834 = vsub.f32 %v1816, %v1832
        %v1835 = vsub.f32 %v1817, %v1832
        %v1836 = vmul.f32 %v1834, 1.442695
        %v1837 = vpow.pop %v1836
        %v1838 = vmul.f32 %v1835, 1.442695
        %v1839 = vpow.pop %v1838
        %v1840 = vsel %vm1814, %v1837, 0.0
        %v1841 = vsel %vm1815, %v1839, 0.0
        %v1842 = vld [vmem:[%s425] sm:$0x3]
        %v1843 = vmul.f32 %v1828, %v1842
        %v1844 = vsel %vm1819, %v1840, 0.0
        %v1845 = vsel %vm1819, %v1841, 0.0
        %v1846 = vadd.f32 %v1844, %v1845
        %1847 = vadd.xlane.f32.xlu0 %v1846
        %v1848 = vpop.xlane.xlu0 %1847
        %v1849 = vadd.f32 %v1843, %v1848
        %vm1850 = vcmask 1024
        %1851 = vst.msk [vmem:[%s425] sm:$0x3] %vm1850, %v1849
        %v1852 = vld [vmem:[%s430] sm:$0xf]
        %1854 = vset.pattern.permute.xlu0 0
        %1855 = vperm.xlu0 %1854, %v1828
        %v1856 = vpop.permute.xlu0 %1855
        %v1860 = vunpack.c.l.s4 1983009808
        %v1861 = vunpack.c.0.s8 %v1860
        %v1862 = vlaneseq
        %v1863 = vshrl.u32 %v1862, 7
        %v1864 = vsub.s32 %v1861, %v1863
        %v1865 = vrot.slane %v1852, %v1864
        %v1866 = vcombine.high %v1865, %v1865
        %v1869 = vmul.f32 %v1856, %v1865
        %v1870 = vmul.f32 %v1856, %v1866
        %v1871 = vpack.c.bf16 %v1840, %v1840
        %v1872 = vpack.c.bf16 %v1841, %v1841
        %1873 = vmatprep.subr.bf16.mxu0 %v1108
        %1874 = vmatpush1.bf16.msra.mxu0 %v1107
        %1875 = vmatprep.subr.bf16.mxu0 %v1106
        %1876 = vmatpush1.bf16.msra.mxu0 %v1105
        %1877 = vmatprep.subr.bf16.mxu0 %v1104
        %1878 = vmatpush1.bf16.msra.mxu0 %v1103
        %1879 = vmatprep.subr.bf16.mxu0 %v1102
        %1880 = vmatpush1.bf16.msra.mxu0 %v1101
        %1881 = vmatprep.subr.bf16.mxu0 %v1100
        %1882 = vmatpush1.bf16.msra.mxu0 %v1099
        %1883 = vmatprep.subr.bf16.mxu0 %v1098
        %1884 = vmatpush1.bf16.msra.mxu0 %v1097
        %1885 = vmatprep.subr.bf16.mxu0 %v1096
        %1886 = vmatpush1.bf16.msra.mxu0 %v1095
        %1887 = vmatprep.subr.bf16.mxu0 %v1094
        %1888 = vmatpush1.bf16.msra.mxu0 %v1093
        %1889 = vmatprep.subr.bf16.mxu0 %v1124
        %1890 = vmatpush2.bf16.msra.mxu0 %v1123
        %1891 = vmatprep.subr.bf16.mxu0 %v1122
        %1892 = vmatpush2.bf16.msra.mxu0 %v1121
        %1893 = vmatprep.subr.bf16.mxu0 %v1120
        %1894 = vmatpush2.bf16.msra.mxu0 %v1119
        %1895 = vmatprep.subr.bf16.mxu0 %v1118
        %1896 = vmatpush2.bf16.msra.mxu0 %v1117
        %1897 = vmatprep.subr.bf16.mxu0 %v1116
        %1898 = vmatpush2.bf16.msra.mxu0 %v1115
        %1899 = vmatprep.subr.bf16.mxu0 %v1114
        %1900 = vmatpush2.bf16.msra.mxu0 %v1113
        %1901 = vmatprep.subr.bf16.mxu0 %v1112
        %1902 = vmatpush2.bf16.msra.mxu0 %v1111
        %1903 = vmatprep.subr.bf16.mxu0 %v1110
        %1904 = vmatpush2.bf16.msra.mxu0 %v1109
        %1905 = vmatprep.mubr.bf16.mxu0 %v1872
        %1906 = vmatmul.mubr.bf16.gmra.mxu0 %v1871
        %v1907 = vpop.f32.mrf.mxu0
        %v1908 = vadd.f32 0.0, %v1907
        %v1909 = vpop.f32.mrf.mxu0
        %v1910 = vadd.f32 0.0, %v1909
        %v1911 = vpop.f32.mrf.mxu0
        %v1912 = vpop.f32.mrf.mxu0
        %1913 = vdwg.mxu0
        %v1914 = vadd.f32 %v1869, %v1908
        %v1915 = vadd.f32 %v1870, %v1910
        %v1918 = vcombine.low %v1914, %v1915
        %v1920 = vunpack.c.l.s4 1983009808
        %v1921 = vunpack.c.0.s8 %v1920
        %v1922 = vlaneseq
        %v1923 = vshrl.u32 %v1922, 7
        %v1924 = vsub.s32 %v1921, %v1923
        %v1925 = vrot.slane %v1918, %v1924
        %1927 = vst [vmem:[%s430] sm:$0xf] %v1925
        %1928 = vst.msk [vmem:[%s421] sm:$0x3] %vm1850, %v1825
        %s1929 = sand.u32 %s207, 1
        %s1930 = scalar_lea.sflag [#allocation5], %s1929
        %s1931 = sand.u32 %s207, 1
        %s1932 = smul.addr %s1931, 4
        %s1933 = scalar_lea.vmem [#allocation4], %s1932
        %p1934 = scmp.lt.s32.totalorder %s31, 1
        %s1935 = scalar_select %p1934, %s31, 1
        %s1936 = smul.addr %s1935, 2
        %s1937 = scalar_lea.vmem %s9, %s1936
        %p1938 = scmp.lt.s32.totalorder %s31, 1
        %s1939 = scalar_select %p1938, %s31, 1
        %s1940 = smul.addr %s1939, 2
        %s1941 = scalar_lea.vmem %s10, %s1940
        %p1942 = scmp.lt.s32.totalorder %s31, 1
        %s1943 = scalar_select %p1942, %s31, 1
        %s1944 = smul.addr %s1943, 2
        %s1945 = smul.addr %s1944, 2
        %s1946 = scalar_lea.vmem %s11, %s1945
        // Predicated region
        $region53: #{_clam_mb_padded.1} parent=47 // pred_check
          %p1947 = pneg %p217
        $region54: #{_clam_mb_padded.1} parent=47 // pred_check_branch
          %1949 = sbr.rel (%p1947) target = $region56
        $region55: #{_clam_mb_padded.1} parent=47 // pred_region
          %s1950 = smul.u32 %s31, 2
          %s1951 = sadd.s32 %s1950, %s32
          %s1952 = smul.u32 2, %s1951
          %s1954 = ssub.s32 64, 64
          %1955 = vsyncadd %s1930, %s1954
          %s1956 = smul.addr %s1952, 32
          %s1957 = scalar_lea.hbm %s8, %s1956
          %s1959 = sshll.u32 %s1933, 4
          %s1960 = int_to_ptr.vmem [resolvable:$true] %s1959
          %1962 = dma.vmem_to_hbm [thread:$0]  %s1960, 64, %s1957, %s1930
        $region56: #{_clam_mb_padded.1} parent=47 // pred_fallthru
          _
        // Predicated region
        $region57: #{_clam_mb_padded.1} parent=47 // pred_check
          %p1963 = pneg %p243
        $region58: #{_clam_mb_padded.1} parent=47 // pred_check_branch
          %1965 = sbr.rel (%p1963) target = $region60
        $region59: #{_clam_mb_padded.1} parent=47 // pred_region
          _
        $region60: #{_clam_mb_padded.1} parent=47 // pred_fallthru
          _
        // Predicated region
        $region61: #{_clam_mb_padded.1} parent=47 // pred_check
          %p1966 = pneg %p269
        $region62: #{_clam_mb_padded.1} parent=47 // pred_check_branch
          %1968 = sbr.rel (%p1966) target = $region64
        $region63: #{_clam_mb_padded.1} parent=47 // pred_region
          _
        $region64: #{_clam_mb_padded.1} parent=47 // pred_fallthru
          _
        // Predicated region
        $region65: #{_clam_mb_padded.1} parent=47 // pred_check
          %p1969 = pneg %p295
        $region66: #{_clam_mb_padded.1} parent=47 // pred_check_branch
          %1971 = sbr.rel (%p1969) target = $region68
        $region67: #{_clam_mb_padded.1} parent=47 // pred_region
          _
        $region68: #{_clam_mb_padded.1} parent=47 // pred_fallthru
          _
      $region48: #{_clam_mb_padded.1} parent=5 // pred_fallthru
        _
      %p1972 = scmp.le.s32.totalorder 2, %s22
      // Predicated region
      $region69: #{_clam_mb_padded.1} parent=5 // pred_check
        %p1973 = pneg %p1972
      $region70: #{_clam_mb_padded.1} parent=5 // pred_check_branch
        %1975 = sbr.rel (%p1973) target = $region72
      $region71: #{_clam_mb_padded.1} parent=5 // pred_region
        %s1976 = ssub.s32 %s22, 2
        // Predicated region
        $region73: #{_clam_mb_padded.1} parent=71 // pred_check
          %p1977 = pneg %p223
        $region74: #{_clam_mb_padded.1} parent=71 // pred_check_branch
          %1979 = sbr.rel (%p1977) target = $region76
        $region75: #{_clam_mb_padded.1} parent=71 // pred_region
          %s1980 = sand.u32 %s208, 1
          %s1981 = scalar_lea.sflag [#allocation5], %s1980
          %s1982 = sand.u32 %s208, 1
          %s1983 = smul.addr %s1982, 4
          %s1984 = scalar_lea.vmem [#allocation4], %s1983
          %1985 = dma.done %s1981, 64
        $region76: #{_clam_mb_padded.1} parent=71 // pred_fallthru
          _
        // Predicated region
        $region77: #{_clam_mb_padded.1} parent=71 // pred_check
          %p1986 = pneg %p249
        $region78: #{_clam_mb_padded.1} parent=71 // pred_check_branch
          %1988 = sbr.rel (%p1986) target = $region80
        $region79: #{_clam_mb_padded.1} parent=71 // pred_region
          %p1989 = scmp.lt.s32.totalorder %s33, 1
          %s1990 = scalar_select %p1989, %s33, 1
          %s1991 = smul.addr %s1990, 2
          %s1992 = scalar_lea.vmem %s9, %s1991
        $region80: #{_clam_mb_padded.1} parent=71 // pred_fallthru
          _
        // Predicated region
        $region81: #{_clam_mb_padded.1} parent=71 // pred_check
          %p1993 = pneg %p275
        $region82: #{_clam_mb_padded.1} parent=71 // pred_check_branch
          %1995 = sbr.rel (%p1993) target = $region84
        $region83: #{_clam_mb_padded.1} parent=71 // pred_region
          %p1996 = scmp.lt.s32.totalorder %s33, 1
          %s1997 = scalar_select %p1996, %s33, 1
          %s1998 = smul.addr %s1997, 2
          %s1999 = scalar_lea.vmem %s10, %s1998
        $region84: #{_clam_mb_padded.1} parent=71 // pred_fallthru
          _
        // Predicated region
        $region85: #{_clam_mb_padded.1} parent=71 // pred_check
          %p2000 = pneg %p301
        $region86: #{_clam_mb_padded.1} parent=71 // pred_check_branch
          %2002 = sbr.rel (%p2000) target = $region88
        $region87: #{_clam_mb_padded.1} parent=71 // pred_region
          %p2003 = scmp.lt.s32.totalorder %s33, 1
          %s2004 = scalar_select %p2003, %s33, 1
          %s2005 = smul.addr %s2004, 2
          %s2006 = smul.addr %s2005, 2
          %s2007 = scalar_lea.vmem %s11, %s2006
        $region88: #{_clam_mb_padded.1} parent=71 // pred_fallthru
          _
      $region72: #{_clam_mb_padded.1} parent=5 // pred_fallthru
        _
    $region6: #{_clam_mb_padded.1} parent=1 // loop_footer
      %s26 = sadd.s32 1, %s22
    $region7: #{_clam_mb_padded.1} parent=1 // loop_footer_branch
      %21 = sbr.rel target = $region3
    $region8: #{_clam_mb_padded.1} parent=1 // loop_exit
      _
    %2008 = vsyncpa [#allocation5], 1
    %s2009 = scalar_lea.sflag [#allocation5], 1
    %2010 = vsyncpa %s2009, 1

// kernel: _clam_mb_padded.1
$region0: #{_clam_mb_padded.1}
  #allocation0 [shape = 'u32[]', space=smem, size = 0x4, offset = 0x4, fixed_abs, tag = 'smem constant byte address 0x4 - core index']
  #allocation1 [shape = 'u32[144,128]{1,0:T(1,128)}', space=vmem, size = 0x12000, scoped, tag = 'internal scratch']
  #allocation2 [shape = 's32[1]{0}', space=sflag, size = 0x4, scoped, tag = 'scoped memory for _clam_mb_padded.1']
  #allocation3 [shape = 's32[1]{0:T(128)S(6)}', space=smem, size = 0x200, scoped, tag = 'prefetched SMEM operand 0']
  %s0 = inlined_call_operand.<no memory space> [shape: s32[1], index: 0, kind: input, shape index: {}]
  %s1 = inlined_call_operand.vmem [shape: bf16[1024,256], index: 1, kind: input, shape index: {}]
  %s2 = inlined_call_operand.vmem [shape: bf16[256,256], index: 2, kind: input, shape index: {}]
  %s3 = inlined_call_operand.vmem [shape: f32[1,256], index: 3, kind: input, shape index: {}]
  %s4 = inlined_call_operand.vmem [shape: bf16[256,256], index: 4, kind: input, shape index: {}]
  %s5 = inlined_call_operand.vmem [shape: f32[1,256], index: 5, kind: input, shape index: {}]
  %s6 = inlined_call_operand.vmem [shape: f32[2,128], index: 6, kind: input, shape index: {}]
  %s7 = inlined_call_operand.vmem [shape: f32[2,1], index: 7, kind: input, shape index: {}]
  %s8 = inlined_call_operand.hbm [shape: f32[2,1024], index: 8, kind: output, shape index: {0}]
  %s9 = inlined_call_operand.vmem [shape: f32[2,2,1], index: 9, kind: output, shape index: {1}]
  %s10 = inlined_call_operand.vmem [shape: f32[2,2,1], index: 10, kind: output, shape index: {2}]
  %s11 = inlined_call_operand.vmem [shape: f32[2,2,256], index: 11, kind: output, shape index: {3}]
  %12 = xla_tuple %s8, %s9, %s10, %s11
  %s13 = sld [smem:[#allocation0]]
  $region89: #{_clam_mb_padded.1} parent=0
    _
  %s15 = ssub.s32 1, %s13
  %s16 = scalar_select 0, %s15, %s13
  %17 = sst [smem:[#allocation3]] %s0
  $region1: #{_clam_mb_padded.1} parent=0
    #allocation4 [shape = 'u8[4096]{0}', space=vmem, size = 0x1000, scoped, tag = 'output window, operand 0']
    #allocation5 [shape = 's32[2]{0}', space=sflag, size = 0x8, scoped, tag = 'scoped memory for _clam_mb_padded.1']
    %18 = vsyncpa [#allocation5], 0
    %s19 = scalar_lea.sflag [#allocation5], 1
    %20 = vsyncpa %s19, 0
    loop: start=0, step=1, limit=6
    $region2: #{_clam_mb_padded.1} parent=1 // loop_pre_header
      _
    $region3: #{_clam_mb_padded.1} parent=1 // loop_header
      %s22 = sphi 0, %s26
      %p23 = scmp.ge.s32.totalorder %s22, 6
      %s29 = sphi 0, %s41
      %s30 = sphi 0, %s37
      %s31 = sphi 0, %s29
      %s32 = sphi 0, %s30
      %s33 = sphi 0, %s31
      %s34 = sphi 0, %s32
      %s48 = sphi 0, %s50
      %s51 = sphi 0, %s48
      %s52 = sphi 0, %s51
      %s68 = sphi 0, %s52
      %s72 = sphi 0, %s72
      %s74 = sphi 0, %s72
      %s75 = sphi 0, %s74
      %s89 = sphi 0, %s75
      %s93 = sphi 0, %s93
      %s95 = sphi 0, %s93
      %s96 = sphi 0, %s95
      %s110 = sphi 0, %s96
      %s114 = sphi 0, %s114
      %s116 = sphi 0, %s114
      %s117 = sphi 0, %s116
      %s131 = sphi 0, %s117
      %s135 = sphi 0, %s135
      %s137 = sphi 0, %s135
      %s138 = sphi 0, %s137
      %s152 = sphi 0, %s138
      %s156 = sphi 0, %s156
      %s158 = sphi 0, %s156
      %s159 = sphi 0, %s158
      %s173 = sphi 0, %s159
      %s177 = sphi 0, %s177
      %s179 = sphi 0, %s177
      %s180 = sphi 0, %s179
      %s194 = sphi 0, %s180
      %s204 = sphi 0, %s206
      %s207 = sphi 0, %s204
      %s208 = sphi 0, %s207
      %s224 = sphi 0, %s208
      %s230 = sphi 0, %s232
      %s233 = sphi 0, %s230
      %s234 = sphi 0, %s233
      %s250 = sphi 0, %s234
      %s256 = sphi 0, %s258
      %s259 = sphi 0, %s256
      %s260 = sphi 0, %s259
      %s276 = sphi 0, %s260
      %s282 = sphi 0, %s284
      %s285 = sphi 0, %s282
      %s286 = sphi 0, %s285
      %s302 = sphi 0, %s286
    $region4: #{_clam_mb_padded.1} parent=1 // loop_header_branch
      %25 = sbr.rel (%p23) target = $region8
    $region5: #{_clam_mb_padded.1} parent=1 // loop_body
      %s27 = ssub.s32 %s22, 1
      %s28 = ssub.s32 %s22, 2
      %s35 = sadd.s32 1, %s30
      %p36 = scmp.ge.s32.totalorder %s35, 2
      %s37 = scalar_select %p36, 0, %s35
      %s38 = sadd.s32 1, %s29
      %s39 = scalar_select %p36, %s38, %s29
      %p40 = scmp.ge.s32.totalorder %s39, 2
      %s41 = scalar_select %p40, 0, %s39
      %s42 = smul.u32 %s29, 2
      %s43 = sadd.s32 %s42, %s30
      %s44 = smul.u32 %s41, 2
      %s45 = sadd.s32 %s44, %s37
      %s46 = ssub.s32 %s43, %s45
      %p47 = scmp.eq.s32.totalorder %s46, 0
      %s49 = sadd.s32 %s48, 1
      %s50 = scalar_select %p47, %s48, %s49
      %p53 = pneg %p47
      %p54 = scmp.eq.s32.totalorder %s22, 3
      %p55 = por %p53, %p54
      %p56 = scmp.ne.s32.totalorder %s48, %s51
      %p57 = scmp.eq.s32.totalorder %s22, 0
      %p58 = por %p56, %p57
      %p59 = scmp.ne.s32.totalorder %s48, %s51
      %p60 = scmp.eq.s32.totalorder %s27, 3
      %p61 = por %p59, %p60
      %p62 = scmp.ne.s32.totalorder %s51, %s52
      %p63 = scmp.eq.s32.totalorder %s27, 0
      %p64 = por %p62, %p63
      %p65 = scmp.ne.s32.totalorder %s51, %s52
      %p66 = scmp.eq.s32.totalorder %s28, 3
      %p67 = por %p65, %p66
      %p69 = scmp.ne.s32.totalorder %s52, %s68
      %p70 = scmp.eq.s32.totalorder %s28, 0
      %p71 = por %p69, %p70
      %s73 = sadd.s32 %s72, 1
      %p76 = scmp.eq.s32.totalorder %s22, 3
      %p77 = scmp.ne.s32.totalorder %s72, %s74
      %p78 = scmp.eq.s32.totalorder %s22, 0
      %p79 = por %p77, %p78
      %p80 = scmp.ne.s32.totalorder %s72, %s74
      %p81 = scmp.eq.s32.totalorder %s27, 3
      %p82 = por %p80, %p81
      %p83 = scmp.ne.s32.totalorder %s74, %s75
      %p84 = scmp.eq.s32.totalorder %s27, 0
      %p85 = por %p83, %p84
      %p86 = scmp.ne.s32.totalorder %s74, %s75
      %p87 = scmp.eq.s32.totalorder %s28, 3
      %p88 = por %p86, %p87
      %p90 = scmp.ne.s32.totalorder %s75, %s89
      %p91 = scmp.eq.s32.totalorder %s28, 0
      %p92 = por %p90, %p91
      %s94 = sadd.s32 %s93, 1
      %p97 = scmp.eq.s32.totalorder %s22, 3
      %p98 = scmp.ne.s32.totalorder %s93, %s95
      %p99 = scmp.eq.s32.totalorder %s22, 0
      %p100 = por %p98, %p99
      %p101 = scmp.ne.s32.totalorder %s93, %s95
      %p102 = scmp.eq.s32.totalorder %s27, 3
      %p103 = por %p101, %p102
      %p104 = scmp.ne.s32.totalorder %s95, %s96
      %p105 = scmp.eq.s32.totalorder %s27, 0
      %p106 = por %p104, %p105
      %p107 = scmp.ne.s32.totalorder %s95, %s96
      %p108 = scmp.eq.s32.totalorder %s28, 3
      %p109 = por %p107, %p108
      %p111 = scmp.ne.s32.totalorder %s96, %s110
      %p112 = scmp.eq.s32.totalorder %s28, 0
      %p113 = por %p111, %p112
      %s115 = sadd.s32 %s114, 1
      %p118 = scmp.eq.s32.totalorder %s22, 3
      %p119 = scmp.ne.s32.totalorder %s114, %s116
      %p120 = scmp.eq.s32.totalorder %s22, 0
      %p121 = por %p119, %p120
      %p122 = scmp.ne.s32.totalorder %s114, %s116
      %p123 = scmp.eq.s32.totalorder %s27, 3
      %p124 = por %p122, %p123
      %p125 = scmp.ne.s32.totalorder %s116, %s117
      %p126 = scmp.eq.s32.totalorder %s27, 0
      %p127 = por %p125, %p126
      %p128 = scmp.ne.s32.totalorder %s116, %s117
      %p129 = scmp.eq.s32.totalorder %s28, 3
      %p130 = por %p128, %p129
      %p132 = scmp.ne.s32.totalorder %s117, %s131
      %p133 = scmp.eq.s32.totalorder %s28, 0
      %p134 = por %p132, %p133
      %s136 = sadd.s32 %s135, 1
      %p139 = scmp.eq.s32.totalorder %s22, 3
      %p140 = scmp.ne.s32.totalorder %s135, %s137
      %p141 = scmp.eq.s32.totalorder %s22, 0
      %p142 = por %p140, %p141
      %p143 = scmp.ne.s32.totalorder %s135, %s137
      %p144 = scmp.eq.s32.totalorder %s27, 3
      %p145 = por %p143, %p144
      %p146 = scmp.ne.s32.totalorder %s137, %s138
      %p147 = scmp.eq.s32.totalorder %s27, 0
      %p148 = por %p146, %p147
      %p149 = scmp.ne.s32.totalorder %s137, %s138
      %p150 = scmp.eq.s32.totalorder %s28, 3
      %p151 = por %p149, %p150
      %p153 = scmp.ne.s32.totalorder %s138, %s152
      %p154 = scmp.eq.s32.totalorder %s28, 0
      %p155 = por %p153, %p154
      %s157 = sadd.s32 %s156, 1
      %p160 = scmp.eq.s32.totalorder %s22, 3
      %p161 = scmp.ne.s32.totalorder %s156, %s158
      %p162 = scmp.eq.s32.totalorder %s22, 0
      %p163 = por %p161, %p162
      %p164 = scmp.ne.s32.totalorder %s156, %s158
      %p165 = scmp.eq.s32.totalorder %s27, 3
      %p166 = por %p164, %p165
      %p167 = scmp.ne.s32.totalorder %s158, %s159
      %p168 = scmp.eq.s32.totalorder %s27, 0
      %p169 = por %p167, %p168
      %p170 = scmp.ne.s32.totalorder %s158, %s159
      %p171 = scmp.eq.s32.totalorder %s28, 3
      %p172 = por %p170, %p171
      %p174 = scmp.ne.s32.totalorder %s159, %s173
      %p175 = scmp.eq.s32.totalorder %s28, 0
      %p176 = por %p174, %p175
      %s178 = sadd.s32 %s177, 1
      %p181 = scmp.eq.s32.totalorder %s22, 3
      %p182 = scmp.ne.s32.totalorder %s177, %s179
      %p183 = scmp.eq.s32.totalorder %s22, 0
      %p184 = por %p182, %p183
      %p185 = scmp.ne.s32.totalorder %s177, %s179
      %p186 = scmp.eq.s32.totalorder %s27, 3
      %p187 = por %p185, %p186
      %p188 = scmp.ne.s32.totalorder %s179, %s180
      %p189 = scmp.eq.s32.totalorder %s27, 0
      %p190 = por %p188, %p189
      %p191 = scmp.ne.s32.totalorder %s179, %s180
      %p192 = scmp.eq.s32.totalorder %s28, 3
      %p193 = por %p191, %p192
      %p195 = scmp.ne.s32.totalorder %s180, %s194
      %p196 = scmp.eq.s32.totalorder %s28, 0
      %p197 = por %p195, %p196
      %s198 = smul.u32 %s29, 2
      %s199 = sadd.s32 %s198, %s30
      %s200 = smul.u32 %s41, 2
      %s201 = sadd.s32 %s200, %s37
      %s202 = ssub.s32 %s199, %s201
      %p203 = scmp.eq.s32.totalorder %s202, 0
      %s205 = sadd.s32 %s204, 1
      %s206 = scalar_select %p203, %s204, %s205
      %p209 = pneg %p203
      %p210 = scmp.eq.s32.totalorder %s22, 3
      %p211 = por %p209, %p210
      %p212 = scmp.ne.s32.totalorder %s204, %s207
      %p213 = scmp.eq.s32.totalorder %s22, 0
      %p214 = por %p212, %p213
      %p215 = scmp.ne.s32.totalorder %s204, %s207
      %p216 = scmp.eq.s32.totalorder %s27, 3
      %p217 = por %p215, %p216
      %p218 = scmp.ne.s32.totalorder %s207, %s208
      %p219 = scmp.eq.s32.totalorder %s27, 0
      %p220 = por %p218, %p219
      %p221 = scmp.ne.s32.totalorder %s207, %s208
      %p222 = scmp.eq.s32.totalorder %s28, 3
      %p223 = por %p221, %p222
      %p225 = scmp.ne.s32.totalorder %s208, %s224
      %p226 = scmp.eq.s32.totalorder %s28, 0
      %p227 = por %p225, %p226
      %s228 = ssub.s32 %s29, %s41
      %p229 = scmp.eq.s32.totalorder %s228, 0
      %s231 = sadd.s32 %s230, 1
      %s232 = scalar_select %p229, %s230, %s231
      %p235 = pneg %p229
      %p236 = scmp.eq.s32.totalorder %s22, 3
      %p237 = por %p235, %p236
      %p238 = scmp.ne.s32.totalorder %s230, %s233
      %p239 = scmp.eq.s32.totalorder %s22, 0
      %p240 = por %p238, %p239
      %p241 = scmp.ne.s32.totalorder %s230, %s233
      %p242 = scmp.eq.s32.totalorder %s27, 3
      %p243 = por %p241, %p242
      %p244 = scmp.ne.s32.totalorder %s233, %s234
      %p245 = scmp.eq.s32.totalorder %s27, 0
      %p246 = por %p244, %p245
      %p247 = scmp.ne.s32.totalorder %s233, %s234
      %p248 = scmp.eq.s32.totalorder %s28, 3
      %p249 = por %p247, %p248
      %p251 = scmp.ne.s32.totalorder %s234, %s250
      %p252 = scmp.eq.s32.totalorder %s28, 0
      %p253 = por %p251, %p252
      %s254 = ssub.s32 %s29, %s41
      %p255 = scmp.eq.s32.totalorder %s254, 0
      %s257 = sadd.s32 %s256, 1
      %s258 = scalar_select %p255, %s256, %s257
      %p261 = pneg %p255
      %p262 = scmp.eq.s32.totalorder %s22, 3
      %p263 = por %p261, %p262
      %p264 = scmp.ne.s32.totalorder %s256, %s259
      %p265 = scmp.eq.s32.totalorder %s22, 0
      %p266 = por %p264, %p265
      %p267 = scmp.ne.s32.totalorder %s256, %s259
      %p268 = scmp.eq.s32.totalorder %s27, 3
      %p269 = por %p267, %p268
      %p270 = scmp.ne.s32.totalorder %s259, %s260
      %p271 = scmp.eq.s32.totalorder %s27, 0
      %p272 = por %p270, %p271
      %p273 = scmp.ne.s32.totalorder %s259, %s260
      %p274 = scmp.eq.s32.totalorder %s28, 3
      %p275 = por %p273, %p274
      %p277 = scmp.ne.s32.totalorder %s260, %s276
      %p278 = scmp.eq.s32.totalorder %s28, 0
      %p279 = por %p277, %p278
      %s280 = ssub.s32 %s29, %s41
      %p281 = scmp.eq.s32.totalorder %s280, 0
      %s283 = sadd.s32 %s282, 1
      %s284 = scalar_select %p281, %s282, %s283
      %p287 = pneg %p281
      %p288 = scmp.eq.s32.totalorder %s22, 3
      %p289 = por %p287, %p288
      %p290 = scmp.ne.s32.totalorder %s282, %s285
      %p291 = scmp.eq.s32.totalorder %s22, 0
      %p292 = por %p290, %p291
      %p293 = scmp.ne.s32.totalorder %s282, %s285
      %p294 = scmp.eq.s32.totalorder %s27, 3
      %p295 = por %p293, %p294
      %p296 = scmp.ne.s32.totalorder %s285, %s286
      %p297 = scmp.eq.s32.totalorder %s27, 0
      %p298 = por %p296, %p297
      %p299 = scmp.ne.s32.totalorder %s285, %s286
      %p300 = scmp.eq.s32.totalorder %s28, 3
      %p301 = por %p299, %p300
      %p303 = scmp.ne.s32.totalorder %s286, %s302
      %p304 = scmp.eq.s32.totalorder %s28, 0
      %p305 = por %p303, %p304
      %p306 = scmp.le.s32.totalorder 1, %s22
      %p307 = scmp.lt.s32.totalorder %s22, 5
      %p308 = pnand %p306, %p307
      %p309 = pneg %p308
      // Predicated region
      $region9: #{_clam_mb_padded.1} parent=5 // pred_check
        _
      $region10: #{_clam_mb_padded.1} parent=5 // pred_check_branch
        %311 = sbr.rel (%p308) target = $region12
      $region11: #{_clam_mb_padded.1} parent=5 // pred_region
        %s312 = ssub.s32 %s22, 1
        // Predicated region
        $region13: #{_clam_mb_padded.1} parent=11 // pred_check
          %p313 = pneg %p85
        $region14: #{_clam_mb_padded.1} parent=11 // pred_check_branch
          %315 = sbr.rel (%p313) target = $region16
        $region15: #{_clam_mb_padded.1} parent=11 // pred_region
          _
        $region16: #{_clam_mb_padded.1} parent=11 // pred_fallthru
          _
        // Predicated region
        $region17: #{_clam_mb_padded.1} parent=11 // pred_check
          %p316 = pneg %p106
        $region18: #{_clam_mb_padded.1} parent=11 // pred_check_branch
          %318 = sbr.rel (%p316) target = $region20
        $region19: #{_clam_mb_padded.1} parent=11 // pred_region
          _
        $region20: #{_clam_mb_padded.1} parent=11 // pred_fallthru
          _
        // Predicated region
        $region21: #{_clam_mb_padded.1} parent=11 // pred_check
          %p319 = pneg %p127
        $region22: #{_clam_mb_padded.1} parent=11 // pred_check_branch
          %321 = sbr.rel (%p319) target = $region24
        $region23: #{_clam_mb_padded.1} parent=11 // pred_region
          _
        $region24: #{_clam_mb_padded.1} parent=11 // pred_fallthru
          _
        // Predicated region
        $region25: #{_clam_mb_padded.1} parent=11 // pred_check
          %p322 = pneg %p148
        $region26: #{_clam_mb_padded.1} parent=11 // pred_check_branch
          %324 = sbr.rel (%p322) target = $region28
        $region27: #{_clam_mb_padded.1} parent=11 // pred_region
          _
        $region28: #{_clam_mb_padded.1} parent=11 // pred_fallthru
          _
        // Predicated region
        $region29: #{_clam_mb_padded.1} parent=11 // pred_check
          %p325 = pneg %p169
        $region30: #{_clam_mb_padded.1} parent=11 // pred_check_branch
          %327 = sbr.rel (%p325) target = $region32
        $region31: #{_clam_mb_padded.1} parent=11 // pred_region
          _
        $region32: #{_clam_mb_padded.1} parent=11 // pred_fallthru
          _
        // Predicated region
        $region33: #{_clam_mb_padded.1} parent=11 // pred_check
          %p328 = pneg %p190
        $region34: #{_clam_mb_padded.1} parent=11 // pred_check_branch
          %330 = sbr.rel (%p328) target = $region36
        $region35: #{_clam_mb_padded.1} parent=11 // pred_region
          _
        $region36: #{_clam_mb_padded.1} parent=11 // pred_fallthru
          _
      $region12: #{_clam_mb_padded.1} parent=5 // pred_fallthru
        _
      %p331 = scmp.lt.s32.totalorder %s22, 4
      // Predicated region
      $region37: #{_clam_mb_padded.1} parent=5 // pred_check
        %p332 = pneg %p331
      $region38: #{_clam_mb_padded.1} parent=5 // pred_check_branch
        %334 = sbr.rel (%p332) target = $region40
      $region39: #{_clam_mb_padded.1} parent=5 // pred_region
        // Predicated region
        $region41: #{_clam_mb_padded.1} parent=39 // pred_check
          %p335 = pneg %p58
        $region42: #{_clam_mb_padded.1} parent=39 // pred_check_branch
          %337 = sbr.rel (%p335) target = $region44
        $region43: #{_clam_mb_padded.1} parent=39 // pred_region
          %s338 = smul.u32 %s29, 2
          %s339 = sadd.s32 %s338, %s30
          %s340 = smul.u32 32, %s339
          %p341 = scmp.lt.s32.totalorder %s340, 127
          %s342 = scalar_select %p341, %s340, 127
          %s343 = smul.addr %s342, 2
          %s344 = smul.addr %s343, 4
          %s345 = scalar_lea.vmem %s1, %s344
          %s346 = smul.u32 %s29, 2
          %s347 = sadd.s32 %s346, %s30
          %s348 = smul.u32 32, %s347
        $region44: #{_clam_mb_padded.1} parent=39 // pred_fallthru
          _
      $region40: #{_clam_mb_padded.1} parent=5 // pred_fallthru
        _
      %p349 = scmp.le.s32.totalorder 1, %s22
      %p350 = scmp.lt.s32.totalorder %s22, 5
      %p351 = pnand %p349, %p350
      %p352 = pneg %p351
      // Predicated region
      $region45: #{_clam_mb_padded.1} parent=5 // pred_check
        _
      $region46: #{_clam_mb_padded.1} parent=5 // pred_check_branch
        %354 = sbr.rel (%p351) target = $region48
      $region47: #{_clam_mb_padded.1} parent=5 // pred_region
        %s355 = ssub.s32 %s22, 1
        %s356 = smul.u32 %s31, 2
        %s357 = sadd.s32 %s356, %s32
        %s358 = smul.u32 32, %s357
        %p359 = scmp.lt.s32.totalorder %s358, 127
        %s360 = scalar_select %p359, %s358, 127
        %s361 = smul.addr %s360, 2
        %s362 = smul.addr %s361, 4
        %s363 = scalar_lea.vmem %s1, %s362
        %p364 = pneg %p64
        %p365 = pneg %p61
        %p366 = pneg %p85
        %p367 = pneg %p82
        %p368 = pneg %p106
        %p369 = pneg %p103
        %p370 = pneg %p127
        %p371 = pneg %p124
        %p372 = pneg %p148
        %p373 = pneg %p145
        %p374 = pneg %p169
        %p375 = pneg %p166
        %p376 = pneg %p190
        %p377 = pneg %p187
        %p378 = pneg %p220
        %p379 = pneg %p217
        %s380 = sand.u32 %s207, 1
        %s381 = scalar_lea.sflag [#allocation5], %s380
        %s382 = sand.u32 %s207, 1
        %s383 = smul.addr %s382, 4
        %s384 = scalar_lea.vmem [#allocation4], %s383
        %p385 = pneg %p246
        %p386 = pneg %p243
        %p387 = scmp.lt.s32.totalorder %s31, 1
        %s388 = scalar_select %p387, %s31, 1
        %s389 = smul.addr %s388, 2
        %s390 = scalar_lea.vmem %s9, %s389
        %p391 = pneg %p272
        %p392 = pneg %p269
        %p393 = scmp.lt.s32.totalorder %s31, 1
        %s394 = scalar_select %p393, %s31, 1
        %s395 = smul.addr %s394, 2
        %s396 = scalar_lea.vmem %s10, %s395
        %p397 = pneg %p298
        %p398 = pneg %p295
        %p399 = scmp.lt.s32.totalorder %s31, 1
        %s400 = scalar_select %p399, %s31, 1
        %s401 = smul.addr %s400, 2
        %s402 = smul.addr %s401, 2
        %s403 = scalar_lea.vmem %s11, %s402
        %s404 = smul.u32 %s31, 2
        %s405 = sadd.s32 %s404, %s32
        %s406 = smul.u32 32, %s405
        %p407 = scmp.lt.s32.totalorder %s406, 127
        %s408 = scalar_select %p407, %s406, 127
        %s409 = smul.addr %s408, 2
        %s410 = smul.addr %s409, 4
        %s411 = scalar_lea.vmem %s1, %s410
        %s412 = smul.u32 %s31, 2
        %s413 = sadd.s32 %s412, %s32
        %s414 = smul.u32 32, %s413
        %s415 = smul.u32 %s31, 2
        %s416 = sadd.s32 %s415, %s32
        %s417 = smul.u32 2, %s416
        %p418 = scmp.lt.s32.totalorder %s31, 1
        %s419 = scalar_select %p418, %s31, 1
        %s420 = smul.addr %s419, 2
        %s421 = scalar_lea.vmem %s9, %s420
        %p422 = scmp.lt.s32.totalorder %s31, 1
        %s423 = scalar_select %p422, %s31, 1
        %s424 = smul.addr %s423, 2
        %s425 = scalar_lea.vmem %s10, %s424
        %p426 = scmp.lt.s32.totalorder %s31, 1
        %s427 = scalar_select %p426, %s31, 1
        %s428 = smul.addr %s427, 2
        %s429 = smul.addr %s428, 2
        %s430 = scalar_lea.vmem %s11, %s429
        %s431 = sld [smem:[#allocation3]]
        %p432 = scmp.eq.s32.totalorder %s32, 0
        // Predicated region
        $region49: #{_clam_mb_padded.1} parent=47 // pred_check
          %p433 = pneg %p432
        $region50: #{_clam_mb_padded.1} parent=47 // pred_check_branch
          %435 = sbr.rel (%p433) target = $region52
        $region51: #{_clam_mb_padded.1} parent=47 // pred_region
          %vm436 = vcmask 1024
          %437 = vst.msk [vmem:[%s421] sm:$0x3] %vm436, -1e+30
          %438 = vst.msk [vmem:[%s425] sm:$0x3] %vm436, 0.0
          %439 = vst [vmem:[%s430] sm:$0xf] 0.0
        $region52: #{_clam_mb_padded.1} parent=47 // pred_fallthru
          _
        %v440 = vld [vmem:[%s411] sm:$0xff]
        %v441 = vld [vmem:[%s411 + $0x8] sm:$0xff]
        %v442 = vld [vmem:[%s411 + $0x10] sm:$0xff]
        %v443 = vld [vmem:[%s411 + $0x18] sm:$0xff]
        %v444 = vld [vmem:[%s411 + $0x20] sm:$0xff]
        %v445 = vld [vmem:[%s411 + $0x28] sm:$0xff]
        %v446 = vld [vmem:[%s411 + $0x30] sm:$0xff]
        %v447 = vld [vmem:[%s411 + $0x38] sm:$0xff]
        %v448 = vld [vmem:[%s411 + $0x40] sm:$0xff]
        %v449 = vld [vmem:[%s411 + $0x48] sm:$0xff]
        %v450 = vld [vmem:[%s411 + $0x50] sm:$0xff]
        %v451 = vld [vmem:[%s411 + $0x58] sm:$0xff]
        %v452 = vld [vmem:[%s411 + $0x60] sm:$0xff]
        %v453 = vld [vmem:[%s411 + $0x68] sm:$0xff]
        %v454 = vld [vmem:[%s411 + $0x70] sm:$0xff]
        %v455 = vld [vmem:[%s411 + $0x78] sm:$0xff]
        %v456 = vld [vmem:[%s411 + $0x80] sm:$0xff]
        %v457 = vld [vmem:[%s411 + $0x88] sm:$0xff]
        %v458 = vld [vmem:[%s411 + $0x90] sm:$0xff]
        %v459 = vld [vmem:[%s411 + $0x98] sm:$0xff]
        %v460 = vld [vmem:[%s411 + $0xa0] sm:$0xff]
        %v461 = vld [vmem:[%s411 + $0xa8] sm:$0xff]
        %v462 = vld [vmem:[%s411 + $0xb0] sm:$0xff]
        %v463 = vld [vmem:[%s411 + $0xb8] sm:$0xff]
        %v464 = vld [vmem:[%s411 + $0xc0] sm:$0xff]
        %v465 = vld [vmem:[%s411 + $0xc8] sm:$0xff]
        %v466 = vld [vmem:[%s411 + $0xd0] sm:$0xff]
        %v467 = vld [vmem:[%s411 + $0xd8] sm:$0xff]
        %v468 = vld [vmem:[%s411 + $0xe0] sm:$0xff]
        %v469 = vld [vmem:[%s411 + $0xe8] sm:$0xff]
        %v470 = vld [vmem:[%s411 + $0xf0] sm:$0xff]
        %v471 = vld [vmem:[%s411 + $0xf8] sm:$0xff]
        %v472 = vld [vmem:[%s2] sm:$0xff]
        %v473 = vld [vmem:[%s2 + $0x8] sm:$0xff]
        %v474 = vld [vmem:[%s2 + $0x10] sm:$0xff]
        %v475 = vld [vmem:[%s2 + $0x18] sm:$0xff]
        %v476 = vld [vmem:[%s2 + $0x20] sm:$0xff]
        %v477 = vld [vmem:[%s2 + $0x28] sm:$0xff]
        %v478 = vld [vmem:[%s2 + $0x30] sm:$0xff]
        %v479 = vld [vmem:[%s2 + $0x38] sm:$0xff]
        %v480 = vld [vmem:[%s2 + $0x40] sm:$0xff]
        %v481 = vld [vmem:[%s2 + $0x48] sm:$0xff]
        %v482 = vld [vmem:[%s2 + $0x50] sm:$0xff]
        %v483 = vld [vmem:[%s2 + $0x58] sm:$0xff]
        %v484 = vld [vmem:[%s2 + $0x60] sm:$0xff]
        %v485 = vld [vmem:[%s2 + $0x68] sm:$0xff]
        %v486 = vld [vmem:[%s2 + $0x70] sm:$0xff]
        %v487 = vld [vmem:[%s2 + $0x78] sm:$0xff]
        %v488 = vld [vmem:[%s2 + $0x80] sm:$0xff]
        %v489 = vld [vmem:[%s2 + $0x88] sm:$0xff]
        %v490 = vld [vmem:[%s2 + $0x90] sm:$0xff]
        %v491 = vld [vmem:[%s2 + $0x98] sm:$0xff]
        %v492 = vld [vmem:[%s2 + $0xa0] sm:$0xff]
        %v493 = vld [vmem:[%s2 + $0xa8] sm:$0xff]
        %v494 = vld [vmem:[%s2 + $0xb0] sm:$0xff]
        %v495 = vld [vmem:[%s2 + $0xb8] sm:$0xff]
        %v496 = vld [vmem:[%s2 + $0xc0] sm:$0xff]
        %v497 = vld [vmem:[%s2 + $0xc8] sm:$0xff]
        %v498 = vld [vmem:[%s2 + $0xd0] sm:$0xff]
        %v499 = vld [vmem:[%s2 + $0xd8] sm:$0xff]
        %v500 = vld [vmem:[%s2 + $0xe0] sm:$0xff]
        %v501 = vld [vmem:[%s2 + $0xe8] sm:$0xff]
        %v502 = vld [vmem:[%s2 + $0xf0] sm:$0xff]
        %v503 = vld [vmem:[%s2 + $0xf8] sm:$0xff]
        %v504 = vld [vmem:[%s3] sm:$0x3]
        %v506 = vlaneseq
        %v507 = vshrl.u32 %v506, 7
        %v508 = vsub.s32 0, %v507
        %v509 = vrot.slane %v504, %v508
        %v510 = vlaneseq
        %v511 = vshrl.u32 %v510, 7
        %v512 = vsub.s32 1, %v511
        %v513 = vrot.slane %v504, %v512
        %v548 = vunpack.c.l.b16 %v440
        %v549 = vunpack.c.h.b16 %v440
        %v550 = vunpack.c.l.b16 %v441
        %v551 = vunpack.c.h.b16 %v441
        %v552 = vunpack.c.l.b16 %v442
        %v553 = vunpack.c.h.b16 %v442
        %v554 = vunpack.c.l.b16 %v443
        %v555 = vunpack.c.h.b16 %v443
        %v556 = vunpack.c.l.b16 %v444
        %v557 = vunpack.c.h.b16 %v444
        %v558 = vunpack.c.l.b16 %v445
        %v559 = vunpack.c.h.b16 %v445
        %v560 = vunpack.c.l.b16 %v446
        %v561 = vunpack.c.h.b16 %v446
        %v562 = vunpack.c.l.b16 %v447
        %v563 = vunpack.c.h.b16 %v447
        %v564 = vunpack.c.l.b16 %v448
        %v565 = vunpack.c.h.b16 %v448
        %v566 = vunpack.c.l.b16 %v449
        %v567 = vunpack.c.h.b16 %v449
        %v568 = vunpack.c.l.b16 %v450
        %v569 = vunpack.c.h.b16 %v450
        %v570 = vunpack.c.l.b16 %v451
        %v571 = vunpack.c.h.b16 %v451
        %v572 = vunpack.c.l.b16 %v452
        %v573 = vunpack.c.h.b16 %v452
        %v574 = vunpack.c.l.b16 %v453
        %v575 = vunpack.c.h.b16 %v453
        %v576 = vunpack.c.l.b16 %v454
        %v577 = vunpack.c.h.b16 %v454
        %v578 = vunpack.c.l.b16 %v455
        %v579 = vunpack.c.h.b16 %v455
        %v580 = vunpack.c.l.b16 %v456
        %v581 = vunpack.c.h.b16 %v456
        %v582 = vunpack.c.l.b16 %v457
        %v583 = vunpack.c.h.b16 %v457
        %v584 = vunpack.c.l.b16 %v458
        %v585 = vunpack.c.h.b16 %v458
        %v586 = vunpack.c.l.b16 %v459
        %v587 = vunpack.c.h.b16 %v459
        %v588 = vunpack.c.l.b16 %v460
        %v589 = vunpack.c.h.b16 %v460
        %v590 = vunpack.c.l.b16 %v461
        %v591 = vunpack.c.h.b16 %v461
        %v592 = vunpack.c.l.b16 %v462
        %v593 = vunpack.c.h.b16 %v462
        %v594 = vunpack.c.l.b16 %v463
        %v595 = vunpack.c.h.b16 %v463
        %v596 = vunpack.c.l.b16 %v464
        %v597 = vunpack.c.h.b16 %v464
        %v598 = vunpack.c.l.b16 %v465
        %v599 = vunpack.c.h.b16 %v465
        %v600 = vunpack.c.l.b16 %v466
        %v601 = vunpack.c.h.b16 %v466
        %v602 = vunpack.c.l.b16 %v467
        %v603 = vunpack.c.h.b16 %v467
        %v604 = vunpack.c.l.b16 %v468
        %v605 = vunpack.c.h.b16 %v468
        %v606 = vunpack.c.l.b16 %v469
        %v607 = vunpack.c.h.b16 %v469
        %v608 = vunpack.c.l.b16 %v470
        %v609 = vunpack.c.h.b16 %v470
        %v610 = vunpack.c.l.b16 %v471
        %v611 = vunpack.c.h.b16 %v471
        %v612 = vpack.c.b16 %v550, %v548
        %v613 = vpack.c.b16 %v551, %v549
        %v614 = vpack.c.b16 %v554, %v552
        %v615 = vpack.c.b16 %v555, %v553
        %v616 = vpack.c.b16 %v558, %v556
        %v617 = vpack.c.b16 %v559, %v557
        %v618 = vpack.c.b16 %v562, %v560
        %v619 = vpack.c.b16 %v563, %v561
        %v620 = vpack.c.b16 %v566, %v564
        %v621 = vpack.c.b16 %v567, %v565
        %v622 = vpack.c.b16 %v570, %v568
        %v623 = vpack.c.b16 %v571, %v569
        %v624 = vpack.c.b16 %v574, %v572
        %v625 = vpack.c.b16 %v575, %v573
        %v626 = vpack.c.b16 %v578, %v576
        %v627 = vpack.c.b16 %v579, %v577
        %v628 = vpack.c.b16 %v582, %v580
        %v629 = vpack.c.b16 %v583, %v581
        %v630 = vpack.c.b16 %v586, %v584
        %v631 = vpack.c.b16 %v587, %v585
        %v632 = vpack.c.b16 %v590, %v588
        %v633 = vpack.c.b16 %v591, %v589
        %v634 = vpack.c.b16 %v594, %v592
        %v635 = vpack.c.b16 %v595, %v593
        %v636 = vpack.c.b16 %v598, %v596
        %v637 = vpack.c.b16 %v599, %v597
        %v638 = vpack.c.b16 %v602, %v600
        %v639 = vpack.c.b16 %v603, %v601
        %v640 = vpack.c.b16 %v606, %v604
        %v641 = vpack.c.b16 %v607, %v605
        %v642 = vpack.c.b16 %v610, %v608
        %v643 = vpack.c.b16 %v611, %v609
        %v708 = vunpack.c.l.b16 %v472
        %v709 = vunpack.c.h.b16 %v472
        %v710 = vunpack.c.l.b16 %v473
        %v711 = vunpack.c.h.b16 %v473
        %v712 = vunpack.c.l.b16 %v474
        %v713 = vunpack.c.h.b16 %v474
        %v714 = vunpack.c.l.b16 %v475
        %v715 = vunpack.c.h.b16 %v475
        %v716 = vunpack.c.l.b16 %v476
        %v717 = vunpack.c.h.b16 %v476
        %v718 = vunpack.c.l.b16 %v477
        %v719 = vunpack.c.h.b16 %v477
        %v720 = vunpack.c.l.b16 %v478
        %v721 = vunpack.c.h.b16 %v478
        %v722 = vunpack.c.l.b16 %v479
        %v723 = vunpack.c.h.b16 %v479
        %v724 = vunpack.c.l.b16 %v480
        %v725 = vunpack.c.h.b16 %v480
        %v726 = vunpack.c.l.b16 %v481
        %v727 = vunpack.c.h.b16 %v481
        %v728 = vunpack.c.l.b16 %v482
        %v729 = vunpack.c.h.b16 %v482
        %v730 = vunpack.c.l.b16 %v483
        %v731 = vunpack.c.h.b16 %v483
        %v732 = vunpack.c.l.b16 %v484
        %v733 = vunpack.c.h.b16 %v484
        %v734 = vunpack.c.l.b16 %v485
        %v735 = vunpack.c.h.b16 %v485
        %v736 = vunpack.c.l.b16 %v486
        %v737 = vunpack.c.h.b16 %v486
        %v738 = vunpack.c.l.b16 %v487
        %v739 = vunpack.c.h.b16 %v487
        %v740 = vunpack.c.l.b16 %v488
        %v741 = vunpack.c.h.b16 %v488
        %v742 = vunpack.c.l.b16 %v489
        %v743 = vunpack.c.h.b16 %v489
        %v744 = vunpack.c.l.b16 %v490
        %v745 = vunpack.c.h.b16 %v490
        %v746 = vunpack.c.l.b16 %v491
        %v747 = vunpack.c.h.b16 %v491
        %v748 = vunpack.c.l.b16 %v492
        %v749 = vunpack.c.h.b16 %v492
        %v750 = vunpack.c.l.b16 %v493
        %v751 = vunpack.c.h.b16 %v493
        %v752 = vunpack.c.l.b16 %v494
        %v753 = vunpack.c.h.b16 %v494
        %v754 = vunpack.c.l.b16 %v495
        %v755 = vunpack.c.h.b16 %v495
        %v756 = vunpack.c.l.b16 %v496
        %v757 = vunpack.c.h.b16 %v496
        %v758 = vunpack.c.l.b16 %v497
        %v759 = vunpack.c.h.b16 %v497
        %v760 = vunpack.c.l.b16 %v498
        %v761 = vunpack.c.h.b16 %v498
        %v762 = vunpack.c.l.b16 %v499
        %v763 = vunpack.c.h.b16 %v499
        %v764 = vunpack.c.l.b16 %v500
        %v765 = vunpack.c.h.b16 %v500
        %v766 = vunpack.c.l.b16 %v501
        %v767 = vunpack.c.h.b16 %v501
        %v768 = vunpack.c.l.b16 %v502
        %v769 = vunpack.c.h.b16 %v502
        %v770 = vunpack.c.l.b16 %v503
        %v771 = vunpack.c.h.b16 %v503
        %v772 = vpack.c.b16 %v710, %v708
        %v773 = vpack.c.b16 %v711, %v709
        %v774 = vpack.c.b16 %v714, %v712
        %v775 = vpack.c.b16 %v715, %v713
        %v776 = vpack.c.b16 %v718, %v716
        %v777 = vpack.c.b16 %v719, %v717
        %v778 = vpack.c.b16 %v722, %v720
        %v779 = vpack.c.b16 %v723, %v721
        %v780 = vpack.c.b16 %v726, %v724
        %v781 = vpack.c.b16 %v727, %v725
        %v782 = vpack.c.b16 %v730, %v728
        %v783 = vpack.c.b16 %v731, %v729
        %v784 = vpack.c.b16 %v734, %v732
        %v785 = vpack.c.b16 %v735, %v733
        %v786 = vpack.c.b16 %v738, %v736
        %v787 = vpack.c.b16 %v739, %v737
        %v788 = vpack.c.b16 %v742, %v740
        %v789 = vpack.c.b16 %v743, %v741
        %v790 = vpack.c.b16 %v746, %v744
        %v791 = vpack.c.b16 %v747, %v745
        %v792 = vpack.c.b16 %v750, %v748
        %v793 = vpack.c.b16 %v751, %v749
        %v794 = vpack.c.b16 %v754, %v752
        %v795 = vpack.c.b16 %v755, %v753
        %v796 = vpack.c.b16 %v758, %v756
        %v797 = vpack.c.b16 %v759, %v757
        %v798 = vpack.c.b16 %v762, %v760
        %v799 = vpack.c.b16 %v763, %v761
        %v800 = vpack.c.b16 %v766, %v764
        %v801 = vpack.c.b16 %v767, %v765
        %v802 = vpack.c.b16 %v770, %v768
        %v803 = vpack.c.b16 %v771, %v769
        %836 = vmatprep.subr.bf16.mxu0 %v787
        %837 = vmatpush1.bf16.msra.mxu0 %v786
        %838 = vmatprep.subr.bf16.mxu0 %v785
        %839 = vmatpush1.bf16.msra.mxu0 %v784
        %840 = vmatprep.subr.bf16.mxu0 %v783
        %841 = vmatpush1.bf16.msra.mxu0 %v782
        %842 = vmatprep.subr.bf16.mxu0 %v781
        %843 = vmatpush1.bf16.msra.mxu0 %v780
        %844 = vmatprep.subr.bf16.mxu0 %v779
        %845 = vmatpush1.bf16.msra.mxu0 %v778
        %846 = vmatprep.subr.bf16.mxu0 %v777
        %847 = vmatpush1.bf16.msra.mxu0 %v776
        %848 = vmatprep.subr.bf16.mxu0 %v775
        %849 = vmatpush1.bf16.msra.mxu0 %v774
        %850 = vmatprep.subr.bf16.mxu0 %v773
        %851 = vmatpush1.bf16.msra.mxu0 %v772
        %852 = vmatprep.subr.bf16.mxu0 %v803
        %853 = vmatpush2.bf16.msra.mxu0 %v802
        %854 = vmatprep.subr.bf16.mxu0 %v801
        %855 = vmatpush2.bf16.msra.mxu0 %v800
        %856 = vmatprep.subr.bf16.mxu0 %v799
        %857 = vmatpush2.bf16.msra.mxu0 %v798
        %858 = vmatprep.subr.bf16.mxu0 %v797
        %859 = vmatpush2.bf16.msra.mxu0 %v796
        %860 = vmatprep.subr.bf16.mxu0 %v795
        %861 = vmatpush2.bf16.msra.mxu0 %v794
        %862 = vmatprep.subr.bf16.mxu0 %v793
        %863 = vmatpush2.bf16.msra.mxu0 %v792
        %864 = vmatprep.subr.bf16.mxu0 %v791
        %865 = vmatpush2.bf16.msra.mxu0 %v790
        %866 = vmatprep.subr.bf16.mxu0 %v789
        %867 = vmatpush2.bf16.msra.mxu0 %v788
        %868 = vmatprep.mubr.bf16.mxu0 %v613
        %869 = vmatmul.mubr.bf16.gmra.mxu0 %v612
        %v870 = vpop.f32.mrf.mxu0
        %v871 = vadd.f32 %v509, %v870
        %v872 = vpop.f32.mrf.mxu0
        %v873 = vadd.f32 %v513, %v872
        %v874 = vpop.f32.mrf.mxu0
        %v875 = vadd.f32 %v509, %v874
        %v876 = vpop.f32.mrf.mxu0
        %v877 = vadd.f32 %v513, %v876
        %878 = vmatprep.mubr.bf16.mxu0 %v615
        %879 = vmatmul.mubr.bf16.gmra.mxu0 %v614
        %v880 = vpop.f32.mrf.mxu0
        %v881 = vadd.f32 %v509, %v880
        %v882 = vpop.f32.mrf.mxu0
        %v883 = vadd.f32 %v513, %v882
        %v884 = vpop.f32.mrf.mxu0
        %v885 = vadd.f32 %v509, %v884
        %v886 = vpop.f32.mrf.mxu0
        %v887 = vadd.f32 %v513, %v886
        %888 = vmatprep.mubr.bf16.mxu0 %v617
        %889 = vmatmul.mubr.bf16.gmra.mxu0 %v616
        %v890 = vpop.f32.mrf.mxu0
        %v891 = vadd.f32 %v509, %v890
        %v892 = vpop.f32.mrf.mxu0
        %v893 = vadd.f32 %v513, %v892
        %v894 = vpop.f32.mrf.mxu0
        %v895 = vadd.f32 %v509, %v894
        %v896 = vpop.f32.mrf.mxu0
        %v897 = vadd.f32 %v513, %v896
        %898 = vmatprep.mubr.bf16.mxu0 %v619
        %899 = vmatmul.mubr.bf16.gmra.mxu0 %v618
        %v900 = vpop.f32.mrf.mxu0
        %v901 = vadd.f32 %v509, %v900
        %v902 = vpop.f32.mrf.mxu0
        %v903 = vadd.f32 %v513, %v902
        %v904 = vpop.f32.mrf.mxu0
        %v905 = vadd.f32 %v509, %v904
        %v906 = vpop.f32.mrf.mxu0
        %v907 = vadd.f32 %v513, %v906
        %908 = vmatprep.mubr.bf16.mxu0 %v621
        %909 = vmatmul.mubr.bf16.gmra.mxu0 %v620
        %v910 = vpop.f32.mrf.mxu0
        %v911 = vadd.f32 %v509, %v910
        %v912 = vpop.f32.mrf.mxu0
        %v913 = vadd.f32 %v513, %v912
        %v914 = vpop.f32.mrf.mxu0
        %v915 = vadd.f32 %v509, %v914
        %v916 = vpop.f32.mrf.mxu0
        %v917 = vadd.f32 %v513, %v916
        %918 = vmatprep.mubr.bf16.mxu0 %v623
        %919 = vmatmul.mubr.bf16.gmra.mxu0 %v622
        %v920 = vpop.f32.mrf.mxu0
        %v921 = vadd.f32 %v509, %v920
        %v922 = vpop.f32.mrf.mxu0
        %v923 = vadd.f32 %v513, %v922
        %v924 = vpop.f32.mrf.mxu0
        %v925 = vadd.f32 %v509, %v924
        %v926 = vpop.f32.mrf.mxu0
        %v927 = vadd.f32 %v513, %v926
        %928 = vmatprep.mubr.bf16.mxu0 %v625
        %929 = vmatmul.mubr.bf16.gmra.mxu0 %v624
        %v930 = vpop.f32.mrf.mxu0
        %v931 = vadd.f32 %v509, %v930
        %v932 = vpop.f32.mrf.mxu0
        %v933 = vadd.f32 %v513, %v932
        %v934 = vpop.f32.mrf.mxu0
        %v935 = vadd.f32 %v509, %v934
        %v936 = vpop.f32.mrf.mxu0
        %v937 = vadd.f32 %v513, %v936
        %938 = vmatprep.mubr.bf16.mxu0 %v627
        %939 = vmatmul.mubr.bf16.gmra.mxu0 %v626
        %v940 = vpop.f32.mrf.mxu0
        %v941 = vadd.f32 %v509, %v940
        %v942 = vpop.f32.mrf.mxu0
        %v943 = vadd.f32 %v513, %v942
        %v944 = vpop.f32.mrf.mxu0
        %v945 = vadd.f32 %v509, %v944
        %v946 = vpop.f32.mrf.mxu0
        %v947 = vadd.f32 %v513, %v946
        %948 = vmatprep.mubr.bf16.mxu0 %v629
        %949 = vmatmul.mubr.bf16.gmra.mxu0 %v628
        %v950 = vpop.f32.mrf.mxu0
        %v951 = vadd.f32 %v509, %v950
        %v952 = vpop.f32.mrf.mxu0
        %v953 = vadd.f32 %v513, %v952
        %v954 = vpop.f32.mrf.mxu0
        %v955 = vadd.f32 %v509, %v954
        %v956 = vpop.f32.mrf.mxu0
        %v957 = vadd.f32 %v513, %v956
        %958 = vmatprep.mubr.bf16.mxu0 %v631
        %959 = vmatmul.mubr.bf16.gmra.mxu0 %v630
        %v960 = vpop.f32.mrf.mxu0
        %v961 = vadd.f32 %v509, %v960
        %v962 = vpop.f32.mrf.mxu0
        %v963 = vadd.f32 %v513, %v962
        %v964 = vpop.f32.mrf.mxu0
        %v965 = vadd.f32 %v509, %v964
        %v966 = vpop.f32.mrf.mxu0
        %v967 = vadd.f32 %v513, %v966
        %968 = vmatprep.mubr.bf16.mxu0 %v633
        %969 = vmatmul.mubr.bf16.gmra.mxu0 %v632
        %v970 = vpop.f32.mrf.mxu0
        %v971 = vadd.f32 %v509, %v970
        %v972 = vpop.f32.mrf.mxu0
        %v973 = vadd.f32 %v513, %v972
        %v974 = vpop.f32.mrf.mxu0
        %v975 = vadd.f32 %v509, %v974
        %v976 = vpop.f32.mrf.mxu0
        %v977 = vadd.f32 %v513, %v976
        %978 = vmatprep.mubr.bf16.mxu0 %v635
        %979 = vmatmul.mubr.bf16.gmra.mxu0 %v634
        %v980 = vpop.f32.mrf.mxu0
        %v981 = vadd.f32 %v509, %v980
        %v982 = vpop.f32.mrf.mxu0
        %v983 = vadd.f32 %v513, %v982
        %v984 = vpop.f32.mrf.mxu0
        %v985 = vadd.f32 %v509, %v984
        %v986 = vpop.f32.mrf.mxu0
        %v987 = vadd.f32 %v513, %v986
        %988 = vmatprep.mubr.bf16.mxu0 %v637
        %989 = vmatmul.mubr.bf16.gmra.mxu0 %v636
        %v990 = vpop.f32.mrf.mxu0
        %v991 = vadd.f32 %v509, %v990
        %v992 = vpop.f32.mrf.mxu0
        %v993 = vadd.f32 %v513, %v992
        %v994 = vpop.f32.mrf.mxu0
        %v995 = vadd.f32 %v509, %v994
        %v996 = vpop.f32.mrf.mxu0
        %v997 = vadd.f32 %v513, %v996
        %998 = vmatprep.mubr.bf16.mxu0 %v639
        %999 = vmatmul.mubr.bf16.gmra.mxu0 %v638
        %v1000 = vpop.f32.mrf.mxu0
        %v1001 = vadd.f32 %v509, %v1000
        %v1002 = vpop.f32.mrf.mxu0
        %v1003 = vadd.f32 %v513, %v1002
        %v1004 = vpop.f32.mrf.mxu0
        %v1005 = vadd.f32 %v509, %v1004
        %v1006 = vpop.f32.mrf.mxu0
        %v1007 = vadd.f32 %v513, %v1006
        %1008 = vmatprep.mubr.bf16.mxu0 %v641
        %1009 = vmatmul.mubr.bf16.gmra.mxu0 %v640
        %v1010 = vpop.f32.mrf.mxu0
        %v1011 = vadd.f32 %v509, %v1010
        %v1012 = vpop.f32.mrf.mxu0
        %v1013 = vadd.f32 %v513, %v1012
        %v1014 = vpop.f32.mrf.mxu0
        %v1015 = vadd.f32 %v509, %v1014
        %v1016 = vpop.f32.mrf.mxu0
        %v1017 = vadd.f32 %v513, %v1016
        %1018 = vmatprep.mubr.bf16.mxu0 %v643
        %1019 = vmatmul.mubr.bf16.gmra.mxu0 %v642
        %v1020 = vpop.f32.mrf.mxu0
        %v1021 = vadd.f32 %v509, %v1020
        %v1022 = vpop.f32.mrf.mxu0
        %v1023 = vadd.f32 %v513, %v1022
        %v1024 = vpop.f32.mrf.mxu0
        %v1025 = vadd.f32 %v509, %v1024
        %v1026 = vpop.f32.mrf.mxu0
        %v1027 = vadd.f32 %v513, %v1026
        %1028 = vdwg.mxu0
        %v1029 = vmax.f32 %v871, 0.0
        %v1030 = vmax.f32 %v873, 0.0
        %v1031 = vmax.f32 %v875, 0.0
        %v1032 = vmax.f32 %v877, 0.0
        %v1033 = vmax.f32 %v881, 0.0
        %v1034 = vmax.f32 %v883, 0.0
        %v1035 = vmax.f32 %v885, 0.0
        %v1036 = vmax.f32 %v887, 0.0
        %v1037 = vmax.f32 %v891, 0.0
        %v1038 = vmax.f32 %v893, 0.0
        %v1039 = vmax.f32 %v895, 0.0
        %v1040 = vmax.f32 %v897, 0.0
        %v1041 = vmax.f32 %v901, 0.0
        %v1042 = vmax.f32 %v903, 0.0
        %v1043 = vmax.f32 %v905, 0.0
        %v1044 = vmax.f32 %v907, 0.0
        %v1045 = vmax.f32 %v911, 0.0
        %v1046 = vmax.f32 %v913, 0.0
        %v1047 = vmax.f32 %v915, 0.0
        %v1048 = vmax.f32 %v917, 0.0
        %v1049 = vmax.f32 %v921, 0.0
        %v1050 = vmax.f32 %v923, 0.0
        %v1051 = vmax.f32 %v925, 0.0
        %v1052 = vmax.f32 %v927, 0.0
        %v1053 = vmax.f32 %v931, 0.0
        %v1054 = vmax.f32 %v933, 0.0
        %v1055 = vmax.f32 %v935, 0.0
        %v1056 = vmax.f32 %v937, 0.0
        %v1057 = vmax.f32 %v941, 0.0
        %v1058 = vmax.f32 %v943, 0.0
        %v1059 = vmax.f32 %v945, 0.0
        %v1060 = vmax.f32 %v947, 0.0
        %v1061 = vmax.f32 %v951, 0.0
        %v1062 = vmax.f32 %v953, 0.0
        %v1063 = vmax.f32 %v955, 0.0
        %v1064 = vmax.f32 %v957, 0.0
        %v1065 = vmax.f32 %v961, 0.0
        %v1066 = vmax.f32 %v963, 0.0
        %v1067 = vmax.f32 %v965, 0.0
        %v1068 = vmax.f32 %v967, 0.0
        %v1069 = vmax.f32 %v971, 0.0
        %v1070 = vmax.f32 %v973, 0.0
        %v1071 = vmax.f32 %v975, 0.0
        %v1072 = vmax.f32 %v977, 0.0
        %v1073 = vmax.f32 %v981, 0.0
        %v1074 = vmax.f32 %v983, 0.0
        %v1075 = vmax.f32 %v985, 0.0
        %v1076 = vmax.f32 %v987, 0.0
        %v1077 = vmax.f32 %v991, 0.0
        %v1078 = vmax.f32 %v993, 0.0
        %v1079 = vmax.f32 %v995, 0.0
        %v1080 = vmax.f32 %v997, 0.0
        %v1081 = vmax.f32 %v1001, 0.0
        %v1082 = vmax.f32 %v1003, 0.0
        %v1083 = vmax.f32 %v1005, 0.0
        %v1084 = vmax.f32 %v1007, 0.0
        %v1085 = vmax.f32 %v1011, 0.0
        %v1086 = vmax.f32 %v1013, 0.0
        %v1087 = vmax.f32 %v1015, 0.0
        %v1088 = vmax.f32 %v1017, 0.0
        %v1089 = vmax.f32 %v1021, 0.0
        %v1090 = vmax.f32 %v1023, 0.0
        %v1091 = vmax.f32 %v1025, 0.0
        %v1092 = vmax.f32 %v1027, 0.0
        %v1093 = vpack.c.bf16 %v1031, %v1029
        %v1094 = vpack.c.bf16 %v1032, %v1030
        %v1095 = vpack.c.bf16 %v1035, %v1033
        %v1096 = vpack.c.bf16 %v1036, %v1034
        %v1097 = vpack.c.bf16 %v1039, %v1037
        %v1098 = vpack.c.bf16 %v1040, %v1038
        %v1099 = vpack.c.bf16 %v1043, %v1041
        %v1100 = vpack.c.bf16 %v1044, %v1042
        %v1101 = vpack.c.bf16 %v1047, %v1045
        %v1102 = vpack.c.bf16 %v1048, %v1046
        %v1103 = vpack.c.bf16 %v1051, %v1049
        %v1104 = vpack.c.bf16 %v1052, %v1050
        %v1105 = vpack.c.bf16 %v1055, %v1053
        %v1106 = vpack.c.bf16 %v1056, %v1054
        %v1107 = vpack.c.bf16 %v1059, %v1057
        %v1108 = vpack.c.bf16 %v1060, %v1058
        %v1109 = vpack.c.bf16 %v1063, %v1061
        %v1110 = vpack.c.bf16 %v1064, %v1062
        %v1111 = vpack.c.bf16 %v1067, %v1065
        %v1112 = vpack.c.bf16 %v1068, %v1066
        %v1113 = vpack.c.bf16 %v1071, %v1069
        %v1114 = vpack.c.bf16 %v1072, %v1070
        %v1115 = vpack.c.bf16 %v1075, %v1073
        %v1116 = vpack.c.bf16 %v1076, %v1074
        %v1117 = vpack.c.bf16 %v1079, %v1077
        %v1118 = vpack.c.bf16 %v1080, %v1078
        %v1119 = vpack.c.bf16 %v1083, %v1081
        %v1120 = vpack.c.bf16 %v1084, %v1082
        %v1121 = vpack.c.bf16 %v1087, %v1085
        %v1122 = vpack.c.bf16 %v1088, %v1086
        %v1123 = vpack.c.bf16 %v1091, %v1089
        %v1124 = vpack.c.bf16 %v1092, %v1090
        %v1125 = vld [vmem:[%s4] sm:$0xff]
        %v1126 = vld [vmem:[%s4 + $0x8] sm:$0xff]
        %v1127 = vld [vmem:[%s4 + $0x10] sm:$0xff]
        %v1128 = vld [vmem:[%s4 + $0x18] sm:$0xff]
        %v1129 = vld [vmem:[%s4 + $0x20] sm:$0xff]
        %v1130 = vld [vmem:[%s4 + $0x28] sm:$0xff]
        %v1131 = vld [vmem:[%s4 + $0x30] sm:$0xff]
        %v1132 = vld [vmem:[%s4 + $0x38] sm:$0xff]
        %v1133 = vld [vmem:[%s4 + $0x40] sm:$0xff]
        %v1134 = vld [vmem:[%s4 + $0x48] sm:$0xff]
        %v1135 = vld [vmem:[%s4 + $0x50] sm:$0xff]
        %v1136 = vld [vmem:[%s4 + $0x58] sm:$0xff]
        %v1137 = vld [vmem:[%s4 + $0x60] sm:$0xff]
        %v1138 = vld [vmem:[%s4 + $0x68] sm:$0xff]
        %v1139 = vld [vmem:[%s4 + $0x70] sm:$0xff]
        %v1140 = vld [vmem:[%s4 + $0x78] sm:$0xff]
        %v1141 = vld [vmem:[%s4 + $0x80] sm:$0xff]
        %v1142 = vld [vmem:[%s4 + $0x88] sm:$0xff]
        %v1143 = vld [vmem:[%s4 + $0x90] sm:$0xff]
        %v1144 = vld [vmem:[%s4 + $0x98] sm:$0xff]
        %v1145 = vld [vmem:[%s4 + $0xa0] sm:$0xff]
        %v1146 = vld [vmem:[%s4 + $0xa8] sm:$0xff]
        %v1147 = vld [vmem:[%s4 + $0xb0] sm:$0xff]
        %v1148 = vld [vmem:[%s4 + $0xb8] sm:$0xff]
        %v1149 = vld [vmem:[%s4 + $0xc0] sm:$0xff]
        %v1150 = vld [vmem:[%s4 + $0xc8] sm:$0xff]
        %v1151 = vld [vmem:[%s4 + $0xd0] sm:$0xff]
        %v1152 = vld [vmem:[%s4 + $0xd8] sm:$0xff]
        %v1153 = vld [vmem:[%s4 + $0xe0] sm:$0xff]
        %v1154 = vld [vmem:[%s4 + $0xe8] sm:$0xff]
        %v1155 = vld [vmem:[%s4 + $0xf0] sm:$0xff]
        %v1156 = vld [vmem:[%s4 + $0xf8] sm:$0xff]
        %v1157 = vld [vmem:[%s5] sm:$0x3]
        %v1159 = vlaneseq
        %v1160 = vshrl.u32 %v1159, 7
        %v1161 = vsub.s32 0, %v1160
        %v1162 = vrot.slane %v1157, %v1161
        %v1163 = vlaneseq
        %v1164 = vshrl.u32 %v1163, 7
        %v1165 = vsub.s32 1, %v1164
        %v1166 = vrot.slane %v1157, %v1165
        %v1201 = vunpack.c.l.b16 %v1125
        %v1202 = vunpack.c.h.b16 %v1125
        %v1203 = vunpack.c.l.b16 %v1126
        %v1204 = vunpack.c.h.b16 %v1126
        %v1205 = vunpack.c.l.b16 %v1127
        %v1206 = vunpack.c.h.b16 %v1127
        %v1207 = vunpack.c.l.b16 %v1128
        %v1208 = vunpack.c.h.b16 %v1128
        %v1209 = vunpack.c.l.b16 %v1129
        %v1210 = vunpack.c.h.b16 %v1129
        %v1211 = vunpack.c.l.b16 %v1130
        %v1212 = vunpack.c.h.b16 %v1130
        %v1213 = vunpack.c.l.b16 %v1131
        %v1214 = vunpack.c.h.b16 %v1131
        %v1215 = vunpack.c.l.b16 %v1132
        %v1216 = vunpack.c.h.b16 %v1132
        %v1217 = vunpack.c.l.b16 %v1133
        %v1218 = vunpack.c.h.b16 %v1133
        %v1219 = vunpack.c.l.b16 %v1134
        %v1220 = vunpack.c.h.b16 %v1134
        %v1221 = vunpack.c.l.b16 %v1135
        %v1222 = vunpack.c.h.b16 %v1135
        %v1223 = vunpack.c.l.b16 %v1136
        %v1224 = vunpack.c.h.b16 %v1136
        %v1225 = vunpack.c.l.b16 %v1137
        %v1226 = vunpack.c.h.b16 %v1137
        %v1227 = vunpack.c.l.b16 %v1138
        %v1228 = vunpack.c.h.b16 %v1138
        %v1229 = vunpack.c.l.b16 %v1139
        %v1230 = vunpack.c.h.b16 %v1139
        %v1231 = vunpack.c.l.b16 %v1140
        %v1232 = vunpack.c.h.b16 %v1140
        %v1233 = vunpack.c.l.b16 %v1141
        %v1234 = vunpack.c.h.b16 %v1141
        %v1235 = vunpack.c.l.b16 %v1142
        %v1236 = vunpack.c.h.b16 %v1142
        %v1237 = vunpack.c.l.b16 %v1143
        %v1238 = vunpack.c.h.b16 %v1143
        %v1239 = vunpack.c.l.b16 %v1144
        %v1240 = vunpack.c.h.b16 %v1144
        %v1241 = vunpack.c.l.b16 %v1145
        %v1242 = vunpack.c.h.b16 %v1145
        %v1243 = vunpack.c.l.b16 %v1146
        %v1244 = vunpack.c.h.b16 %v1146
        %v1245 = vunpack.c.l.b16 %v1147
        %v1246 = vunpack.c.h.b16 %v1147
        %v1247 = vunpack.c.l.b16 %v1148
        %v1248 = vunpack.c.h.b16 %v1148
        %v1249 = vunpack.c.l.b16 %v1149
        %v1250 = vunpack.c.h.b16 %v1149
        %v1251 = vunpack.c.l.b16 %v1150
        %v1252 = vunpack.c.h.b16 %v1150
        %v1253 = vunpack.c.l.b16 %v1151
        %v1254 = vunpack.c.h.b16 %v1151
        %v1255 = vunpack.c.l.b16 %v1152
        %v1256 = vunpack.c.h.b16 %v1152
        %v1257 = vunpack.c.l.b16 %v1153
        %v1258 = vunpack.c.h.b16 %v1153
        %v1259 = vunpack.c.l.b16 %v1154
        %v1260 = vunpack.c.h.b16 %v1154
        %v1261 = vunpack.c.l.b16 %v1155
        %v1262 = vunpack.c.h.b16 %v1155
        %v1263 = vunpack.c.l.b16 %v1156
        %v1264 = vunpack.c.h.b16 %v1156
        %v1265 = vpack.c.b16 %v1203, %v1201
        %v1266 = vpack.c.b16 %v1204, %v1202
        %v1267 = vpack.c.b16 %v1207, %v1205
        %v1268 = vpack.c.b16 %v1208, %v1206
        %v1269 = vpack.c.b16 %v1211, %v1209
        %v1270 = vpack.c.b16 %v1212, %v1210
        %v1271 = vpack.c.b16 %v1215, %v1213
        %v1272 = vpack.c.b16 %v1216, %v1214
        %v1273 = vpack.c.b16 %v1219, %v1217
        %v1274 = vpack.c.b16 %v1220, %v1218
        %v1275 = vpack.c.b16 %v1223, %v1221
        %v1276 = vpack.c.b16 %v1224, %v1222
        %v1277 = vpack.c.b16 %v1227, %v1225
        %v1278 = vpack.c.b16 %v1228, %v1226
        %v1279 = vpack.c.b16 %v1231, %v1229
        %v1280 = vpack.c.b16 %v1232, %v1230
        %v1281 = vpack.c.b16 %v1235, %v1233
        %v1282 = vpack.c.b16 %v1236, %v1234
        %v1283 = vpack.c.b16 %v1239, %v1237
        %v1284 = vpack.c.b16 %v1240, %v1238
        %v1285 = vpack.c.b16 %v1243, %v1241
        %v1286 = vpack.c.b16 %v1244, %v1242
        %v1287 = vpack.c.b16 %v1247, %v1245
        %v1288 = vpack.c.b16 %v1248, %v1246
        %v1289 = vpack.c.b16 %v1251, %v1249
        %v1290 = vpack.c.b16 %v1252, %v1250
        %v1291 = vpack.c.b16 %v1255, %v1253
        %v1292 = vpack.c.b16 %v1256, %v1254
        %v1293 = vpack.c.b16 %v1259, %v1257
        %v1294 = vpack.c.b16 %v1260, %v1258
        %v1295 = vpack.c.b16 %v1263, %v1261
        %v1296 = vpack.c.b16 %v1264, %v1262
        %1329 = vmatprep.subr.bf16.mxu0 %v1280
        %1330 = vmatpush1.bf16.msra.mxu0 %v1279
        %1331 = vmatprep.subr.bf16.mxu0 %v1278
        %1332 = vmatpush1.bf16.msra.mxu0 %v1277
        %1333 = vmatprep.subr.bf16.mxu0 %v1276
        %1334 = vmatpush1.bf16.msra.mxu0 %v1275
        %1335 = vmatprep.subr.bf16.mxu0 %v1274
        %1336 = vmatpush1.bf16.msra.mxu0 %v1273
        %1337 = vmatprep.subr.bf16.mxu0 %v1272
        %1338 = vmatpush1.bf16.msra.mxu0 %v1271
        %1339 = vmatprep.subr.bf16.mxu0 %v1270
        %1340 = vmatpush1.bf16.msra.mxu0 %v1269
        %1341 = vmatprep.subr.bf16.mxu0 %v1268
        %1342 = vmatpush1.bf16.msra.mxu0 %v1267
        %1343 = vmatprep.subr.bf16.mxu0 %v1266
        %1344 = vmatpush1.bf16.msra.mxu0 %v1265
        %1345 = vmatprep.subr.bf16.mxu0 %v1296
        %1346 = vmatpush2.bf16.msra.mxu0 %v1295
        %1347 = vmatprep.subr.bf16.mxu0 %v1294
        %1348 = vmatpush2.bf16.msra.mxu0 %v1293
        %1349 = vmatprep.subr.bf16.mxu0 %v1292
        %1350 = vmatpush2.bf16.msra.mxu0 %v1291
        %1351 = vmatprep.subr.bf16.mxu0 %v1290
        %1352 = vmatpush2.bf16.msra.mxu0 %v1289
        %1353 = vmatprep.subr.bf16.mxu0 %v1288
        %1354 = vmatpush2.bf16.msra.mxu0 %v1287
        %1355 = vmatprep.subr.bf16.mxu0 %v1286
        %1356 = vmatpush2.bf16.msra.mxu0 %v1285
        %1357 = vmatprep.subr.bf16.mxu0 %v1284
        %1358 = vmatpush2.bf16.msra.mxu0 %v1283
        %1359 = vmatprep.subr.bf16.mxu0 %v1282
        %1360 = vmatpush2.bf16.msra.mxu0 %v1281
        %1361 = vmatprep.mubr.bf16.mxu0 %v1094
        %1362 = vmatmul.mubr.bf16.gmra.mxu0 %v1093
        %v1363 = vpop.f32.mrf.mxu0
        %v1364 = vadd.f32 %v1162, %v1363
        %v1365 = vpop.f32.mrf.mxu0
        %v1366 = vadd.f32 %v1166, %v1365
        %v1367 = vpop.f32.mrf.mxu0
        %v1368 = vadd.f32 %v1162, %v1367
        %v1369 = vpop.f32.mrf.mxu0
        %v1370 = vadd.f32 %v1166, %v1369
        %1371 = vmatprep.mubr.bf16.mxu0 %v1096
        %1372 = vmatmul.mubr.bf16.gmra.mxu0 %v1095
        %v1373 = vpop.f32.mrf.mxu0
        %v1374 = vadd.f32 %v1162, %v1373
        %v1375 = vpop.f32.mrf.mxu0
        %v1376 = vadd.f32 %v1166, %v1375
        %v1377 = vpop.f32.mrf.mxu0
        %v1378 = vadd.f32 %v1162, %v1377
        %v1379 = vpop.f32.mrf.mxu0
        %v1380 = vadd.f32 %v1166, %v1379
        %1381 = vmatprep.mubr.bf16.mxu0 %v1098
        %1382 = vmatmul.mubr.bf16.gmra.mxu0 %v1097
        %v1383 = vpop.f32.mrf.mxu0
        %v1384 = vadd.f32 %v1162, %v1383
        %v1385 = vpop.f32.mrf.mxu0
        %v1386 = vadd.f32 %v1166, %v1385
        %v1387 = vpop.f32.mrf.mxu0
        %v1388 = vadd.f32 %v1162, %v1387
        %v1389 = vpop.f32.mrf.mxu0
        %v1390 = vadd.f32 %v1166, %v1389
        %1391 = vmatprep.mubr.bf16.mxu0 %v1100
        %1392 = vmatmul.mubr.bf16.gmra.mxu0 %v1099
        %v1393 = vpop.f32.mrf.mxu0
        %v1394 = vadd.f32 %v1162, %v1393
        %v1395 = vpop.f32.mrf.mxu0
        %v1396 = vadd.f32 %v1166, %v1395
        %v1397 = vpop.f32.mrf.mxu0
        %v1398 = vadd.f32 %v1162, %v1397
        %v1399 = vpop.f32.mrf.mxu0
        %v1400 = vadd.f32 %v1166, %v1399
        %1401 = vmatprep.mubr.bf16.mxu0 %v1102
        %1402 = vmatmul.mubr.bf16.gmra.mxu0 %v1101
        %v1403 = vpop.f32.mrf.mxu0
        %v1404 = vadd.f32 %v1162, %v1403
        %v1405 = vpop.f32.mrf.mxu0
        %v1406 = vadd.f32 %v1166, %v1405
        %v1407 = vpop.f32.mrf.mxu0
        %v1408 = vadd.f32 %v1162, %v1407
        %v1409 = vpop.f32.mrf.mxu0
        %v1410 = vadd.f32 %v1166, %v1409
        %1411 = vmatprep.mubr.bf16.mxu0 %v1104
        %1412 = vmatmul.mubr.bf16.gmra.mxu0 %v1103
        %v1413 = vpop.f32.mrf.mxu0
        %v1414 = vadd.f32 %v1162, %v1413
        %v1415 = vpop.f32.mrf.mxu0
        %v1416 = vadd.f32 %v1166, %v1415
        %v1417 = vpop.f32.mrf.mxu0
        %v1418 = vadd.f32 %v1162, %v1417
        %v1419 = vpop.f32.mrf.mxu0
        %v1420 = vadd.f32 %v1166, %v1419
        %1421 = vmatprep.mubr.bf16.mxu0 %v1106
        %1422 = vmatmul.mubr.bf16.gmra.mxu0 %v1105
        %v1423 = vpop.f32.mrf.mxu0
        %v1424 = vadd.f32 %v1162, %v1423
        %v1425 = vpop.f32.mrf.mxu0
        %v1426 = vadd.f32 %v1166, %v1425
        %v1427 = vpop.f32.mrf.mxu0
        %v1428 = vadd.f32 %v1162, %v1427
        %v1429 = vpop.f32.mrf.mxu0
        %v1430 = vadd.f32 %v1166, %v1429
        %1431 = vmatprep.mubr.bf16.mxu0 %v1108
        %1432 = vmatmul.mubr.bf16.gmra.mxu0 %v1107
        %v1433 = vpop.f32.mrf.mxu0
        %v1434 = vadd.f32 %v1162, %v1433
        %v1435 = vpop.f32.mrf.mxu0
        %v1436 = vadd.f32 %v1166, %v1435
        %v1437 = vpop.f32.mrf.mxu0
        %v1438 = vadd.f32 %v1162, %v1437
        %v1439 = vpop.f32.mrf.mxu0
        %v1440 = vadd.f32 %v1166, %v1439
        %1441 = vmatprep.mubr.bf16.mxu0 %v1110
        %1442 = vmatmul.mubr.bf16.gmra.mxu0 %v1109
        %v1443 = vpop.f32.mrf.mxu0
        %v1444 = vadd.f32 %v1162, %v1443
        %v1445 = vpop.f32.mrf.mxu0
        %v1446 = vadd.f32 %v1166, %v1445
        %v1447 = vpop.f32.mrf.mxu0
        %v1448 = vadd.f32 %v1162, %v1447
        %v1449 = vpop.f32.mrf.mxu0
        %v1450 = vadd.f32 %v1166, %v1449
        %1451 = vmatprep.mubr.bf16.mxu0 %v1112
        %1452 = vmatmul.mubr.bf16.gmra.mxu0 %v1111
        %v1453 = vpop.f32.mrf.mxu0
        %v1454 = vadd.f32 %v1162, %v1453
        %v1455 = vpop.f32.mrf.mxu0
        %v1456 = vadd.f32 %v1166, %v1455
        %v1457 = vpop.f32.mrf.mxu0
        %v1458 = vadd.f32 %v1162, %v1457
        %v1459 = vpop.f32.mrf.mxu0
        %v1460 = vadd.f32 %v1166, %v1459
        %1461 = vmatprep.mubr.bf16.mxu0 %v1114
        %1462 = vmatmul.mubr.bf16.gmra.mxu0 %v1113
        %v1463 = vpop.f32.mrf.mxu0
        %v1464 = vadd.f32 %v1162, %v1463
        %v1465 = vpop.f32.mrf.mxu0
        %v1466 = vadd.f32 %v1166, %v1465
        %v1467 = vpop.f32.mrf.mxu0
        %v1468 = vadd.f32 %v1162, %v1467
        %v1469 = vpop.f32.mrf.mxu0
        %v1470 = vadd.f32 %v1166, %v1469
        %1471 = vmatprep.mubr.bf16.mxu0 %v1116
        %1472 = vmatmul.mubr.bf16.gmra.mxu0 %v1115
        %v1473 = vpop.f32.mrf.mxu0
        %v1474 = vadd.f32 %v1162, %v1473
        %v1475 = vpop.f32.mrf.mxu0
        %v1476 = vadd.f32 %v1166, %v1475
        %v1477 = vpop.f32.mrf.mxu0
        %v1478 = vadd.f32 %v1162, %v1477
        %v1479 = vpop.f32.mrf.mxu0
        %v1480 = vadd.f32 %v1166, %v1479
        %1481 = vmatprep.mubr.bf16.mxu0 %v1118
        %1482 = vmatmul.mubr.bf16.gmra.mxu0 %v1117
        %v1483 = vpop.f32.mrf.mxu0
        %v1484 = vadd.f32 %v1162, %v1483
        %v1485 = vpop.f32.mrf.mxu0
        %v1486 = vadd.f32 %v1166, %v1485
        %v1487 = vpop.f32.mrf.mxu0
        %v1488 = vadd.f32 %v1162, %v1487
        %v1489 = vpop.f32.mrf.mxu0
        %v1490 = vadd.f32 %v1166, %v1489
        %1491 = vmatprep.mubr.bf16.mxu0 %v1120
        %1492 = vmatmul.mubr.bf16.gmra.mxu0 %v1119
        %v1493 = vpop.f32.mrf.mxu0
        %v1494 = vadd.f32 %v1162, %v1493
        %v1495 = vpop.f32.mrf.mxu0
        %v1496 = vadd.f32 %v1166, %v1495
        %v1497 = vpop.f32.mrf.mxu0
        %v1498 = vadd.f32 %v1162, %v1497
        %v1499 = vpop.f32.mrf.mxu0
        %v1500 = vadd.f32 %v1166, %v1499
        %1501 = vmatprep.mubr.bf16.mxu0 %v1122
        %1502 = vmatmul.mubr.bf16.gmra.mxu0 %v1121
        %v1503 = vpop.f32.mrf.mxu0
        %v1504 = vadd.f32 %v1162, %v1503
        %v1505 = vpop.f32.mrf.mxu0
        %v1506 = vadd.f32 %v1166, %v1505
        %v1507 = vpop.f32.mrf.mxu0
        %v1508 = vadd.f32 %v1162, %v1507
        %v1509 = vpop.f32.mrf.mxu0
        %v1510 = vadd.f32 %v1166, %v1509
        %1511 = vmatprep.mubr.bf16.mxu0 %v1124
        %1512 = vmatmul.mubr.bf16.gmra.mxu0 %v1123
        %v1513 = vpop.f32.mrf.mxu0
        %v1514 = vadd.f32 %v1162, %v1513
        %v1515 = vpop.f32.mrf.mxu0
        %v1516 = vadd.f32 %v1166, %v1515
        %v1517 = vpop.f32.mrf.mxu0
        %v1518 = vadd.f32 %v1162, %v1517
        %v1519 = vpop.f32.mrf.mxu0
        %v1520 = vadd.f32 %v1166, %v1519
        %1521 = vdwg.mxu0
        %v1522 = vtanh.pop %v1364
        %v1523 = vtanh.pop %v1368
        %v1524 = vtanh.pop %v1374
        %v1525 = vtanh.pop %v1378
        %v1526 = vtanh.pop %v1384
        %v1527 = vtanh.pop %v1388
        %v1528 = vtanh.pop %v1394
        %v1529 = vtanh.pop %v1398
        %v1530 = vtanh.pop %v1404
        %v1531 = vtanh.pop %v1408
        %v1532 = vtanh.pop %v1414
        %v1533 = vtanh.pop %v1418
        %v1534 = vtanh.pop %v1424
        %v1535 = vtanh.pop %v1428
        %v1536 = vtanh.pop %v1434
        %v1537 = vtanh.pop %v1438
        %v1538 = vtanh.pop %v1444
        %v1539 = vtanh.pop %v1448
        %v1540 = vtanh.pop %v1454
        %v1541 = vtanh.pop %v1458
        %v1542 = vtanh.pop %v1464
        %v1543 = vtanh.pop %v1468
        %v1544 = vtanh.pop %v1474
        %v1545 = vtanh.pop %v1478
        %v1546 = vtanh.pop %v1484
        %v1547 = vtanh.pop %v1488
        %v1548 = vtanh.pop %v1494
        %v1549 = vtanh.pop %v1498
        %v1550 = vtanh.pop %v1504
        %v1551 = vtanh.pop %v1508
        %v1552 = vtanh.pop %v1514
        %v1553 = vtanh.pop %v1518
        %v1554 = vmul.f32 %v1366, 0.5
        %v1555 = vmul.f32 %v1370, 0.5
        %v1556 = vmul.f32 %v1376, 0.5
        %v1557 = vmul.f32 %v1380, 0.5
        %v1558 = vmul.f32 %v1386, 0.5
        %v1559 = vmul.f32 %v1390, 0.5
        %v1560 = vmul.f32 %v1396, 0.5
        %v1561 = vmul.f32 %v1400, 0.5
        %v1562 = vmul.f32 %v1406, 0.5
        %v1563 = vmul.f32 %v1410, 0.5
        %v1564 = vmul.f32 %v1416, 0.5
        %v1565 = vmul.f32 %v1420, 0.5
        %v1566 = vmul.f32 %v1426, 0.5
        %v1567 = vmul.f32 %v1430, 0.5
        %v1568 = vmul.f32 %v1436, 0.5
        %v1569 = vmul.f32 %v1440, 0.5
        %v1570 = vmul.f32 %v1446, 0.5
        %v1571 = vmul.f32 %v1450, 0.5
        %v1572 = vmul.f32 %v1456, 0.5
        %v1573 = vmul.f32 %v1460, 0.5
        %v1574 = vmul.f32 %v1466, 0.5
        %v1575 = vmul.f32 %v1470, 0.5
        %v1576 = vmul.f32 %v1476, 0.5
        %v1577 = vmul.f32 %v1480, 0.5
        %v1578 = vmul.f32 %v1486, 0.5
        %v1579 = vmul.f32 %v1490, 0.5
        %v1580 = vmul.f32 %v1496, 0.5
        %v1581 = vmul.f32 %v1500, 0.5
        %v1582 = vmul.f32 %v1506, 0.5
        %v1583 = vmul.f32 %v1510, 0.5
        %v1584 = vmul.f32 %v1516, 0.5
        %v1585 = vmul.f32 %v1520, 0.5
        %v1586 = vtanh.pop %v1554
        %v1587 = vtanh.pop %v1555
        %v1588 = vtanh.pop %v1556
        %v1589 = vtanh.pop %v1557
        %v1590 = vtanh.pop %v1558
        %v1591 = vtanh.pop %v1559
        %v1592 = vtanh.pop %v1560
        %v1593 = vtanh.pop %v1561
        %v1594 = vtanh.pop %v1562
        %v1595 = vtanh.pop %v1563
        %v1596 = vtanh.pop %v1564
        %v1597 = vtanh.pop %v1565
        %v1598 = vtanh.pop %v1566
        %v1599 = vtanh.pop %v1567
        %v1600 = vtanh.pop %v1568
        %v1601 = vtanh.pop %v1569
        %v1602 = vtanh.pop %v1570
        %v1603 = vtanh.pop %v1571
        %v1604 = vtanh.pop %v1572
        %v1605 = vtanh.pop %v1573
        %v1606 = vtanh.pop %v1574
        %v1607 = vtanh.pop %v1575
        %v1608 = vtanh.pop %v1576
        %v1609 = vtanh.pop %v1577
        %v1610 = vtanh.pop %v1578
        %v1611 = vtanh.pop %v1579
        %v1612 = vtanh.pop %v1580
        %v1613 = vtanh.pop %v1581
        %v1614 = vtanh.pop %v1582
        %v1615 = vtanh.pop %v1583
        %v1616 = vtanh.pop %v1584
        %v1617 = vtanh.pop %v1585
        %v1618 = vadd.f32 %v1586, 1.0
        %v1619 = vadd.f32 %v1587, 1.0
        %v1620 = vadd.f32 %v1588, 1.0
        %v1621 = vadd.f32 %v1589, 1.0
        %v1622 = vadd.f32 %v1590, 1.0
        %v1623 = vadd.f32 %v1591, 1.0
        %v1624 = vadd.f32 %v1592, 1.0
        %v1625 = vadd.f32 %v1593, 1.0
        %v1626 = vadd.f32 %v1594, 1.0
        %v1627 = vadd.f32 %v1595, 1.0
        %v1628 = vadd.f32 %v1596, 1.0
        %v1629 = vadd.f32 %v1597, 1.0
        %v1630 = vadd.f32 %v1598, 1.0
        %v1631 = vadd.f32 %v1599, 1.0
        %v1632 = vadd.f32 %v1600, 1.0
        %v1633 = vadd.f32 %v1601, 1.0
        %v1634 = vadd.f32 %v1602, 1.0
        %v1635 = vadd.f32 %v1603, 1.0
        %v1636 = vadd.f32 %v1604, 1.0
        %v1637 = vadd.f32 %v1605, 1.0
        %v1638 = vadd.f32 %v1606, 1.0
        %v1639 = vadd.f32 %v1607, 1.0
        %v1640 = vadd.f32 %v1608, 1.0
        %v1641 = vadd.f32 %v1609, 1.0
        %v1642 = vadd.f32 %v1610, 1.0
        %v1643 = vadd.f32 %v1611, 1.0
        %v1644 = vadd.f32 %v1612, 1.0
        %v1645 = vadd.f32 %v1613, 1.0
        %v1646 = vadd.f32 %v1614, 1.0
        %v1647 = vadd.f32 %v1615, 1.0
        %v1648 = vadd.f32 %v1616, 1.0
        %v1649 = vadd.f32 %v1617, 1.0
        %v1650 = vmul.f32 %v1618, 0.5
        %v1651 = vmul.f32 %v1619, 0.5
        %v1652 = vmul.f32 %v1620, 0.5
        %v1653 = vmul.f32 %v1621, 0.5
        %v1654 = vmul.f32 %v1622, 0.5
        %v1655 = vmul.f32 %v1623, 0.5
        %v1656 = vmul.f32 %v1624, 0.5
        %v1657 = vmul.f32 %v1625, 0.5
        %v1658 = vmul.f32 %v1626, 0.5
        %v1659 = vmul.f32 %v1627, 0.5
        %v1660 = vmul.f32 %v1628, 0.5
        %v1661 = vmul.f32 %v1629, 0.5
        %v1662 = vmul.f32 %v1630, 0.5
        %v1663 = vmul.f32 %v1631, 0.5
        %v1664 = vmul.f32 %v1632, 0.5
        %v1665 = vmul.f32 %v1633, 0.5
        %v1666 = vmul.f32 %v1634, 0.5
        %v1667 = vmul.f32 %v1635, 0.5
        %v1668 = vmul.f32 %v1636, 0.5
        %v1669 = vmul.f32 %v1637, 0.5
        %v1670 = vmul.f32 %v1638, 0.5
        %v1671 = vmul.f32 %v1639, 0.5
        %v1672 = vmul.f32 %v1640, 0.5
        %v1673 = vmul.f32 %v1641, 0.5
        %v1674 = vmul.f32 %v1642, 0.5
        %v1675 = vmul.f32 %v1643, 0.5
        %v1676 = vmul.f32 %v1644, 0.5
        %v1677 = vmul.f32 %v1645, 0.5
        %v1678 = vmul.f32 %v1646, 0.5
        %v1679 = vmul.f32 %v1647, 0.5
        %v1680 = vmul.f32 %v1648, 0.5
        %v1681 = vmul.f32 %v1649, 0.5
        %v1682 = vmul.f32 %v1522, %v1650
        %v1683 = vmul.f32 %v1523, %v1651
        %v1684 = vmul.f32 %v1524, %v1652
        %v1685 = vmul.f32 %v1525, %v1653
        %v1686 = vmul.f32 %v1526, %v1654
        %v1687 = vmul.f32 %v1527, %v1655
        %v1688 = vmul.f32 %v1528, %v1656
        %v1689 = vmul.f32 %v1529, %v1657
        %v1690 = vmul.f32 %v1530, %v1658
        %v1691 = vmul.f32 %v1531, %v1659
        %v1692 = vmul.f32 %v1532, %v1660
        %v1693 = vmul.f32 %v1533, %v1661
        %v1694 = vmul.f32 %v1534, %v1662
        %v1695 = vmul.f32 %v1535, %v1663
        %v1696 = vmul.f32 %v1536, %v1664
        %v1697 = vmul.f32 %v1537, %v1665
        %v1698 = vmul.f32 %v1538, %v1666
        %v1699 = vmul.f32 %v1539, %v1667
        %v1700 = vmul.f32 %v1540, %v1668
        %v1701 = vmul.f32 %v1541, %v1669
        %v1702 = vmul.f32 %v1542, %v1670
        %v1703 = vmul.f32 %v1543, %v1671
        %v1704 = vmul.f32 %v1544, %v1672
        %v1705 = vmul.f32 %v1545, %v1673
        %v1706 = vmul.f32 %v1546, %v1674
        %v1707 = vmul.f32 %v1547, %v1675
        %v1708 = vmul.f32 %v1548, %v1676
        %v1709 = vmul.f32 %v1549, %v1677
        %v1710 = vmul.f32 %v1550, %v1678
        %v1711 = vmul.f32 %v1551, %v1679
        %v1712 = vmul.f32 %v1552, %v1680
        %v1713 = vmul.f32 %v1553, %v1681
        %v1714 = vld [vmem:[%s6] sm:$0x3]
        %v1715 = vld [vmem:[%s7] sm:$0x3]
        %1717 = vset.pattern.permute.xlu0 0
        %1718 = vperm.xlu0 %1717, %v1715
        %v1719 = vpop.permute.xlu0 %1718
        %1721 = vmatprep.subr.mxu0 0.0
        %1722 = vmatpush1.xpose.msra.mxu0 %v1697
        %1723 = vmatprep.subr.mxu0 0.0
        %1724 = vmatpush1.xpose.msra.mxu0 %v1696
        %1725 = vmatprep.subr.mxu0 0.0
        %1726 = vmatpush1.xpose.msra.mxu0 %v1695
        %1727 = vmatprep.subr.mxu0 0.0
        %1728 = vmatpush1.xpose.msra.mxu0 %v1694
        %1729 = vmatprep.subr.mxu0 0.0
        %1730 = vmatpush1.xpose.msra.mxu0 %v1693
        %1731 = vmatprep.subr.mxu0 0.0
        %1732 = vmatpush1.xpose.msra.mxu0 %v1692
        %1733 = vmatprep.subr.mxu0 0.0
        %1734 = vmatpush1.xpose.msra.mxu0 %v1691
        %1735 = vmatprep.subr.mxu0 0.0
        %1736 = vmatpush1.xpose.msra.mxu0 %v1690
        %1737 = vmatprep.subr.mxu0 0.0
        %1738 = vmatpush1.xpose.msra.mxu0 %v1689
        %1739 = vmatprep.subr.mxu0 0.0
        %1740 = vmatpush1.xpose.msra.mxu0 %v1688
        %1741 = vmatprep.subr.mxu0 0.0
        %1742 = vmatpush1.xpose.msra.mxu0 %v1687
        %1743 = vmatprep.subr.mxu0 0.0
        %1744 = vmatpush1.xpose.msra.mxu0 %v1686
        %1745 = vmatprep.subr.mxu0 0.0
        %1746 = vmatpush1.xpose.msra.mxu0 %v1685
        %1747 = vmatprep.subr.mxu0 0.0
        %1748 = vmatpush1.xpose.msra.mxu0 %v1684
        %1749 = vmatprep.subr.mxu0 0.0
        %1750 = vmatpush1.xpose.msra.mxu0 %v1683
        %1751 = vmatprep.subr.mxu0 0.0
        %1752 = vmatpush1.xpose.msra.mxu0 %v1682
        %1753 = vmatprep.subr.mxu0 0.0
        %1754 = vmatpush2.xpose.msra.mxu0 %v1713
        %1755 = vmatprep.subr.mxu0 0.0
        %1756 = vmatpush2.xpose.msra.mxu0 %v1712
        %1757 = vmatprep.subr.mxu0 0.0
        %1758 = vmatpush2.xpose.msra.mxu0 %v1711
        %1759 = vmatprep.subr.mxu0 0.0
        %1760 = vmatpush2.xpose.msra.mxu0 %v1710
        %1761 = vmatprep.subr.mxu0 0.0
        %1762 = vmatpush2.xpose.msra.mxu0 %v1709
        %1763 = vmatprep.subr.mxu0 0.0
        %1764 = vmatpush2.xpose.msra.mxu0 %v1708
        %1765 = vmatprep.subr.mxu0 0.0
        %1766 = vmatpush2.xpose.msra.mxu0 %v1707
        %1767 = vmatprep.subr.mxu0 0.0
        %1768 = vmatpush2.xpose.msra.mxu0 %v1706
        %1769 = vmatprep.subr.mxu0 0.0
        %1770 = vmatpush2.xpose.msra.mxu0 %v1705
        %1771 = vmatprep.subr.mxu0 0.0
        %1772 = vmatpush2.xpose.msra.mxu0 %v1704
        %1773 = vmatprep.subr.mxu0 0.0
        %1774 = vmatpush2.xpose.msra.mxu0 %v1703
        %1775 = vmatprep.subr.mxu0 0.0
        %1776 = vmatpush2.xpose.msra.mxu0 %v1702
        %1777 = vmatprep.subr.mxu0 0.0
        %1778 = vmatpush2.xpose.msra.mxu0 %v1701
        %1779 = vmatprep.subr.mxu0 0.0
        %1780 = vmatpush2.xpose.msra.mxu0 %v1700
        %1781 = vmatprep.subr.mxu0 0.0
        %1782 = vmatpush2.xpose.msra.mxu0 %v1699
        %1783 = vmatprep.subr.mxu0 0.0
        %1784 = vmatpush2.xpose.msra.mxu0 %v1698
        %1785 = vmatprep.mubr.f32.mxu0 0.0
        %1786 = vmatmul.mubr.f32.gmra.mxu0 %v1714
        %v1787 = vpop.f32.mrf.mxu0
        %v1788 = vadd.f32 %v1719, %v1787
        %v1789 = vpop.f32.mrf.mxu0
        %v1790 = vadd.f32 %v1719, %v1789
        %1791 = vdwg.mxu0
        %v1794 = vcombine.low %v1788, %v1790
        %v1796 = vunpack.c.l.s4 1983009808
        %v1797 = vunpack.c.0.s8 %v1796
        %v1798 = vlaneseq
        %v1799 = vshrl.u32 %v1798, 7
        %v1800 = vsub.s32 %v1797, %v1799
        %v1801 = vrot.slane %v1794, %v1800
        %1803 = vst [vmem:[%s384] sm:$0xf] %v1801
        %s1804 = smul.u32 %s31, 2
        %s1805 = sadd.s32 %s1804, %s32
        %s1806 = smul.u32 %s1805, 256
        %v1807 = vlaneseq
        %v1808 = vand.u32 %v1807, 127
        %v1809 = vadd.s32 %v1808, 128
        %v1810 = vstv %s1806
        %v1811 = vadd.s32 %v1810, %v1808
        %v1812 = vadd.s32 %v1810, %v1809
        %v1813 = vstv %s431
        %vm1814 = vcmp.lt.s32.totalorder %v1811, %v1813
        %vm1815 = vcmp.lt.s32.totalorder %v1812, %v1813
        %v1816 = vsel %vm1814, %v1788, -1e+30
        %v1817 = vsel %vm1815, %v1790, -1e+30
        %v1818 = vld [vmem:[%s421] sm:$0x3]
        %vm1819 = vcmask 1041408
        %v1820 = vsel %vm1819, %v1816, -inf
        %v1821 = vsel %vm1819, %v1817, -inf
        %v1822 = vmax.f32 %v1820, %v1821
        %1823 = vmax.xlane.f32.xlu0 %v1822
        %v1824 = vpop.xlane.xlu0 %1823
        %v1825 = vmax.f32 %v1818, %v1824
        %v1826 = vsub.f32 %v1818, %v1825
        %v1827 = vmul.f32 %v1826, 1.442695
        %v1828 = vpow.pop %v1827
        %1830 = vset.pattern.permute.xlu0 0
        %1831 = vperm.xlu0 %1830, %v1825
        %v1832 = vpop.permute.xlu0 %1831
        %v1834 = vsub.f32 %v1816, %v1832
        %v1835 = vsub.f32 %v1817, %v1832
        %v1836 = vmul.f32 %v1834, 1.442695
        %v1837 = vpow.pop %v1836
        %v1838 = vmul.f32 %v1835, 1.442695
        %v1839 = vpow.pop %v1838
        %v1840 = vsel %vm1814, %v1837, 0.0
        %v1841 = vsel %vm1815, %v1839, 0.0
        %v1842 = vld [vmem:[%s425] sm:$0x3]
        %v1843 = vmul.f32 %v1828, %v1842
        %v1844 = vsel %vm1819, %v1840, 0.0
        %v1845 = vsel %vm1819, %v1841, 0.0
        %v1846 = vadd.f32 %v1844, %v1845
        %1847 = vadd.xlane.f32.xlu0 %v1846
        %v1848 = vpop.xlane.xlu0 %1847
        %v1849 = vadd.f32 %v1843, %v1848
        %vm1850 = vcmask 1024
        %1851 = vst.msk [vmem:[%s425] sm:$0x3] %vm1850, %v1849
        %v1852 = vld [vmem:[%s430] sm:$0xf]
        %1854 = vset.pattern.permute.xlu0 0
        %1855 = vperm.xlu0 %1854, %v1828
        %v1856 = vpop.permute.xlu0 %1855
        %v1860 = vunpack.c.l.s4 1983009808
        %v1861 = vunpack.c.0.s8 %v1860
        %v1862 = vlaneseq
        %v1863 = vshrl.u32 %v1862, 7
        %v1864 = vsub.s32 %v1861, %v1863
        %v1865 = vrot.slane %v1852, %v1864
        %v1866 = vcombine.high %v1865, %v1865
        %v1869 = vmul.f32 %v1856, %v1865
        %v1870 = vmul.f32 %v1856, %v1866
        %v1871 = vpack.c.bf16 %v1840, %v1840
        %v1872 = vpack.c.bf16 %v1841, %v1841
        %1873 = vmatprep.subr.bf16.mxu0 %v1108
        %1874 = vmatpush1.bf16.msra.mxu0 %v1107
        %1875 = vmatprep.subr.bf16.mxu0 %v1106
        %1876 = vmatpush1.bf16.msra.mxu0 %v1105
        %1877 = vmatprep.subr.bf16.mxu0 %v1104
        %1878 = vmatpush1.bf16.msra.mxu0 %v1103
        %1879 = vmatprep.subr.bf16.mxu0 %v1102
        %1880 = vmatpush1.bf16.msra.mxu0 %v1101
        %1881 = vmatprep.subr.bf16.mxu0 %v1100
        %1882 = vmatpush1.bf16.msra.mxu0 %v1099
        %1883 = vmatprep.subr.bf16.mxu0 %v1098
        %1884 = vmatpush1.bf16.msra.mxu0 %v1097
        %1885 = vmatprep.subr.bf16.mxu0 %v1096
        %1886 = vmatpush1.bf16.msra.mxu0 %v1095
        %1887 = vmatprep.subr.bf16.mxu0 %v1094
        %1888 = vmatpush1.bf16.msra.mxu0 %v1093
        %1889 = vmatprep.subr.bf16.mxu0 %v1124
        %1890 = vmatpush2.bf16.msra.mxu0 %v1123
        %1891 = vmatprep.subr.bf16.mxu0 %v1122
        %1892 = vmatpush2.bf16.msra.mxu0 %v1121
        %1893 = vmatprep.subr.bf16.mxu0 %v1120
        %1894 = vmatpush2.bf16.msra.mxu0 %v1119
        %1895 = vmatprep.subr.bf16.mxu0 %v1118
        %1896 = vmatpush2.bf16.msra.mxu0 %v1117
        %1897 = vmatprep.subr.bf16.mxu0 %v1116
        %1898 = vmatpush2.bf16.msra.mxu0 %v1115
        %1899 = vmatprep.subr.bf16.mxu0 %v1114
        %1900 = vmatpush2.bf16.msra.mxu0 %v1113
        %1901 = vmatprep.subr.bf16.mxu0 %v1112
        %1902 = vmatpush2.bf16.msra.mxu0 %v1111
        %1903 = vmatprep.subr.bf16.mxu0 %v1110
        %1904 = vmatpush2.bf16.msra.mxu0 %v1109
        %1905 = vmatprep.mubr.bf16.mxu0 %v1872
        %1906 = vmatmul.mubr.bf16.gmra.mxu0 %v1871
        %v1907 = vpop.f32.mrf.mxu0
        %v1908 = vadd.f32 0.0, %v1907
        %v1909 = vpop.f32.mrf.mxu0
        %v1910 = vadd.f32 0.0, %v1909
        %v1911 = vpop.f32.mrf.mxu0
        %v1912 = vpop.f32.mrf.mxu0
        %1913 = vdwg.mxu0
        %v1914 = vadd.f32 %v1869, %v1908
        %v1915 = vadd.f32 %v1870, %v1910
        %v1918 = vcombine.low %v1914, %v1915
        %v1920 = vunpack.c.l.s4 1983009808
        %v1921 = vunpack.c.0.s8 %v1920
        %v1922 = vlaneseq
        %v1923 = vshrl.u32 %v1922, 7
        %v1924 = vsub.s32 %v1921, %v1923
        %v1925 = vrot.slane %v1918, %v1924
        %1927 = vst [vmem:[%s430] sm:$0xf] %v1925
        %1928 = vst.msk [vmem:[%s421] sm:$0x3] %vm1850, %v1825
        %s1929 = sand.u32 %s207, 1
        %s1930 = scalar_lea.sflag [#allocation5], %s1929
        %s1931 = sand.u32 %s207, 1
        %s1932 = smul.addr %s1931, 4
        %s1933 = scalar_lea.vmem [#allocation4], %s1932
        %p1934 = scmp.lt.s32.totalorder %s31, 1
        %s1935 = scalar_select %p1934, %s31, 1
        %s1936 = smul.addr %s1935, 2
        %s1937 = scalar_lea.vmem %s9, %s1936
        %p1938 = scmp.lt.s32.totalorder %s31, 1
        %s1939 = scalar_select %p1938, %s31, 1
        %s1940 = smul.addr %s1939, 2
        %s1941 = scalar_lea.vmem %s10, %s1940
        %p1942 = scmp.lt.s32.totalorder %s31, 1
        %s1943 = scalar_select %p1942, %s31, 1
        %s1944 = smul.addr %s1943, 2
        %s1945 = smul.addr %s1944, 2
        %s1946 = scalar_lea.vmem %s11, %s1945
        // Predicated region
        $region53: #{_clam_mb_padded.1} parent=47 // pred_check
          %p1947 = pneg %p217
        $region54: #{_clam_mb_padded.1} parent=47 // pred_check_branch
          %1949 = sbr.rel (%p1947) target = $region56
        $region55: #{_clam_mb_padded.1} parent=47 // pred_region
          %s1950 = smul.u32 %s31, 2
          %s1951 = sadd.s32 %s1950, %s32
          %s1952 = smul.u32 2, %s1951
          %s1954 = ssub.s32 64, 64
          %1955 = vsyncadd %s1930, %s1954
          %s1956 = smul.addr %s1952, 32
          %s1957 = scalar_lea.hbm %s8, %s1956
          %s1959 = sshll.u32 %s1933, 4
          %s1960 = int_to_ptr.vmem [resolvable:$true] %s1959
          %1962 = dma.vmem_to_hbm [thread:$0]  %s1960, 64, %s1957, %s1930
        $region56: #{_clam_mb_padded.1} parent=47 // pred_fallthru
          _
        // Predicated region
        $region57: #{_clam_mb_padded.1} parent=47 // pred_check
          %p1963 = pneg %p243
        $region58: #{_clam_mb_padded.1} parent=47 // pred_check_branch
          %1965 = sbr.rel (%p1963) target = $region60
        $region59: #{_clam_mb_padded.1} parent=47 // pred_region
          _
        $region60: #{_clam_mb_padded.1} parent=47 // pred_fallthru
          _
        // Predicated region
        $region61: #{_clam_mb_padded.1} parent=47 // pred_check
          %p1966 = pneg %p269
        $region62: #{_clam_mb_padded.1} parent=47 // pred_check_branch
          %1968 = sbr.rel (%p1966) target = $region64
        $region63: #{_clam_mb_padded.1} parent=47 // pred_region
          _
        $region64: #{_clam_mb_padded.1} parent=47 // pred_fallthru
          _
        // Predicated region
        $region65: #{_clam_mb_padded.1} parent=47 // pred_check
          %p1969 = pneg %p295
        $region66: #{_clam_mb_padded.1} parent=47 // pred_check_branch
          %1971 = sbr.rel (%p1969) target = $region68
        $region67: #{_clam_mb_padded.1} parent=47 // pred_region
          _
        $region68: #{_clam_mb_padded.1} parent=47 // pred_fallthru
          _
      $region48: #{_clam_mb_padded.1} parent=5 // pred_fallthru
        _
      %p1972 = scmp.le.s32.totalorder 2, %s22
      // Predicated region
      $region69: #{_clam_mb_padded.1} parent=5 // pred_check
        %p1973 = pneg %p1972
      $region70: #{_clam_mb_padded.1} parent=5 // pred_check_branch
        %1975 = sbr.rel (%p1973) target = $region72
      $region71: #{_clam_mb_padded.1} parent=5 // pred_region
        %s1976 = ssub.s32 %s22, 2
        // Predicated region
        $region73: #{_clam_mb_padded.1} parent=71 // pred_check
          %p1977 = pneg %p223
        $region74: #{_clam_mb_padded.1} parent=71 // pred_check_branch
          %1979 = sbr.rel (%p1977) target = $region76
        $region75: #{_clam_mb_padded.1} parent=71 // pred_region
          %s1980 = sand.u32 %s208, 1
          %s1981 = scalar_lea.sflag [#allocation5], %s1980
          %s1982 = sand.u32 %s208, 1
          %s1983 = smul.addr %s1982, 4
          %s1984 = scalar_lea.vmem [#allocation4], %s1983
          %1985 = dma.done %s1981, 64
        $region76: #{_clam_mb_padded.1} parent=71 // pred_fallthru
          _
        // Predicated region
        $region77: #{_clam_mb_padded.1} parent=71 // pred_check
          %p1986 = pneg %p249
        $region78: #{_clam_mb_padded.1} parent=71 // pred_check_branch
          %1988 = sbr.rel (%p1986) target = $region80
        $region79: #{_clam_mb_padded.1} parent=71 // pred_region
          %p1989 = scmp.lt.s32.totalorder %s33, 1
          %s1990 = scalar_select %p1989, %s33, 1
          %s1991 = smul.addr %s1990, 2
          %s1992 = scalar_lea.vmem %s9, %s1991
        $region80: #{_clam_mb_padded.1} parent=71 // pred_fallthru
          _
        // Predicated region
        $region81: #{_clam_mb_padded.1} parent=71 // pred_check
          %p1993 = pneg %p275
        $region82: #{_clam_mb_padded.1} parent=71 // pred_check_branch
          %1995 = sbr.rel (%p1993) target = $region84
        $region83: #{_clam_mb_padded.1} parent=71 // pred_region
          %p1996 = scmp.lt.s32.totalorder %s33, 1
          %s1997 = scalar_select %p1996, %s33, 1
          %s1998 = smul.addr %s1997, 2
          %s1999 = scalar_lea.vmem %s10, %s1998
        $region84: #{_clam_mb_padded.1} parent=71 // pred_fallthru
          _
        // Predicated region
        $region85: #{_clam_mb_padded.1} parent=71 // pred_check
          %p2000 = pneg %p301
        $region86: #{_clam_mb_padded.1} parent=71 // pred_check_branch
          %2002 = sbr.rel (%p2000) target = $region88
        $region87: #{_clam_mb_padded.1} parent=71 // pred_region
          %p2003 = scmp.lt.s32.totalorder %s33, 1
          %s2004 = scalar_select %p2003, %s33, 1
          %s2005 = smul.addr %s2004, 2
          %s2006 = smul.addr %s2005, 2
          %s2007 = scalar_lea.vmem %s11, %s2006
        $region88: #{_clam_mb_padded.1} parent=71 // pred_fallthru
          _
      $region72: #{_clam_mb_padded.1} parent=5 // pred_fallthru
        _
    $region6: #{_clam_mb_padded.1} parent=1 // loop_footer
      %s26 = sadd.s32 1, %s22
    $region7: #{_clam_mb_padded.1} parent=1 // loop_footer_branch
      %21 = sbr.rel target = $region3
    $region8: #{_clam_mb_padded.1} parent=1 // loop_exit
      _
    %2008 = vsyncpa [#allocation5], 1
    %s2009 = scalar_lea.sflag [#allocation5], 1
    %2010 = vsyncpa %s2009, 1

</llo_original>
